<compile_context>
chip_gen: v7x
topology: tpu7x:2x2x1
jax: 0.10.0
libtpu: 0.0.40
codegen_flags: <defaults>
</compile_context>

<pallas_src>
import functools

import jax
import jax.numpy as jnp
from jax import lax
from jax.experimental import pallas as pl
from jax.experimental.pallas import tpu as pltpu

_HI = lax.Precision.HIGHEST   # explicit precision for the off-critical-path matmuls


# --------------------------------------------------------------------------
# Fused kernel
# --------------------------------------------------------------------------
def _fused_kernel(cols_ref, wc_ref, *refs, B, T, K, pad, Cout, H, num_layers):
    slab_refs = refs[:num_layers]
    fc_ref, o_ref, pg_ref, seq_ref = refs[num_layers:]

    Text = T + 2 * pad            # conv evaluated on the pool-extended time axis
    TB = T * B

    # ---- Conv1d(padding='same') + bias (ones-column) + ReLU as one flat matmul ----
    yext = jnp.dot(cols_ref[...], wc_ref[...], precision=_HI,
                   preferred_element_type=jnp.float32)             # (Text*B, Cout)
    yext = jnp.maximum(yext, 0.0)

    # pool padding: rows outside the T valid conv positions -> -inf (mask built in-kernel)
    row = lax.broadcasted_iota(jnp.int32, (Text * B, Cout), 0)
    valid = (row >= pad * B) & (row < (pad + T) * B)
    yext = jnp.where(valid, yext, -jnp.inf)

    # ---- MaxPool1d(kernel=K, stride=1, padding=pad): K row-shifted maxima ----
    pooled = yext[0:TB]
    for j in range(1, K):
        pooled = jnp.maximum(pooled, yext[j * B:j * B + TB])        # (T*B, Cout)

    # fc weights (consumed inside the last layer's time loop)
    fcv = fc_ref[...]                                               # (1, H+1)
    w_fc = fcv[:, 0:H]                                              # (1, H)
    b_fc = fcv[:, H:H + 1]                                          # (1, 1)

    # ---- LSTM stack (batch_first, PyTorch gate order i, f, g, o) ----
    cur = pooled
    in_dim = Cout
    for layer in range(num_layers):
        slab = slab_refs[layer]                                     # (in_dim+H+1, 4H)
        w_ih = slab[0:in_dim, :]                                    # (in_dim, 4H)
        # serial-chain matmul runs on single-pass bf16 MXU operands (f32 accumulate)
        w_hh_bf = slab[in_dim:in_dim + H, :].astype(jnp.bfloat16)   # (H, 4H)
        b = slab[in_dim + H:in_dim + H + 1, :]                      # (1, 4H)

        # hoisted input projection for all T timesteps at once (off the serial chain)
        pg = jnp.dot(cur, w_ih, precision=_HI,
                     preferred_element_type=jnp.float32) + b        # (T*B, 4H)
        pg_ref[...] = pg

        is_last = layer == num_layers - 1

        def step(t, carry, w_hh_bf=w_hh_bf, is_last=is_last):
            h, c = carry
            g = pg_ref[pl.ds(t * B, B), :] + jnp.dot(
                h.astype(jnp.bfloat16), w_hh_bf,
                preferred_element_type=jnp.float32)                 # (B, 4H)
            # gate math stays f32 on the VPU/EUP (v5e has no bf16 VPU/EUP)
            sig = pl.reciprocal(1.0 + jnp.exp(-g), approx=False)
            th = jnp.tanh(g)
            i_g = sig[:, 0 * H:1 * H]
            f_g = sig[:, 1 * H:2 * H]
            g_g = th[:, 2 * H:3 * H]
            o_g = sig[:, 3 * H:4 * H]
            c_new = f_g * c + i_g * g_g
            h_new = o_g * jnp.tanh(c_new)
            if is_last:
                # Linear(H -> 1) folded into the loop: lane reduce off the carry chain
                out_t = jnp.sum(h_new * w_fc, axis=-1, keepdims=True) + b_fc
                o_ref[pl.ds(t * B, B), :] = out_t                   # (B, 1)
            else:
                seq_ref[pl.ds(t * B, B), :] = h_new                 # (B, H)
            return (h_new, c_new)

        zeros = jnp.zeros((B, H), jnp.float32)
        lax.fori_loop(0, T, step, (zeros, zeros), unroll=True)
        # TODO(synk): inter-layer dropout (drop_out=0.0, training-only) is a no-op here.

        if not is_last:
            cur = seq_ref[...]                                      # (T*B, H)
            in_dim = H


# --------------------------------------------------------------------------
# Wrapper (plain-JAX glue: layout transposes, im2col, weight packing)
# --------------------------------------------------------------------------
def cnn_lstm_forward(x, params, *, K, H, num_layers):
    B, Cin, T = x.shape
    Cout = params['conv_w'].shape[0]
    pad = (K - 1) // 2
    Text = T + 2 * pad

    # time-major input, zero-padded twice (conv 'same' pad + pool pad), flat im2col
    xt = jnp.transpose(x, (2, 0, 1))                                # (T, B, Cin)
    xp2 = jnp.pad(xt, ((2 * pad, 2 * pad), (0, 0), (0, 0)))         # (T+4p, B, Cin)
    cols = jnp.concatenate([xp2[j:j + Text] for j in range(K)], axis=-1)
    cols = cols.reshape(Text * B, K * Cin)
    cols = jnp.concatenate(
        [cols, jnp.ones((Text * B, 1), jnp.float32)], axis=-1)      # ones col -> conv bias

    w_conv = jnp.transpose(params['conv_w'], (2, 1, 0)).reshape(K * Cin, Cout)
    wc_slab = jnp.concatenate(
        [w_conv, params['conv_b'].reshape(1, Cout)], axis=0)        # (K*Cin+1, Cout)

    # one packed slab per LSTM layer: [W_ih^T ; W_hh^T ; b_ih+b_hh] -> (in_dim+H+1, 4H)
    slabs = []
    for l in range(num_layers):
        slabs.append(jnp.concatenate([
            jnp.transpose(params[f'w_ih_{l}']),
            jnp.transpose(params[f'w_hh_{l}']),
            (params[f'b_ih_{l}'] + params[f'b_hh_{l}']).reshape(1, 4 * H)], axis=0))

    fc_packed = jnp.concatenate([params['fc_w'].reshape(1, H),
                                 params['fc_b'].reshape(1, 1)], axis=-1)   # (1, H+1)

    kernel = functools.partial(_fused_kernel, B=B, T=T, K=K, pad=pad,
                               Cout=Cout, H=H, num_layers=num_layers)
    n_in = 3 + num_layers
    out_flat = pl.pallas_call(
        kernel,
        out_shape=jax.ShapeDtypeStruct((T * B, 1), jnp.float32),
        in_specs=[pl.BlockSpec(memory_space=pltpu.MemorySpace.VMEM)] * n_in,
        out_specs=pl.BlockSpec(memory_space=pltpu.MemorySpace.VMEM),
        scratch_shapes=[pltpu.VMEM((T * B, 4 * H), jnp.float32),    # hoisted pre-gates
                        pltpu.VMEM((T * B, H), jnp.float32)],       # inter-layer h sequence
    )(cols, wc_slab, *slabs, fc_packed)

    return jnp.transpose(out_flat.reshape(T, B, 1), (1, 0, 2))      # (B, T, 1)


# --------------------------------------------------------------------------
# Pure-JAX reference (mirrors the PyTorch forward, full f32) and parameter init
# --------------------------------------------------------------------------
def reference_forward(x, params, *, K, H, num_layers):
    w_conv, b_conv = params['conv_w'], params['conv_b']
    pad = (K - 1) // 2
    B, Cin, T = x.shape
    xp = jnp.pad(x, ((0, 0), (0, 0), (pad, pad)))
    Cout = w_conv.shape[0]
    y = jnp.zeros((B, Cout, T), jnp.float32)
    for j in range(K):
        y = y + jnp.einsum('bct,oc->bot', xp[:, :, j:j + T], w_conv[:, :, j],
                           precision=_HI)
    y = jax.nn.relu(y + b_conv[None, :, None])
    yp = jnp.pad(y, ((0, 0), (0, 0), (pad, pad)), constant_values=-jnp.inf)
    pooled = yp[:, :, 0:T]
    for j in range(1, K):
        pooled = jnp.maximum(pooled, yp[:, :, j:j + T])
    seq = jnp.transpose(pooled, (0, 2, 1))                          # (B, T, Cout)
    for l in range(num_layers):
        w_ih, w_hh = params[f'w_ih_{l}'], params[f'w_hh_{l}']
        b = params[f'b_ih_{l}'] + params[f'b_hh_{l}']
        h = jnp.zeros((B, H), jnp.float32)
        c = jnp.zeros((B, H), jnp.float32)
        outs = []
        for t in range(T):
            g = (jnp.dot(seq[:, t, :], w_ih.T, precision=_HI)
                 + jnp.dot(h, w_hh.T, precision=_HI) + b)
            i_g = jax.nn.sigmoid(g[:, :H])
            f_g = jax.nn.sigmoid(g[:, H:2 * H])
            g_g = jnp.tanh(g[:, 2 * H:3 * H])
            o_g = jax.nn.sigmoid(g[:, 3 * H:])
            c = f_g * c + i_g * g_g
            h = o_g * jnp.tanh(c)
            outs.append(h)
        seq = jnp.stack(outs, axis=1)
    return jnp.dot(seq, params['fc_w'].T, precision=_HI) + params['fc_b']


def init_params(key, Cin, Cout, H, K, num_layers):
    ks = jax.random.split(key, 4 + 4 * num_layers)
    p = {}
    p['conv_w'] = 0.3 * jax.random.normal(ks[0], (Cout, Cin, K), jnp.float32)
    p['conv_b'] = 0.1 * jax.random.normal(ks[1], (Cout,), jnp.float32)
    idx = 2
    for l in range(num_layers):
        in_dim = Cout if l == 0 else H
        p[f'w_ih_{l}'] = 0.3 * jax.random.normal(ks[idx], (4 * H, in_dim), jnp.float32); idx += 1
        p[f'w_hh_{l}'] = 0.3 * jax.random.normal(ks[idx], (4 * H, H), jnp.float32); idx += 1
        p[f'b_ih_{l}'] = 0.1 * jax.random.normal(ks[idx], (4 * H,), jnp.float32); idx += 1
        p[f'b_hh_{l}'] = 0.1 * jax.random.normal(ks[idx], (4 * H,), jnp.float32); idx += 1
    p['fc_w'] = 0.3 * jax.random.normal(ks[idx], (1, H), jnp.float32); idx += 1
    p['fc_b'] = 0.1 * jax.random.normal(ks[idx], (1,), jnp.float32)
    return p


if __name__ == "__main__":
    # CNNLSTM(input_features=4, channels=8, hidden_size=32, num_lstm_layers=2,
    #         kernel_size=3, drop_out=0.0);  x: (batch=2, input_features=4, seq=16)
    B, Cin, T = 2, 4, 16
    Cout, H, K, L = 8, 32, 3, 2

    key = jax.random.PRNGKey(0)
    kx, kp = jax.random.split(key)
    x = jax.random.normal(kx, (B, Cin, T), jnp.float32)
    params = init_params(kp, Cin, Cout, H, K, L)

    out = cnn_lstm_forward(x, params, K=K, H=H, num_layers=L)
    out = jax.block_until_ready(out)

    ref = reference_forward(x, params, K=K, H=H, num_layers=L)
    assert out.shape == (B, T, 1), out.shape
    # The recurrent h @ W_hh intentionally runs on single-pass bf16 MXU operands
    # (f32 accumulation) per the perf review; 5e-3 bounds the resulting drift of the
    # 32-step recurrence vs the full-f32 reference (everything else stays f32).
    assert jnp.allclose(out, ref, rtol=5e-3, atol=5e-3), \
        float(jnp.max(jnp.abs(out - ref)))
    print("KERNEL_OK")
</pallas_src>

<mosaic_0001>
module attributes {stable_mosaic.version = 11 : i64} {
  func.func @_fused_kernel(%arg0: memref<36x13xf32, #tpu.memory_space<vmem>>, %arg1: memref<13x8xf32, #tpu.memory_space<vmem>>, %arg2: memref<41x128xf32, #tpu.memory_space<vmem>>, %arg3: memref<65x128xf32, #tpu.memory_space<vmem>>, %arg4: memref<1x33xf32, #tpu.memory_space<vmem>>, %arg5: memref<32x1xf32, #tpu.memory_space<vmem>>, %arg6: memref<32x128xf32, #tpu.memory_space<vmem>>, %arg7: memref<32x32xf32, #tpu.memory_space<vmem>>) attributes {dimension_semantics = [], scalar_prefetch = 0 : i64, scratch_operands = 2 : i64, tpu.core_type = #tpu.core_type<tc>} {
    %c0 = arith.constant 0 : index
    %c0_0 = arith.constant 0 : index
    %0 = vector.load %arg0[%c0, %c0_0] : memref<36x13xf32, #tpu.memory_space<vmem>>, vector<36x13xf32>
    %c0_1 = arith.constant 0 : index
    %c0_2 = arith.constant 0 : index
    %1 = vector.load %arg1[%c0_1, %c0_2] : memref<13x8xf32, #tpu.memory_space<vmem>>, vector<13x8xf32>
    %cst = arith.constant dense<0.000000e+00> : vector<36x8xf32>
    %2 = tpu.matmul %0, %1, %cst {dimension_numbers = #tpu.dot_dimension_numbers<[1], [0], [0], [1], [0, 0, 1, 1], [], []>, precision = #tpu.contract_precision<fp32>} : vector<36x13xf32>, vector<13x8xf32>, vector<36x8xf32> -> vector<36x8xf32>
    %cst_3 = arith.constant 0.000000e+00 : f32
    %3 = vector.broadcast %cst_3 : f32 to vector<36x8xf32>
    %4 = arith.maximumf %2, %3 : vector<36x8xf32>
    %5 = tpu.iota {dimensions = array<i32: 0>} : vector<36x8xi32>
    %c2_i32 = arith.constant 2 : i32
    %6 = vector.broadcast %c2_i32 : i32 to vector<36x8xi32>
    %7 = arith.cmpi sge, %5, %6 : vector<36x8xi32>
    %c34_i32 = arith.constant 34 : i32
    %8 = vector.broadcast %c34_i32 : i32 to vector<36x8xi32>
    %9 = arith.cmpi slt, %5, %8 : vector<36x8xi32>
    %10 = arith.andi %7, %9 : vector<36x8xi1>
    %cst_4 = arith.constant 0xFF800000 : f32
    %11 = vector.broadcast %cst_4 : f32 to vector<36x8xf32>
    %12 = arith.select %10, %4, %11 : vector<36x8xi1>, vector<36x8xf32>
    %13 = vector.extract_strided_slice %12 {offsets = [0, 0], sizes = [32, 8], strides = [1, 1]} : vector<36x8xf32> to vector<32x8xf32>
    %14 = vector.extract_strided_slice %12 {offsets = [2, 0], sizes = [32, 8], strides = [1, 1]} : vector<36x8xf32> to vector<32x8xf32>
    %15 = arith.maximumf %13, %14 : vector<32x8xf32>
    %16 = vector.extract_strided_slice %12 {offsets = [4, 0], sizes = [32, 8], strides = [1, 1]} : vector<36x8xf32> to vector<32x8xf32>
    %17 = arith.maximumf %15, %16 : vector<32x8xf32>
    %c0_5 = arith.constant 0 : index
    %c0_6 = arith.constant 0 : index
    %18 = vector.load %arg4[%c0_5, %c0_6] : memref<1x33xf32, #tpu.memory_space<vmem>>, vector<1x33xf32>
    %19 = vector.extract_strided_slice %18 {offsets = [0, 0], sizes = [1, 32], strides = [1, 1]} : vector<1x33xf32> to vector<1x32xf32>
    %20 = vector.extract_strided_slice %18 {offsets = [0, 32], sizes = [1, 1], strides = [1, 1]} : vector<1x33xf32> to vector<1x1xf32>
    %c0_7 = arith.constant 0 : index
    %c0_8 = arith.constant 0 : index
    %21 = vector.load %arg2[%c0_7, %c0_8] : memref<41x128xf32, #tpu.memory_space<vmem>>, vector<8x128xf32>
    %c8 = arith.constant 8 : index
    %c0_9 = arith.constant 0 : index
    %22 = vector.load %arg2[%c8, %c0_9] : memref<41x128xf32, #tpu.memory_space<vmem>>, vector<32x128xf32>
    %23 = arith.truncf %22 : vector<32x128xf32> to vector<32x128xbf16>
    %c40 = arith.constant 40 : index
    %c0_10 = arith.constant 0 : index
    %24 = vector.load %arg2[%c40, %c0_10] : memref<41x128xf32, #tpu.memory_space<vmem>>, vector<1x128xf32>
    %cst_11 = arith.constant dense<0.000000e+00> : vector<32x128xf32>
    %25 = tpu.matmul %17, %21, %cst_11 {dimension_numbers = #tpu.dot_dimension_numbers<[1], [0], [0], [1], [0, 0, 1, 1], [], []>, precision = #tpu.contract_precision<fp32>} : vector<32x8xf32>, vector<8x128xf32>, vector<32x128xf32> -> vector<32x128xf32>
    %26 = vector.broadcast %24 : vector<1x128xf32> to vector<32x128xf32>
    %27 = arith.addf %25, %26 : vector<32x128xf32>
    %c0_12 = arith.constant 0 : index
    %c0_13 = arith.constant 0 : index
    %28 = vector.load %arg6[%c0_12, %c0_13] : memref<32x128xf32, #tpu.memory_space<vmem>>, vector<32x128xf32>
    tpu.vector_store %arg6[%c0_12, %c0_13], %27 {strides = array<i32>} : memref<32x128xf32, #tpu.memory_space<vmem>>, vector<32x128xf32>,
    %cst_14 = arith.constant 0.000000e+00 : f32
    %29 = vector.broadcast %cst_14 : f32 to vector<2x32xf32>
    %c0_i32 = arith.constant 0 : i32
    %c2_i32_15 = arith.constant 2 : i32
    %30 = arith.muli %c0_i32, %c2_i32_15 : i32
    %31 = arith.index_cast %30 : i32 to index
    %c0_16 = arith.constant 0 : index
    %32 = vector.load %arg6[%31, %c0_16] : memref<32x128xf32, #tpu.memory_space<vmem>>, vector<2x128xf32>
    %33 = arith.truncf %29 : vector<2x32xf32> to vector<2x32xbf16>
    %cst_17 = arith.constant dense<0.000000e+00> : vector<2x128xf32>
    %34 = tpu.matmul %33, %23, %cst_17 {dimension_numbers = #tpu.dot_dimension_numbers<[1], [0], [0], [1], [0, 0, 1, 1], [], []>} : vector<2x32xbf16>, vector<32x128xbf16>, vector<2x128xf32> -> vector<2x128xf32>
    %35 = arith.addf %32, %34 : vector<2x128xf32>
    %cst_18 = arith.constant 0.000000e+00 : f32
    %36 = vector.broadcast %cst_18 : f32 to vector<2x128xf32>
    %37 = arith.subf %36, %35 : vector<2x128xf32>
    %38 = math.exp %37 : vector<2x128xf32>
    %cst_19 = arith.constant 1.000000e+00 : f32
    %39 = vector.broadcast %cst_19 : f32 to vector<2x128xf32>
    %40 = arith.addf %39, %38 : vector<2x128xf32>
    %41 = tpu.reciprocal %40 : vector<2x128xf32> -> vector<2x128xf32>
    %42 = math.tanh %35 : vector<2x128xf32>
    %43 = vector.extract_strided_slice %41 {offsets = [0, 0], sizes = [2, 32], strides = [1, 1]} : vector<2x128xf32> to vector<2x32xf32>
    %44 = vector.extract_strided_slice %41 {offsets = [0, 32], sizes = [2, 32], strides = [1, 1]} : vector<2x128xf32> to vector<2x32xf32>
    %45 = vector.extract_strided_slice %42 {offsets = [0, 64], sizes = [2, 32], strides = [1, 1]} : vector<2x128xf32> to vector<2x32xf32>
    %46 = vector.extract_strided_slice %41 {offsets = [0, 96], sizes = [2, 32], strides = [1, 1]} : vector<2x128xf32> to vector<2x32xf32>
    %47 = arith.mulf %44, %29 : vector<2x32xf32>
    %48 = arith.mulf %43, %45 : vector<2x32xf32>
    %49 = arith.addf %47, %48 : vector<2x32xf32>
    %50 = math.tanh %49 : vector<2x32xf32>
    %51 = arith.mulf %46, %50 : vector<2x32xf32>
    %c2_i32_20 = arith.constant 2 : i32
    %52 = arith.muli %c0_i32, %c2_i32_20 : i32
    %53 = arith.index_cast %52 : i32 to index
    %c0_21 = arith.constant 0 : index
    %54 = vector.load %arg7[%53, %c0_21] : memref<32x32xf32, #tpu.memory_space<vmem>>, vector<2x32xf32>
    tpu.vector_store %arg7[%53, %c0_21], %51 {strides = array<i32>} : memref<32x32xf32, #tpu.memory_space<vmem>>, vector<2x32xf32>,
    %c1_i32 = arith.constant 1 : i32
    %c2_i32_22 = arith.constant 2 : i32
    %55 = arith.muli %c1_i32, %c2_i32_22 : i32
    %56 = arith.index_cast %55 : i32 to index
    %c0_23 = arith.constant 0 : index
    %57 = vector.load %arg6[%56, %c0_23] : memref<32x128xf32, #tpu.memory_space<vmem>>, vector<2x128xf32>
    %58 = arith.truncf %51 : vector<2x32xf32> to vector<2x32xbf16>
    %cst_24 = arith.constant dense<0.000000e+00> : vector<2x128xf32>
    %59 = tpu.matmul %58, %23, %cst_24 {dimension_numbers = #tpu.dot_dimension_numbers<[1], [0], [0], [1], [0, 0, 1, 1], [], []>} : vector<2x32xbf16>, vector<32x128xbf16>, vector<2x128xf32> -> vector<2x128xf32>
    %60 = arith.addf %57, %59 : vector<2x128xf32>
    %cst_25 = arith.constant 0.000000e+00 : f32
    %61 = vector.broadcast %cst_25 : f32 to vector<2x128xf32>
    %62 = arith.subf %61, %60 : vector<2x128xf32>
    %63 = math.exp %62 : vector<2x128xf32>
    %cst_26 = arith.constant 1.000000e+00 : f32
    %64 = vector.broadcast %cst_26 : f32 to vector<2x128xf32>
    %65 = arith.addf %64, %63 : vector<2x128xf32>
    %66 = tpu.reciprocal %65 : vector<2x128xf32> -> vector<2x128xf32>
    %67 = math.tanh %60 : vector<2x128xf32>
    %68 = vector.extract_strided_slice %66 {offsets = [0, 0], sizes = [2, 32], strides = [1, 1]} : vector<2x128xf32> to vector<2x32xf32>
    %69 = vector.extract_strided_slice %66 {offsets = [0, 32], sizes = [2, 32], strides = [1, 1]} : vector<2x128xf32> to vector<2x32xf32>
    %70 = vector.extract_strided_slice %67 {offsets = [0, 64], sizes = [2, 32], strides = [1, 1]} : vector<2x128xf32> to vector<2x32xf32>
    %71 = vector.extract_strided_slice %66 {offsets = [0, 96], sizes = [2, 32], strides = [1, 1]} : vector<2x128xf32> to vector<2x32xf32>
    %72 = arith.mulf %69, %49 : vector<2x32xf32>
    %73 = arith.mulf %68, %70 : vector<2x32xf32>
    %74 = arith.addf %72, %73 : vector<2x32xf32>
    %75 = math.tanh %74 : vector<2x32xf32>
    %76 = arith.mulf %71, %75 : vector<2x32xf32>
    %c2_i32_27 = arith.constant 2 : i32
    %77 = arith.muli %c1_i32, %c2_i32_27 : i32
    %78 = arith.index_cast %77 : i32 to index
    %c0_28 = arith.constant 0 : index
    %79 = vector.load %arg7[%78, %c0_28] : memref<32x32xf32, #tpu.memory_space<vmem>>, vector<2x32xf32>
    tpu.vector_store %arg7[%78, %c0_28], %76 {strides = array<i32>} : memref<32x32xf32, #tpu.memory_space<vmem>>, vector<2x32xf32>,
    %c2_i32_29 = arith.constant 2 : i32
    %c2_i32_30 = arith.constant 2 : i32
    %80 = arith.muli %c2_i32_29, %c2_i32_30 : i32
    %81 = arith.index_cast %80 : i32 to index
    %c0_31 = arith.constant 0 : index
    %82 = vector.load %arg6[%81, %c0_31] : memref<32x128xf32, #tpu.memory_space<vmem>>, vector<2x128xf32>
    %83 = arith.truncf %76 : vector<2x32xf32> to vector<2x32xbf16>
    %cst_32 = arith.constant dense<0.000000e+00> : vector<2x128xf32>
    %84 = tpu.matmul %83, %23, %cst_32 {dimension_numbers = #tpu.dot_dimension_numbers<[1], [0], [0], [1], [0, 0, 1, 1], [], []>} : vector<2x32xbf16>, vector<32x128xbf16>, vector<2x128xf32> -> vector<2x128xf32>
    %85 = arith.addf %82, %84 : vector<2x128xf32>
    %cst_33 = arith.constant 0.000000e+00 : f32
    %86 = vector.broadcast %cst_33 : f32 to vector<2x128xf32>
    %87 = arith.subf %86, %85 : vector<2x128xf32>
    %88 = math.exp %87 : vector<2x128xf32>
    %cst_34 = arith.constant 1.000000e+00 : f32
    %89 = vector.broadcast %cst_34 : f32 to vector<2x128xf32>
    %90 = arith.addf %89, %88 : vector<2x128xf32>
    %91 = tpu.reciprocal %90 : vector<2x128xf32> -> vector<2x128xf32>
    %92 = math.tanh %85 : vector<2x128xf32>
    %93 = vector.extract_strided_slice %91 {offsets = [0, 0], sizes = [2, 32], strides = [1, 1]} : vector<2x128xf32> to vector<2x32xf32>
    %94 = vector.extract_strided_slice %91 {offsets = [0, 32], sizes = [2, 32], strides = [1, 1]} : vector<2x128xf32> to vector<2x32xf32>
    %95 = vector.extract_strided_slice %92 {offsets = [0, 64], sizes = [2, 32], strides = [1, 1]} : vector<2x128xf32> to vector<2x32xf32>
    %96 = vector.extract_strided_slice %91 {offsets = [0, 96], sizes = [2, 32], strides = [1, 1]} : vector<2x128xf32> to vector<2x32xf32>
    %97 = arith.mulf %94, %74 : vector<2x32xf32>
    %98 = arith.mulf %93, %95 : vector<2x32xf32>
    %99 = arith.addf %97, %98 : vector<2x32xf32>
    %100 = math.tanh %99 : vector<2x32xf32>
    %101 = arith.mulf %96, %100 : vector<2x32xf32>
    %c2_i32_35 = arith.constant 2 : i32
    %102 = arith.muli %c2_i32_29, %c2_i32_35 : i32
    %103 = arith.index_cast %102 : i32 to index
    %c0_36 = arith.constant 0 : index
    %104 = vector.load %arg7[%103, %c0_36] : memref<32x32xf32, #tpu.memory_space<vmem>>, vector<2x32xf32>
    tpu.vector_store %arg7[%103, %c0_36], %101 {strides = array<i32>} : memref<32x32xf32, #tpu.memory_space<vmem>>, vector<2x32xf32>,
    %c3_i32 = arith.constant 3 : i32
    %c2_i32_37 = arith.constant 2 : i32
    %105 = arith.muli %c3_i32, %c2_i32_37 : i32
    %106 = arith.index_cast %105 : i32 to index
    %c0_38 = arith.constant 0 : index
    %107 = vector.load %arg6[%106, %c0_38] : memref<32x128xf32, #tpu.memory_space<vmem>>, vector<2x128xf32>
    %108 = arith.truncf %101 : vector<2x32xf32> to vector<2x32xbf16>
    %cst_39 = arith.constant dense<0.000000e+00> : vector<2x128xf32>
    %109 = tpu.matmul %108, %23, %cst_39 {dimension_numbers = #tpu.dot_dimension_numbers<[1], [0], [0], [1], [0, 0, 1, 1], [], []>} : vector<2x32xbf16>, vector<32x128xbf16>, vector<2x128xf32> -> vector<2x128xf32>
    %110 = arith.addf %107, %109 : vector<2x128xf32>
    %cst_40 = arith.constant 0.000000e+00 : f32
    %111 = vector.broadcast %cst_40 : f32 to vector<2x128xf32>
    %112 = arith.subf %111, %110 : vector<2x128xf32>
    %113 = math.exp %112 : vector<2x128xf32>
    %cst_41 = arith.constant 1.000000e+00 : f32
    %114 = vector.broadcast %cst_41 : f32 to vector<2x128xf32>
    %115 = arith.addf %114, %113 : vector<2x128xf32>
    %116 = tpu.reciprocal %115 : vector<2x128xf32> -> vector<2x128xf32>
    %117 = math.tanh %110 : vector<2x128xf32>
    %118 = vector.extract_strided_slice %116 {offsets = [0, 0], sizes = [2, 32], strides = [1, 1]} : vector<2x128xf32> to vector<2x32xf32>
    %119 = vector.extract_strided_slice %116 {offsets = [0, 32], sizes = [2, 32], strides = [1, 1]} : vector<2x128xf32> to vector<2x32xf32>
    %120 = vector.extract_strided_slice %117 {offsets = [0, 64], sizes = [2, 32], strides = [1, 1]} : vector<2x128xf32> to vector<2x32xf32>
    %121 = vector.extract_strided_slice %116 {offsets = [0, 96], sizes = [2, 32], strides = [1, 1]} : vector<2x128xf32> to vector<2x32xf32>
    %122 = arith.mulf %119, %99 : vector<2x32xf32>
    %123 = arith.mulf %118, %120 : vector<2x32xf32>
    %124 = arith.addf %122, %123 : vector<2x32xf32>
    %125 = math.tanh %124 : vector<2x32xf32>
    %126 = arith.mulf %121, %125 : vector<2x32xf32>
    %c2_i32_42 = arith.constant 2 : i32
    %127 = arith.muli %c3_i32, %c2_i32_42 : i32
    %128 = arith.index_cast %127 : i32 to index
    %c0_43 = arith.constant 0 : index
    %129 = vector.load %arg7[%128, %c0_43] : memref<32x32xf32, #tpu.memory_space<vmem>>, vector<2x32xf32>
    tpu.vector_store %arg7[%128, %c0_43], %126 {strides = array<i32>} : memref<32x32xf32, #tpu.memory_space<vmem>>, vector<2x32xf32>,
    %c4_i32 = arith.constant 4 : i32
    %c2_i32_44 = arith.constant 2 : i32
    %130 = arith.muli %c4_i32, %c2_i32_44 : i32
    %131 = arith.index_cast %130 : i32 to index
    %c0_45 = arith.constant 0 : index
    %132 = vector.load %arg6[%131, %c0_45] : memref<32x128xf32, #tpu.memory_space<vmem>>, vector<2x128xf32>
    %133 = arith.truncf %126 : vector<2x32xf32> to vector<2x32xbf16>
    %cst_46 = arith.constant dense<0.000000e+00> : vector<2x128xf32>
    %134 = tpu.matmul %133, %23, %cst_46 {dimension_numbers = #tpu.dot_dimension_numbers<[1], [0], [0], [1], [0, 0, 1, 1], [], []>} : vector<2x32xbf16>, vector<32x128xbf16>, vector<2x128xf32> -> vector<2x128xf32>
    %135 = arith.addf %132, %134 : vector<2x128xf32>
    %cst_47 = arith.constant 0.000000e+00 : f32
    %136 = vector.broadcast %cst_47 : f32 to vector<2x128xf32>
    %137 = arith.subf %136, %135 : vector<2x128xf32>
    %138 = math.exp %137 : vector<2x128xf32>
    %cst_48 = arith.constant 1.000000e+00 : f32
    %139 = vector.broadcast %cst_48 : f32 to vector<2x128xf32>
    %140 = arith.addf %139, %138 : vector<2x128xf32>
    %141 = tpu.reciprocal %140 : vector<2x128xf32> -> vector<2x128xf32>
    %142 = math.tanh %135 : vector<2x128xf32>
    %143 = vector.extract_strided_slice %141 {offsets = [0, 0], sizes = [2, 32], strides = [1, 1]} : vector<2x128xf32> to vector<2x32xf32>
    %144 = vector.extract_strided_slice %141 {offsets = [0, 32], sizes = [2, 32], strides = [1, 1]} : vector<2x128xf32> to vector<2x32xf32>
    %145 = vector.extract_strided_slice %142 {offsets = [0, 64], sizes = [2, 32], strides = [1, 1]} : vector<2x128xf32> to vector<2x32xf32>
    %146 = vector.extract_strided_slice %141 {offsets = [0, 96], sizes = [2, 32], strides = [1, 1]} : vector<2x128xf32> to vector<2x32xf32>
    %147 = arith.mulf %144, %124 : vector<2x32xf32>
    %148 = arith.mulf %143, %145 : vector<2x32xf32>
    %149 = arith.addf %147, %148 : vector<2x32xf32>
    %150 = math.tanh %149 : vector<2x32xf32>
    %151 = arith.mulf %146, %150 : vector<2x32xf32>
    %c2_i32_49 = arith.constant 2 : i32
    %152 = arith.muli %c4_i32, %c2_i32_49 : i32
    %153 = arith.index_cast %152 : i32 to index
    %c0_50 = arith.constant 0 : index
    %154 = vector.load %arg7[%153, %c0_50] : memref<32x32xf32, #tpu.memory_space<vmem>>, vector<2x32xf32>
    tpu.vector_store %arg7[%153, %c0_50], %151 {strides = array<i32>} : memref<32x32xf32, #tpu.memory_space<vmem>>, vector<2x32xf32>,
    %c5_i32 = arith.constant 5 : i32
    %c2_i32_51 = arith.constant 2 : i32
    %155 = arith.muli %c5_i32, %c2_i32_51 : i32
    %156 = arith.index_cast %155 : i32 to index
    %c0_52 = arith.constant 0 : index
    %157 = vector.load %arg6[%156, %c0_52] : memref<32x128xf32, #tpu.memory_space<vmem>>, vector<2x128xf32>
    %158 = arith.truncf %151 : vector<2x32xf32> to vector<2x32xbf16>
    %cst_53 = arith.constant dense<0.000000e+00> : vector<2x128xf32>
    %159 = tpu.matmul %158, %23, %cst_53 {dimension_numbers = #tpu.dot_dimension_numbers<[1], [0], [0], [1], [0, 0, 1, 1], [], []>} : vector<2x32xbf16>, vector<32x128xbf16>, vector<2x128xf32> -> vector<2x128xf32>
    %160 = arith.addf %157, %159 : vector<2x128xf32>
    %cst_54 = arith.constant 0.000000e+00 : f32
    %161 = vector.broadcast %cst_54 : f32 to vector<2x128xf32>
    %162 = arith.subf %161, %160 : vector<2x128xf32>
    %163 = math.exp %162 : vector<2x128xf32>
    %cst_55 = arith.constant 1.000000e+00 : f32
    %164 = vector.broadcast %cst_55 : f32 to vector<2x128xf32>
    %165 = arith.addf %164, %163 : vector<2x128xf32>
    %166 = tpu.reciprocal %165 : vector<2x128xf32> -> vector<2x128xf32>
    %167 = math.tanh %160 : vector<2x128xf32>
    %168 = vector.extract_strided_slice %166 {offsets = [0, 0], sizes = [2, 32], strides = [1, 1]} : vector<2x128xf32> to vector<2x32xf32>
    %169 = vector.extract_strided_slice %166 {offsets = [0, 32], sizes = [2, 32], strides = [1, 1]} : vector<2x128xf32> to vector<2x32xf32>
    %170 = vector.extract_strided_slice %167 {offsets = [0, 64], sizes = [2, 32], strides = [1, 1]} : vector<2x128xf32> to vector<2x32xf32>
    %171 = vector.extract_strided_slice %166 {offsets = [0, 96], sizes = [2, 32], strides = [1, 1]} : vector<2x128xf32> to vector<2x32xf32>
    %172 = arith.mulf %169, %149 : vector<2x32xf32>
    %173 = arith.mulf %168, %170 : vector<2x32xf32>
    %174 = arith.addf %172, %173 : vector<2x32xf32>
    %175 = math.tanh %174 : vector<2x32xf32>
    %176 = arith.mulf %171, %175 : vector<2x32xf32>
    %c2_i32_56 = arith.constant 2 : i32
    %177 = arith.muli %c5_i32, %c2_i32_56 : i32
    %178 = arith.index_cast %177 : i32 to index
    %c0_57 = arith.constant 0 : index
    %179 = vector.load %arg7[%178, %c0_57] : memref<32x32xf32, #tpu.memory_space<vmem>>, vector<2x32xf32>
    tpu.vector_store %arg7[%178, %c0_57], %176 {strides = array<i32>} : memref<32x32xf32, #tpu.memory_space<vmem>>, vector<2x32xf32>,
    %c6_i32 = arith.constant 6 : i32
    %c2_i32_58 = arith.constant 2 : i32
    %180 = arith.muli %c6_i32, %c2_i32_58 : i32
    %181 = arith.index_cast %180 : i32 to index
    %c0_59 = arith.constant 0 : index
    %182 = vector.load %arg6[%181, %c0_59] : memref<32x128xf32, #tpu.memory_space<vmem>>, vector<2x128xf32>
    %183 = arith.truncf %176 : vector<2x32xf32> to vector<2x32xbf16>
    %cst_60 = arith.constant dense<0.000000e+00> : vector<2x128xf32>
    %184 = tpu.matmul %183, %23, %cst_60 {dimension_numbers = #tpu.dot_dimension_numbers<[1], [0], [0], [1], [0, 0, 1, 1], [], []>} : vector<2x32xbf16>, vector<32x128xbf16>, vector<2x128xf32> -> vector<2x128xf32>
    %185 = arith.addf %182, %184 : vector<2x128xf32>
    %cst_61 = arith.constant 0.000000e+00 : f32
    %186 = vector.broadcast %cst_61 : f32 to vector<2x128xf32>
    %187 = arith.subf %186, %185 : vector<2x128xf32>
    %188 = math.exp %187 : vector<2x128xf32>
    %cst_62 = arith.constant 1.000000e+00 : f32
    %189 = vector.broadcast %cst_62 : f32 to vector<2x128xf32>
    %190 = arith.addf %189, %188 : vector<2x128xf32>
    %191 = tpu.reciprocal %190 : vector<2x128xf32> -> vector<2x128xf32>
    %192 = math.tanh %185 : vector<2x128xf32>
    %193 = vector.extract_strided_slice %191 {offsets = [0, 0], sizes = [2, 32], strides = [1, 1]} : vector<2x128xf32> to vector<2x32xf32>
    %194 = vector.extract_strided_slice %191 {offsets = [0, 32], sizes = [2, 32], strides = [1, 1]} : vector<2x128xf32> to vector<2x32xf32>
    %195 = vector.extract_strided_slice %192 {offsets = [0, 64], sizes = [2, 32], strides = [1, 1]} : vector<2x128xf32> to vector<2x32xf32>
    %196 = vector.extract_strided_slice %191 {offsets = [0, 96], sizes = [2, 32], strides = [1, 1]} : vector<2x128xf32> to vector<2x32xf32>
    %197 = arith.mulf %194, %174 : vector<2x32xf32>
    %198 = arith.mulf %193, %195 : vector<2x32xf32>
    %199 = arith.addf %197, %198 : vector<2x32xf32>
    %200 = math.tanh %199 : vector<2x32xf32>
    %201 = arith.mulf %196, %200 : vector<2x32xf32>
    %c2_i32_63 = arith.constant 2 : i32
    %202 = arith.muli %c6_i32, %c2_i32_63 : i32
    %203 = arith.index_cast %202 : i32 to index
    %c0_64 = arith.constant 0 : index
    %204 = vector.load %arg7[%203, %c0_64] : memref<32x32xf32, #tpu.memory_space<vmem>>, vector<2x32xf32>
    tpu.vector_store %arg7[%203, %c0_64], %201 {strides = array<i32>} : memref<32x32xf32, #tpu.memory_space<vmem>>, vector<2x32xf32>,
    %c7_i32 = arith.constant 7 : i32
    %c2_i32_65 = arith.constant 2 : i32
    %205 = arith.muli %c7_i32, %c2_i32_65 : i32
    %206 = arith.index_cast %205 : i32 to index
    %c0_66 = arith.constant 0 : index
    %207 = vector.load %arg6[%206, %c0_66] : memref<32x128xf32, #tpu.memory_space<vmem>>, vector<2x128xf32>
    %208 = arith.truncf %201 : vector<2x32xf32> to vector<2x32xbf16>
    %cst_67 = arith.constant dense<0.000000e+00> : vector<2x128xf32>
    %209 = tpu.matmul %208, %23, %cst_67 {dimension_numbers = #tpu.dot_dimension_numbers<[1], [0], [0], [1], [0, 0, 1, 1], [], []>} : vector<2x32xbf16>, vector<32x128xbf16>, vector<2x128xf32> -> vector<2x128xf32>
    %210 = arith.addf %207, %209 : vector<2x128xf32>
    %cst_68 = arith.constant 0.000000e+00 : f32
    %211 = vector.broadcast %cst_68 : f32 to vector<2x128xf32>
    %212 = arith.subf %211, %210 : vector<2x128xf32>
    %213 = math.exp %212 : vector<2x128xf32>
    %cst_69 = arith.constant 1.000000e+00 : f32
    %214 = vector.broadcast %cst_69 : f32 to vector<2x128xf32>
    %215 = arith.addf %214, %213 : vector<2x128xf32>
    %216 = tpu.reciprocal %215 : vector<2x128xf32> -> vector<2x128xf32>
    %217 = math.tanh %210 : vector<2x128xf32>
    %218 = vector.extract_strided_slice %216 {offsets = [0, 0], sizes = [2, 32], strides = [1, 1]} : vector<2x128xf32> to vector<2x32xf32>
    %219 = vector.extract_strided_slice %216 {offsets = [0, 32], sizes = [2, 32], strides = [1, 1]} : vector<2x128xf32> to vector<2x32xf32>
    %220 = vector.extract_strided_slice %217 {offsets = [0, 64], sizes = [2, 32], strides = [1, 1]} : vector<2x128xf32> to vector<2x32xf32>
    %221 = vector.extract_strided_slice %216 {offsets = [0, 96], sizes = [2, 32], strides = [1, 1]} : vector<2x128xf32> to vector<2x32xf32>
    %222 = arith.mulf %219, %199 : vector<2x32xf32>
    %223 = arith.mulf %218, %220 : vector<2x32xf32>
    %224 = arith.addf %222, %223 : vector<2x32xf32>
    %225 = math.tanh %224 : vector<2x32xf32>
    %226 = arith.mulf %221, %225 : vector<2x32xf32>
    %c2_i32_70 = arith.constant 2 : i32
    %227 = arith.muli %c7_i32, %c2_i32_70 : i32
    %228 = arith.index_cast %227 : i32 to index
    %c0_71 = arith.constant 0 : index
    %229 = vector.load %arg7[%228, %c0_71] : memref<32x32xf32, #tpu.memory_space<vmem>>, vector<2x32xf32>
    tpu.vector_store %arg7[%228, %c0_71], %226 {strides = array<i32>} : memref<32x32xf32, #tpu.memory_space<vmem>>, vector<2x32xf32>,
    %c8_i32 = arith.constant 8 : i32
    %c2_i32_72 = arith.constant 2 : i32
    %230 = arith.muli %c8_i32, %c2_i32_72 : i32
    %231 = arith.index_cast %230 : i32 to index
    %c0_73 = arith.constant 0 : index
    %232 = vector.load %arg6[%231, %c0_73] : memref<32x128xf32, #tpu.memory_space<vmem>>, vector<2x128xf32>
    %233 = arith.truncf %226 : vector<2x32xf32> to vector<2x32xbf16>
    %cst_74 = arith.constant dense<0.000000e+00> : vector<2x128xf32>
    %234 = tpu.matmul %233, %23, %cst_74 {dimension_numbers = #tpu.dot_dimension_numbers<[1], [0], [0], [1], [0, 0, 1, 1], [], []>} : vector<2x32xbf16>, vector<32x128xbf16>, vector<2x128xf32> -> vector<2x128xf32>
    %235 = arith.addf %232, %234 : vector<2x128xf32>
    %cst_75 = arith.constant 0.000000e+00 : f32
    %236 = vector.broadcast %cst_75 : f32 to vector<2x128xf32>
    %237 = arith.subf %236, %235 : vector<2x128xf32>
    %238 = math.exp %237 : vector<2x128xf32>
    %cst_76 = arith.constant 1.000000e+00 : f32
    %239 = vector.broadcast %cst_76 : f32 to vector<2x128xf32>
    %240 = arith.addf %239, %238 : vector<2x128xf32>
    %241 = tpu.reciprocal %240 : vector<2x128xf32> -> vector<2x128xf32>
    %242 = math.tanh %235 : vector<2x128xf32>
    %243 = vector.extract_strided_slice %241 {offsets = [0, 0], sizes = [2, 32], strides = [1, 1]} : vector<2x128xf32> to vector<2x32xf32>
    %244 = vector.extract_strided_slice %241 {offsets = [0, 32], sizes = [2, 32], strides = [1, 1]} : vector<2x128xf32> to vector<2x32xf32>
    %245 = vector.extract_strided_slice %242 {offsets = [0, 64], sizes = [2, 32], strides = [1, 1]} : vector<2x128xf32> to vector<2x32xf32>
    %246 = vector.extract_strided_slice %241 {offsets = [0, 96], sizes = [2, 32], strides = [1, 1]} : vector<2x128xf32> to vector<2x32xf32>
    %247 = arith.mulf %244, %224 : vector<2x32xf32>
    %248 = arith.mulf %243, %245 : vector<2x32xf32>
    %249 = arith.addf %247, %248 : vector<2x32xf32>
    %250 = math.tanh %249 : vector<2x32xf32>
    %251 = arith.mulf %246, %250 : vector<2x32xf32>
    %c2_i32_77 = arith.constant 2 : i32
    %252 = arith.muli %c8_i32, %c2_i32_77 : i32
    %253 = arith.index_cast %252 : i32 to index
    %c0_78 = arith.constant 0 : index
    %254 = vector.load %arg7[%253, %c0_78] : memref<32x32xf32, #tpu.memory_space<vmem>>, vector<2x32xf32>
    tpu.vector_store %arg7[%253, %c0_78], %251 {strides = array<i32>} : memref<32x32xf32, #tpu.memory_space<vmem>>, vector<2x32xf32>,
    %c9_i32 = arith.constant 9 : i32
    %c2_i32_79 = arith.constant 2 : i32
    %255 = arith.muli %c9_i32, %c2_i32_79 : i32
    %256 = arith.index_cast %255 : i32 to index
    %c0_80 = arith.constant 0 : index
    %257 = vector.load %arg6[%256, %c0_80] : memref<32x128xf32, #tpu.memory_space<vmem>>, vector<2x128xf32>
    %258 = arith.truncf %251 : vector<2x32xf32> to vector<2x32xbf16>
    %cst_81 = arith.constant dense<0.000000e+00> : vector<2x128xf32>
    %259 = tpu.matmul %258, %23, %cst_81 {dimension_numbers = #tpu.dot_dimension_numbers<[1], [0], [0], [1], [0, 0, 1, 1], [], []>} : vector<2x32xbf16>, vector<32x128xbf16>, vector<2x128xf32> -> vector<2x128xf32>
    %260 = arith.addf %257, %259 : vector<2x128xf32>
    %cst_82 = arith.constant 0.000000e+00 : f32
    %261 = vector.broadcast %cst_82 : f32 to vector<2x128xf32>
    %262 = arith.subf %261, %260 : vector<2x128xf32>
    %263 = math.exp %262 : vector<2x128xf32>
    %cst_83 = arith.constant 1.000000e+00 : f32
    %264 = vector.broadcast %cst_83 : f32 to vector<2x128xf32>
    %265 = arith.addf %264, %263 : vector<2x128xf32>
    %266 = tpu.reciprocal %265 : vector<2x128xf32> -> vector<2x128xf32>
    %267 = math.tanh %260 : vector<2x128xf32>
    %268 = vector.extract_strided_slice %266 {offsets = [0, 0], sizes = [2, 32], strides = [1, 1]} : vector<2x128xf32> to vector<2x32xf32>
    %269 = vector.extract_strided_slice %266 {offsets = [0, 32], sizes = [2, 32], strides = [1, 1]} : vector<2x128xf32> to vector<2x32xf32>
    %270 = vector.extract_strided_slice %267 {offsets = [0, 64], sizes = [2, 32], strides = [1, 1]} : vector<2x128xf32> to vector<2x32xf32>
    %271 = vector.extract_strided_slice %266 {offsets = [0, 96], sizes = [2, 32], strides = [1, 1]} : vector<2x128xf32> to vector<2x32xf32>
    %272 = arith.mulf %269, %249 : vector<2x32xf32>
    %273 = arith.mulf %268, %270 : vector<2x32xf32>
    %274 = arith.addf %272, %273 : vector<2x32xf32>
    %275 = math.tanh %274 : vector<2x32xf32>
    %276 = arith.mulf %271, %275 : vector<2x32xf32>
    %c2_i32_84 = arith.constant 2 : i32
    %277 = arith.muli %c9_i32, %c2_i32_84 : i32
    %278 = arith.index_cast %277 : i32 to index
    %c0_85 = arith.constant 0 : index
    %279 = vector.load %arg7[%278, %c0_85] : memref<32x32xf32, #tpu.memory_space<vmem>>, vector<2x32xf32>
    tpu.vector_store %arg7[%278, %c0_85], %276 {strides = array<i32>} : memref<32x32xf32, #tpu.memory_space<vmem>>, vector<2x32xf32>,
    %c10_i32 = arith.constant 10 : i32
    %c2_i32_86 = arith.constant 2 : i32
    %280 = arith.muli %c10_i32, %c2_i32_86 : i32
    %281 = arith.index_cast %280 : i32 to index
    %c0_87 = arith.constant 0 : index
    %282 = vector.load %arg6[%281, %c0_87] : memref<32x128xf32, #tpu.memory_space<vmem>>, vector<2x128xf32>
    %283 = arith.truncf %276 : vector<2x32xf32> to vector<2x32xbf16>
    %cst_88 = arith.constant dense<0.000000e+00> : vector<2x128xf32>
    %284 = tpu.matmul %283, %23, %cst_88 {dimension_numbers = #tpu.dot_dimension_numbers<[1], [0], [0], [1], [0, 0, 1, 1], [], []>} : vector<2x32xbf16>, vector<32x128xbf16>, vector<2x128xf32> -> vector<2x128xf32>
    %285 = arith.addf %282, %284 : vector<2x128xf32>
    %cst_89 = arith.constant 0.000000e+00 : f32
    %286 = vector.broadcast %cst_89 : f32 to vector<2x128xf32>
    %287 = arith.subf %286, %285 : vector<2x128xf32>
    %288 = math.exp %287 : vector<2x128xf32>
    %cst_90 = arith.constant 1.000000e+00 : f32
    %289 = vector.broadcast %cst_90 : f32 to vector<2x128xf32>
    %290 = arith.addf %289, %288 : vector<2x128xf32>
    %291 = tpu.reciprocal %290 : vector<2x128xf32> -> vector<2x128xf32>
    %292 = math.tanh %285 : vector<2x128xf32>
    %293 = vector.extract_strided_slice %291 {offsets = [0, 0], sizes = [2, 32], strides = [1, 1]} : vector<2x128xf32> to vector<2x32xf32>
    %294 = vector.extract_strided_slice %291 {offsets = [0, 32], sizes = [2, 32], strides = [1, 1]} : vector<2x128xf32> to vector<2x32xf32>
    %295 = vector.extract_strided_slice %292 {offsets = [0, 64], sizes = [2, 32], strides = [1, 1]} : vector<2x128xf32> to vector<2x32xf32>
    %296 = vector.extract_strided_slice %291 {offsets = [0, 96], sizes = [2, 32], strides = [1, 1]} : vector<2x128xf32> to vector<2x32xf32>
    %297 = arith.mulf %294, %274 : vector<2x32xf32>
    %298 = arith.mulf %293, %295 : vector<2x32xf32>
    %299 = arith.addf %297, %298 : vector<2x32xf32>
    %300 = math.tanh %299 : vector<2x32xf32>
    %301 = arith.mulf %296, %300 : vector<2x32xf32>
    %c2_i32_91 = arith.constant 2 : i32
    %302 = arith.muli %c10_i32, %c2_i32_91 : i32
    %303 = arith.index_cast %302 : i32 to index
    %c0_92 = arith.constant 0 : index
    %304 = vector.load %arg7[%303, %c0_92] : memref<32x32xf32, #tpu.memory_space<vmem>>, vector<2x32xf32>
    tpu.vector_store %arg7[%303, %c0_92], %301 {strides = array<i32>} : memref<32x32xf32, #tpu.memory_space<vmem>>, vector<2x32xf32>,
    %c11_i32 = arith.constant 11 : i32
    %c2_i32_93 = arith.constant 2 : i32
    %305 = arith.muli %c11_i32, %c2_i32_93 : i32
    %306 = arith.index_cast %305 : i32 to index
    %c0_94 = arith.constant 0 : index
    %307 = vector.load %arg6[%306, %c0_94] : memref<32x128xf32, #tpu.memory_space<vmem>>, vector<2x128xf32>
    %308 = arith.truncf %301 : vector<2x32xf32> to vector<2x32xbf16>
    %cst_95 = arith.constant dense<0.000000e+00> : vector<2x128xf32>
    %309 = tpu.matmul %308, %23, %cst_95 {dimension_numbers = #tpu.dot_dimension_numbers<[1], [0], [0], [1], [0, 0, 1, 1], [], []>} : vector<2x32xbf16>, vector<32x128xbf16>, vector<2x128xf32> -> vector<2x128xf32>
    %310 = arith.addf %307, %309 : vector<2x128xf32>
    %cst_96 = arith.constant 0.000000e+00 : f32
    %311 = vector.broadcast %cst_96 : f32 to vector<2x128xf32>
    %312 = arith.subf %311, %310 : vector<2x128xf32>
    %313 = math.exp %312 : vector<2x128xf32>
    %cst_97 = arith.constant 1.000000e+00 : f32
    %314 = vector.broadcast %cst_97 : f32 to vector<2x128xf32>
    %315 = arith.addf %314, %313 : vector<2x128xf32>
    %316 = tpu.reciprocal %315 : vector<2x128xf32> -> vector<2x128xf32>
    %317 = math.tanh %310 : vector<2x128xf32>
    %318 = vector.extract_strided_slice %316 {offsets = [0, 0], sizes = [2, 32], strides = [1, 1]} : vector<2x128xf32> to vector<2x32xf32>
    %319 = vector.extract_strided_slice %316 {offsets = [0, 32], sizes = [2, 32], strides = [1, 1]} : vector<2x128xf32> to vector<2x32xf32>
    %320 = vector.extract_strided_slice %317 {offsets = [0, 64], sizes = [2, 32], strides = [1, 1]} : vector<2x128xf32> to vector<2x32xf32>
    %321 = vector.extract_strided_slice %316 {offsets = [0, 96], sizes = [2, 32], strides = [1, 1]} : vector<2x128xf32> to vector<2x32xf32>
    %322 = arith.mulf %319, %299 : vector<2x32xf32>
    %323 = arith.mulf %318, %320 : vector<2x32xf32>
    %324 = arith.addf %322, %323 : vector<2x32xf32>
    %325 = math.tanh %324 : vector<2x32xf32>
    %326 = arith.mulf %321, %325 : vector<2x32xf32>
    %c2_i32_98 = arith.constant 2 : i32
    %327 = arith.muli %c11_i32, %c2_i32_98 : i32
    %328 = arith.index_cast %327 : i32 to index
    %c0_99 = arith.constant 0 : index
    %329 = vector.load %arg7[%328, %c0_99] : memref<32x32xf32, #tpu.memory_space<vmem>>, vector<2x32xf32>
    tpu.vector_store %arg7[%328, %c0_99], %326 {strides = array<i32>} : memref<32x32xf32, #tpu.memory_space<vmem>>, vector<2x32xf32>,
    %c12_i32 = arith.constant 12 : i32
    %c2_i32_100 = arith.constant 2 : i32
    %330 = arith.muli %c12_i32, %c2_i32_100 : i32
    %331 = arith.index_cast %330 : i32 to index
    %c0_101 = arith.constant 0 : index
    %332 = vector.load %arg6[%331, %c0_101] : memref<32x128xf32, #tpu.memory_space<vmem>>, vector<2x128xf32>
    %333 = arith.truncf %326 : vector<2x32xf32> to vector<2x32xbf16>
    %cst_102 = arith.constant dense<0.000000e+00> : vector<2x128xf32>
    %334 = tpu.matmul %333, %23, %cst_102 {dimension_numbers = #tpu.dot_dimension_numbers<[1], [0], [0], [1], [0, 0, 1, 1], [], []>} : vector<2x32xbf16>, vector<32x128xbf16>, vector<2x128xf32> -> vector<2x128xf32>
    %335 = arith.addf %332, %334 : vector<2x128xf32>
    %cst_103 = arith.constant 0.000000e+00 : f32
    %336 = vector.broadcast %cst_103 : f32 to vector<2x128xf32>
    %337 = arith.subf %336, %335 : vector<2x128xf32>
    %338 = math.exp %337 : vector<2x128xf32>
    %cst_104 = arith.constant 1.000000e+00 : f32
    %339 = vector.broadcast %cst_104 : f32 to vector<2x128xf32>
    %340 = arith.addf %339, %338 : vector<2x128xf32>
    %341 = tpu.reciprocal %340 : vector<2x128xf32> -> vector<2x128xf32>
    %342 = math.tanh %335 : vector<2x128xf32>
    %343 = vector.extract_strided_slice %341 {offsets = [0, 0], sizes = [2, 32], strides = [1, 1]} : vector<2x128xf32> to vector<2x32xf32>
    %344 = vector.extract_strided_slice %341 {offsets = [0, 32], sizes = [2, 32], strides = [1, 1]} : vector<2x128xf32> to vector<2x32xf32>
    %345 = vector.extract_strided_slice %342 {offsets = [0, 64], sizes = [2, 32], strides = [1, 1]} : vector<2x128xf32> to vector<2x32xf32>
    %346 = vector.extract_strided_slice %341 {offsets = [0, 96], sizes = [2, 32], strides = [1, 1]} : vector<2x128xf32> to vector<2x32xf32>
    %347 = arith.mulf %344, %324 : vector<2x32xf32>
    %348 = arith.mulf %343, %345 : vector<2x32xf32>
    %349 = arith.addf %347, %348 : vector<2x32xf32>
    %350 = math.tanh %349 : vector<2x32xf32>
    %351 = arith.mulf %346, %350 : vector<2x32xf32>
    %c2_i32_105 = arith.constant 2 : i32
    %352 = arith.muli %c12_i32, %c2_i32_105 : i32
    %353 = arith.index_cast %352 : i32 to index
    %c0_106 = arith.constant 0 : index
    %354 = vector.load %arg7[%353, %c0_106] : memref<32x32xf32, #tpu.memory_space<vmem>>, vector<2x32xf32>
    tpu.vector_store %arg7[%353, %c0_106], %351 {strides = array<i32>} : memref<32x32xf32, #tpu.memory_space<vmem>>, vector<2x32xf32>,
    %c13_i32 = arith.constant 13 : i32
    %c2_i32_107 = arith.constant 2 : i32
    %355 = arith.muli %c13_i32, %c2_i32_107 : i32
    %356 = arith.index_cast %355 : i32 to index
    %c0_108 = arith.constant 0 : index
    %357 = vector.load %arg6[%356, %c0_108] : memref<32x128xf32, #tpu.memory_space<vmem>>, vector<2x128xf32>
    %358 = arith.truncf %351 : vector<2x32xf32> to vector<2x32xbf16>
    %cst_109 = arith.constant dense<0.000000e+00> : vector<2x128xf32>
    %359 = tpu.matmul %358, %23, %cst_109 {dimension_numbers = #tpu.dot_dimension_numbers<[1], [0], [0], [1], [0, 0, 1, 1], [], []>} : vector<2x32xbf16>, vector<32x128xbf16>, vector<2x128xf32> -> vector<2x128xf32>
    %360 = arith.addf %357, %359 : vector<2x128xf32>
    %cst_110 = arith.constant 0.000000e+00 : f32
    %361 = vector.broadcast %cst_110 : f32 to vector<2x128xf32>
    %362 = arith.subf %361, %360 : vector<2x128xf32>
    %363 = math.exp %362 : vector<2x128xf32>
    %cst_111 = arith.constant 1.000000e+00 : f32
    %364 = vector.broadcast %cst_111 : f32 to vector<2x128xf32>
    %365 = arith.addf %364, %363 : vector<2x128xf32>
    %366 = tpu.reciprocal %365 : vector<2x128xf32> -> vector<2x128xf32>
    %367 = math.tanh %360 : vector<2x128xf32>
    %368 = vector.extract_strided_slice %366 {offsets = [0, 0], sizes = [2, 32], strides = [1, 1]} : vector<2x128xf32> to vector<2x32xf32>
    %369 = vector.extract_strided_slice %366 {offsets = [0, 32], sizes = [2, 32], strides = [1, 1]} : vector<2x128xf32> to vector<2x32xf32>
    %370 = vector.extract_strided_slice %367 {offsets = [0, 64], sizes = [2, 32], strides = [1, 1]} : vector<2x128xf32> to vector<2x32xf32>
    %371 = vector.extract_strided_slice %366 {offsets = [0, 96], sizes = [2, 32], strides = [1, 1]} : vector<2x128xf32> to vector<2x32xf32>
    %372 = arith.mulf %369, %349 : vector<2x32xf32>
    %373 = arith.mulf %368, %370 : vector<2x32xf32>
    %374 = arith.addf %372, %373 : vector<2x32xf32>
    %375 = math.tanh %374 : vector<2x32xf32>
    %376 = arith.mulf %371, %375 : vector<2x32xf32>
    %c2_i32_112 = arith.constant 2 : i32
    %377 = arith.muli %c13_i32, %c2_i32_112 : i32
    %378 = arith.index_cast %377 : i32 to index
    %c0_113 = arith.constant 0 : index
    %379 = vector.load %arg7[%378, %c0_113] : memref<32x32xf32, #tpu.memory_space<vmem>>, vector<2x32xf32>
    tpu.vector_store %arg7[%378, %c0_113], %376 {strides = array<i32>} : memref<32x32xf32, #tpu.memory_space<vmem>>, vector<2x32xf32>,
    %c14_i32 = arith.constant 14 : i32
    %c2_i32_114 = arith.constant 2 : i32
    %380 = arith.muli %c14_i32, %c2_i32_114 : i32
    %381 = arith.index_cast %380 : i32 to index
    %c0_115 = arith.constant 0 : index
    %382 = vector.load %arg6[%381, %c0_115] : memref<32x128xf32, #tpu.memory_space<vmem>>, vector<2x128xf32>
    %383 = arith.truncf %376 : vector<2x32xf32> to vector<2x32xbf16>
    %cst_116 = arith.constant dense<0.000000e+00> : vector<2x128xf32>
    %384 = tpu.matmul %383, %23, %cst_116 {dimension_numbers = #tpu.dot_dimension_numbers<[1], [0], [0], [1], [0, 0, 1, 1], [], []>} : vector<2x32xbf16>, vector<32x128xbf16>, vector<2x128xf32> -> vector<2x128xf32>
    %385 = arith.addf %382, %384 : vector<2x128xf32>
    %cst_117 = arith.constant 0.000000e+00 : f32
    %386 = vector.broadcast %cst_117 : f32 to vector<2x128xf32>
    %387 = arith.subf %386, %385 : vector<2x128xf32>
    %388 = math.exp %387 : vector<2x128xf32>
    %cst_118 = arith.constant 1.000000e+00 : f32
    %389 = vector.broadcast %cst_118 : f32 to vector<2x128xf32>
    %390 = arith.addf %389, %388 : vector<2x128xf32>
    %391 = tpu.reciprocal %390 : vector<2x128xf32> -> vector<2x128xf32>
    %392 = math.tanh %385 : vector<2x128xf32>
    %393 = vector.extract_strided_slice %391 {offsets = [0, 0], sizes = [2, 32], strides = [1, 1]} : vector<2x128xf32> to vector<2x32xf32>
    %394 = vector.extract_strided_slice %391 {offsets = [0, 32], sizes = [2, 32], strides = [1, 1]} : vector<2x128xf32> to vector<2x32xf32>
    %395 = vector.extract_strided_slice %392 {offsets = [0, 64], sizes = [2, 32], strides = [1, 1]} : vector<2x128xf32> to vector<2x32xf32>
    %396 = vector.extract_strided_slice %391 {offsets = [0, 96], sizes = [2, 32], strides = [1, 1]} : vector<2x128xf32> to vector<2x32xf32>
    %397 = arith.mulf %394, %374 : vector<2x32xf32>
    %398 = arith.mulf %393, %395 : vector<2x32xf32>
    %399 = arith.addf %397, %398 : vector<2x32xf32>
    %400 = math.tanh %399 : vector<2x32xf32>
    %401 = arith.mulf %396, %400 : vector<2x32xf32>
    %c2_i32_119 = arith.constant 2 : i32
    %402 = arith.muli %c14_i32, %c2_i32_119 : i32
    %403 = arith.index_cast %402 : i32 to index
    %c0_120 = arith.constant 0 : index
    %404 = vector.load %arg7[%403, %c0_120] : memref<32x32xf32, #tpu.memory_space<vmem>>, vector<2x32xf32>
    tpu.vector_store %arg7[%403, %c0_120], %401 {strides = array<i32>} : memref<32x32xf32, #tpu.memory_space<vmem>>, vector<2x32xf32>,
    %c15_i32 = arith.constant 15 : i32
    %c2_i32_121 = arith.constant 2 : i32
    %405 = arith.muli %c15_i32, %c2_i32_121 : i32
    %406 = arith.index_cast %405 : i32 to index
    %c0_122 = arith.constant 0 : index
    %407 = vector.load %arg6[%406, %c0_122] : memref<32x128xf32, #tpu.memory_space<vmem>>, vector<2x128xf32>
    %408 = arith.truncf %401 : vector<2x32xf32> to vector<2x32xbf16>
    %cst_123 = arith.constant dense<0.000000e+00> : vector<2x128xf32>
    %409 = tpu.matmul %408, %23, %cst_123 {dimension_numbers = #tpu.dot_dimension_numbers<[1], [0], [0], [1], [0, 0, 1, 1], [], []>} : vector<2x32xbf16>, vector<32x128xbf16>, vector<2x128xf32> -> vector<2x128xf32>
    %410 = arith.addf %407, %409 : vector<2x128xf32>
    %cst_124 = arith.constant 0.000000e+00 : f32
    %411 = vector.broadcast %cst_124 : f32 to vector<2x128xf32>
    %412 = arith.subf %411, %410 : vector<2x128xf32>
    %413 = math.exp %412 : vector<2x128xf32>
    %cst_125 = arith.constant 1.000000e+00 : f32
    %414 = vector.broadcast %cst_125 : f32 to vector<2x128xf32>
    %415 = arith.addf %414, %413 : vector<2x128xf32>
    %416 = tpu.reciprocal %415 : vector<2x128xf32> -> vector<2x128xf32>
    %417 = math.tanh %410 : vector<2x128xf32>
    %418 = vector.extract_strided_slice %416 {offsets = [0, 0], sizes = [2, 32], strides = [1, 1]} : vector<2x128xf32> to vector<2x32xf32>
    %419 = vector.extract_strided_slice %416 {offsets = [0, 32], sizes = [2, 32], strides = [1, 1]} : vector<2x128xf32> to vector<2x32xf32>
    %420 = vector.extract_strided_slice %417 {offsets = [0, 64], sizes = [2, 32], strides = [1, 1]} : vector<2x128xf32> to vector<2x32xf32>
    %421 = vector.extract_strided_slice %416 {offsets = [0, 96], sizes = [2, 32], strides = [1, 1]} : vector<2x128xf32> to vector<2x32xf32>
    %422 = arith.mulf %419, %399 : vector<2x32xf32>
    %423 = arith.mulf %418, %420 : vector<2x32xf32>
    %424 = arith.addf %422, %423 : vector<2x32xf32>
    %425 = math.tanh %424 : vector<2x32xf32>
    %426 = arith.mulf %421, %425 : vector<2x32xf32>
    %c2_i32_126 = arith.constant 2 : i32
    %427 = arith.muli %c15_i32, %c2_i32_126 : i32
    %428 = arith.index_cast %427 : i32 to index
    %c0_127 = arith.constant 0 : index
    %429 = vector.load %arg7[%428, %c0_127] : memref<32x32xf32, #tpu.memory_space<vmem>>, vector<2x32xf32>
    tpu.vector_store %arg7[%428, %c0_127], %426 {strides = array<i32>} : memref<32x32xf32, #tpu.memory_space<vmem>>, vector<2x32xf32>,
    %c16_i32 = arith.constant 16 : i32
    %c0_128 = arith.constant 0 : index
    %c0_129 = arith.constant 0 : index
    %430 = vector.load %arg7[%c0_128, %c0_129] : memref<32x32xf32, #tpu.memory_space<vmem>>, vector<32x32xf32>
    %c0_130 = arith.constant 0 : index
    %c0_131 = arith.constant 0 : index
    %431 = vector.load %arg3[%c0_130, %c0_131] : memref<65x128xf32, #tpu.memory_space<vmem>>, vector<32x128xf32>
    %c32 = arith.constant 32 : index
    %c0_132 = arith.constant 0 : index
    %432 = vector.load %arg3[%c32, %c0_132] : memref<65x128xf32, #tpu.memory_space<vmem>>, vector<32x128xf32>
    %433 = arith.truncf %432 : vector<32x128xf32> to vector<32x128xbf16>
    %c64 = arith.constant 64 : index
    %c0_133 = arith.constant 0 : index
    %434 = vector.load %arg3[%c64, %c0_133] : memref<65x128xf32, #tpu.memory_space<vmem>>, vector<1x128xf32>
    %cst_134 = arith.constant dense<0.000000e+00> : vector<32x128xf32>
    %435 = tpu.matmul %430, %431, %cst_134 {dimension_numbers = #tpu.dot_dimension_numbers<[1], [0], [0], [1], [0, 0, 1, 1], [], []>, precision = #tpu.contract_precision<fp32>} : vector<32x32xf32>, vector<32x128xf32>, vector<32x128xf32> -> vector<32x128xf32>
    %436 = vector.broadcast %434 : vector<1x128xf32> to vector<32x128xf32>
    %437 = arith.addf %435, %436 : vector<32x128xf32>
    %c0_135 = arith.constant 0 : index
    %c0_136 = arith.constant 0 : index
    %438 = vector.load %arg6[%c0_135, %c0_136] : memref<32x128xf32, #tpu.memory_space<vmem>>, vector<32x128xf32>
    tpu.vector_store %arg6[%c0_135, %c0_136], %437 {strides = array<i32>} : memref<32x128xf32, #tpu.memory_space<vmem>>, vector<32x128xf32>,
    %cst_137 = arith.constant 0.000000e+00 : f32
    %439 = vector.broadcast %cst_137 : f32 to vector<2x32xf32>
    %c0_i32_138 = arith.constant 0 : i32
    %c2_i32_139 = arith.constant 2 : i32
    %440 = arith.muli %c0_i32_138, %c2_i32_139 : i32
    %441 = arith.index_cast %440 : i32 to index
    %c0_140 = arith.constant 0 : index
    %442 = vector.load %arg6[%441, %c0_140] : memref<32x128xf32, #tpu.memory_space<vmem>>, vector<2x128xf32>
    %443 = arith.truncf %439 : vector<2x32xf32> to vector<2x32xbf16>
    %cst_141 = arith.constant dense<0.000000e+00> : vector<2x128xf32>
    %444 = tpu.matmul %443, %433, %cst_141 {dimension_numbers = #tpu.dot_dimension_numbers<[1], [0], [0], [1], [0, 0, 1, 1], [], []>} : vector<2x32xbf16>, vector<32x128xbf16>, vector<2x128xf32> -> vector<2x128xf32>
    %445 = arith.addf %442, %444 : vector<2x128xf32>
    %cst_142 = arith.constant 0.000000e+00 : f32
    %446 = vector.broadcast %cst_142 : f32 to vector<2x128xf32>
    %447 = arith.subf %446, %445 : vector<2x128xf32>
    %448 = math.exp %447 : vector<2x128xf32>
    %cst_143 = arith.constant 1.000000e+00 : f32
    %449 = vector.broadcast %cst_143 : f32 to vector<2x128xf32>
    %450 = arith.addf %449, %448 : vector<2x128xf32>
    %451 = tpu.reciprocal %450 : vector<2x128xf32> -> vector<2x128xf32>
    %452 = math.tanh %445 : vector<2x128xf32>
    %453 = vector.extract_strided_slice %451 {offsets = [0, 0], sizes = [2, 32], strides = [1, 1]} : vector<2x128xf32> to vector<2x32xf32>
    %454 = vector.extract_strided_slice %451 {offsets = [0, 32], sizes = [2, 32], strides = [1, 1]} : vector<2x128xf32> to vector<2x32xf32>
    %455 = vector.extract_strided_slice %452 {offsets = [0, 64], sizes = [2, 32], strides = [1, 1]} : vector<2x128xf32> to vector<2x32xf32>
    %456 = vector.extract_strided_slice %451 {offsets = [0, 96], sizes = [2, 32], strides = [1, 1]} : vector<2x128xf32> to vector<2x32xf32>
    %457 = arith.mulf %454, %439 : vector<2x32xf32>
    %458 = arith.mulf %453, %455 : vector<2x32xf32>
    %459 = arith.addf %457, %458 : vector<2x32xf32>
    %460 = math.tanh %459 : vector<2x32xf32>
    %461 = arith.mulf %456, %460 : vector<2x32xf32>
    %462 = vector.broadcast %19 : vector<1x32xf32> to vector<2x32xf32>
    %463 = arith.mulf %461, %462 : vector<2x32xf32>
    %cst_144 = arith.constant dense<0.000000e+00> : vector<2xf32>
    %464 = vector.multi_reduction <add>, %463, %cst_144 [1] : vector<2x32xf32> to vector<2xf32>
    %465 = vector.shape_cast %464 : vector<2xf32> to vector<2x1xf32>
    %466 = vector.broadcast %20 : vector<1x1xf32> to vector<2x1xf32>
    %467 = arith.addf %465, %466 : vector<2x1xf32>
    %c2_i32_145 = arith.constant 2 : i32
    %468 = arith.muli %c0_i32_138, %c2_i32_145 : i32
    %469 = arith.index_cast %468 : i32 to index
    %c0_146 = arith.constant 0 : index
    %470 = vector.load %arg5[%469, %c0_146] : memref<32x1xf32, #tpu.memory_space<vmem>>, vector<2x1xf32>
    tpu.vector_store %arg5[%469, %c0_146], %467 {strides = array<i32>} : memref<32x1xf32, #tpu.memory_space<vmem>>, vector<2x1xf32>,
    %c1_i32_147 = arith.constant 1 : i32
    %c2_i32_148 = arith.constant 2 : i32
    %471 = arith.muli %c1_i32_147, %c2_i32_148 : i32
    %472 = arith.index_cast %471 : i32 to index
    %c0_149 = arith.constant 0 : index
    %473 = vector.load %arg6[%472, %c0_149] : memref<32x128xf32, #tpu.memory_space<vmem>>, vector<2x128xf32>
    %474 = arith.truncf %461 : vector<2x32xf32> to vector<2x32xbf16>
    %cst_150 = arith.constant dense<0.000000e+00> : vector<2x128xf32>
    %475 = tpu.matmul %474, %433, %cst_150 {dimension_numbers = #tpu.dot_dimension_numbers<[1], [0], [0], [1], [0, 0, 1, 1], [], []>} : vector<2x32xbf16>, vector<32x128xbf16>, vector<2x128xf32> -> vector<2x128xf32>
    %476 = arith.addf %473, %475 : vector<2x128xf32>
    %cst_151 = arith.constant 0.000000e+00 : f32
    %477 = vector.broadcast %cst_151 : f32 to vector<2x128xf32>
    %478 = arith.subf %477, %476 : vector<2x128xf32>
    %479 = math.exp %478 : vector<2x128xf32>
    %cst_152 = arith.constant 1.000000e+00 : f32
    %480 = vector.broadcast %cst_152 : f32 to vector<2x128xf32>
    %481 = arith.addf %480, %479 : vector<2x128xf32>
    %482 = tpu.reciprocal %481 : vector<2x128xf32> -> vector<2x128xf32>
    %483 = math.tanh %476 : vector<2x128xf32>
    %484 = vector.extract_strided_slice %482 {offsets = [0, 0], sizes = [2, 32], strides = [1, 1]} : vector<2x128xf32> to vector<2x32xf32>
    %485 = vector.extract_strided_slice %482 {offsets = [0, 32], sizes = [2, 32], strides = [1, 1]} : vector<2x128xf32> to vector<2x32xf32>
    %486 = vector.extract_strided_slice %483 {offsets = [0, 64], sizes = [2, 32], strides = [1, 1]} : vector<2x128xf32> to vector<2x32xf32>
    %487 = vector.extract_strided_slice %482 {offsets = [0, 96], sizes = [2, 32], strides = [1, 1]} : vector<2x128xf32> to vector<2x32xf32>
    %488 = arith.mulf %485, %459 : vector<2x32xf32>
    %489 = arith.mulf %484, %486 : vector<2x32xf32>
    %490 = arith.addf %488, %489 : vector<2x32xf32>
    %491 = math.tanh %490 : vector<2x32xf32>
    %492 = arith.mulf %487, %491 : vector<2x32xf32>
    %493 = vector.broadcast %19 : vector<1x32xf32> to vector<2x32xf32>
    %494 = arith.mulf %492, %493 : vector<2x32xf32>
    %cst_153 = arith.constant dense<0.000000e+00> : vector<2xf32>
    %495 = vector.multi_reduction <add>, %494, %cst_153 [1] : vector<2x32xf32> to vector<2xf32>
    %496 = vector.shape_cast %495 : vector<2xf32> to vector<2x1xf32>
    %497 = vector.broadcast %20 : vector<1x1xf32> to vector<2x1xf32>
    %498 = arith.addf %496, %497 : vector<2x1xf32>
    %c2_i32_154 = arith.constant 2 : i32
    %499 = arith.muli %c1_i32_147, %c2_i32_154 : i32
    %500 = arith.index_cast %499 : i32 to index
    %c0_155 = arith.constant 0 : index
    %501 = vector.load %arg5[%500, %c0_155] : memref<32x1xf32, #tpu.memory_space<vmem>>, vector<2x1xf32>
    tpu.vector_store %arg5[%500, %c0_155], %498 {strides = array<i32>} : memref<32x1xf32, #tpu.memory_space<vmem>>, vector<2x1xf32>,
    %c2_i32_156 = arith.constant 2 : i32
    %c2_i32_157 = arith.constant 2 : i32
    %502 = arith.muli %c2_i32_156, %c2_i32_157 : i32
    %503 = arith.index_cast %502 : i32 to index
    %c0_158 = arith.constant 0 : index
    %504 = vector.load %arg6[%503, %c0_158] : memref<32x128xf32, #tpu.memory_space<vmem>>, vector<2x128xf32>
    %505 = arith.truncf %492 : vector<2x32xf32> to vector<2x32xbf16>
    %cst_159 = arith.constant dense<0.000000e+00> : vector<2x128xf32>
    %506 = tpu.matmul %505, %433, %cst_159 {dimension_numbers = #tpu.dot_dimension_numbers<[1], [0], [0], [1], [0, 0, 1, 1], [], []>} : vector<2x32xbf16>, vector<32x128xbf16>, vector<2x128xf32> -> vector<2x128xf32>
    %507 = arith.addf %504, %506 : vector<2x128xf32>
    %cst_160 = arith.constant 0.000000e+00 : f32
    %508 = vector.broadcast %cst_160 : f32 to vector<2x128xf32>
    %509 = arith.subf %508, %507 : vector<2x128xf32>
    %510 = math.exp %509 : vector<2x128xf32>
    %cst_161 = arith.constant 1.000000e+00 : f32
    %511 = vector.broadcast %cst_161 : f32 to vector<2x128xf32>
    %512 = arith.addf %511, %510 : vector<2x128xf32>
    %513 = tpu.reciprocal %512 : vector<2x128xf32> -> vector<2x128xf32>
    %514 = math.tanh %507 : vector<2x128xf32>
    %515 = vector.extract_strided_slice %513 {offsets = [0, 0], sizes = [2, 32], strides = [1, 1]} : vector<2x128xf32> to vector<2x32xf32>
    %516 = vector.extract_strided_slice %513 {offsets = [0, 32], sizes = [2, 32], strides = [1, 1]} : vector<2x128xf32> to vector<2x32xf32>
    %517 = vector.extract_strided_slice %514 {offsets = [0, 64], sizes = [2, 32], strides = [1, 1]} : vector<2x128xf32> to vector<2x32xf32>
    %518 = vector.extract_strided_slice %513 {offsets = [0, 96], sizes = [2, 32], strides = [1, 1]} : vector<2x128xf32> to vector<2x32xf32>
    %519 = arith.mulf %516, %490 : vector<2x32xf32>
    %520 = arith.mulf %515, %517 : vector<2x32xf32>
    %521 = arith.addf %519, %520 : vector<2x32xf32>
    %522 = math.tanh %521 : vector<2x32xf32>
    %523 = arith.mulf %518, %522 : vector<2x32xf32>
    %524 = vector.broadcast %19 : vector<1x32xf32> to vector<2x32xf32>
    %525 = arith.mulf %523, %524 : vector<2x32xf32>
    %cst_162 = arith.constant dense<0.000000e+00> : vector<2xf32>
    %526 = vector.multi_reduction <add>, %525, %cst_162 [1] : vector<2x32xf32> to vector<2xf32>
    %527 = vector.shape_cast %526 : vector<2xf32> to vector<2x1xf32>
    %528 = vector.broadcast %20 : vector<1x1xf32> to vector<2x1xf32>
    %529 = arith.addf %527, %528 : vector<2x1xf32>
    %c2_i32_163 = arith.constant 2 : i32
    %530 = arith.muli %c2_i32_156, %c2_i32_163 : i32
    %531 = arith.index_cast %530 : i32 to index
    %c0_164 = arith.constant 0 : index
    %532 = vector.load %arg5[%531, %c0_164] : memref<32x1xf32, #tpu.memory_space<vmem>>, vector<2x1xf32>
    tpu.vector_store %arg5[%531, %c0_164], %529 {strides = array<i32>} : memref<32x1xf32, #tpu.memory_space<vmem>>, vector<2x1xf32>,
    %c3_i32_165 = arith.constant 3 : i32
    %c2_i32_166 = arith.constant 2 : i32
    %533 = arith.muli %c3_i32_165, %c2_i32_166 : i32
    %534 = arith.index_cast %533 : i32 to index
    %c0_167 = arith.constant 0 : index
    %535 = vector.load %arg6[%534, %c0_167] : memref<32x128xf32, #tpu.memory_space<vmem>>, vector<2x128xf32>
    %536 = arith.truncf %523 : vector<2x32xf32> to vector<2x32xbf16>
    %cst_168 = arith.constant dense<0.000000e+00> : vector<2x128xf32>
    %537 = tpu.matmul %536, %433, %cst_168 {dimension_numbers = #tpu.dot_dimension_numbers<[1], [0], [0], [1], [0, 0, 1, 1], [], []>} : vector<2x32xbf16>, vector<32x128xbf16>, vector<2x128xf32> -> vector<2x128xf32>
    %538 = arith.addf %535, %537 : vector<2x128xf32>
    %cst_169 = arith.constant 0.000000e+00 : f32
    %539 = vector.broadcast %cst_169 : f32 to vector<2x128xf32>
    %540 = arith.subf %539, %538 : vector<2x128xf32>
    %541 = math.exp %540 : vector<2x128xf32>
    %cst_170 = arith.constant 1.000000e+00 : f32
    %542 = vector.broadcast %cst_170 : f32 to vector<2x128xf32>
    %543 = arith.addf %542, %541 : vector<2x128xf32>
    %544 = tpu.reciprocal %543 : vector<2x128xf32> -> vector<2x128xf32>
    %545 = math.tanh %538 : vector<2x128xf32>
    %546 = vector.extract_strided_slice %544 {offsets = [0, 0], sizes = [2, 32], strides = [1, 1]} : vector<2x128xf32> to vector<2x32xf32>
    %547 = vector.extract_strided_slice %544 {offsets = [0, 32], sizes = [2, 32], strides = [1, 1]} : vector<2x128xf32> to vector<2x32xf32>
    %548 = vector.extract_strided_slice %545 {offsets = [0, 64], sizes = [2, 32], strides = [1, 1]} : vector<2x128xf32> to vector<2x32xf32>
    %549 = vector.extract_strided_slice %544 {offsets = [0, 96], sizes = [2, 32], strides = [1, 1]} : vector<2x128xf32> to vector<2x32xf32>
    %550 = arith.mulf %547, %521 : vector<2x32xf32>
    %551 = arith.mulf %546, %548 : vector<2x32xf32>
    %552 = arith.addf %550, %551 : vector<2x32xf32>
    %553 = math.tanh %552 : vector<2x32xf32>
    %554 = arith.mulf %549, %553 : vector<2x32xf32>
    %555 = vector.broadcast %19 : vector<1x32xf32> to vector<2x32xf32>
    %556 = arith.mulf %554, %555 : vector<2x32xf32>
    %cst_171 = arith.constant dense<0.000000e+00> : vector<2xf32>
    %557 = vector.multi_reduction <add>, %556, %cst_171 [1] : vector<2x32xf32> to vector<2xf32>
    %558 = vector.shape_cast %557 : vector<2xf32> to vector<2x1xf32>
    %559 = vector.broadcast %20 : vector<1x1xf32> to vector<2x1xf32>
    %560 = arith.addf %558, %559 : vector<2x1xf32>
    %c2_i32_172 = arith.constant 2 : i32
    %561 = arith.muli %c3_i32_165, %c2_i32_172 : i32
    %562 = arith.index_cast %561 : i32 to index
    %c0_173 = arith.constant 0 : index
    %563 = vector.load %arg5[%562, %c0_173] : memref<32x1xf32, #tpu.memory_space<vmem>>, vector<2x1xf32>
    tpu.vector_store %arg5[%562, %c0_173], %560 {strides = array<i32>} : memref<32x1xf32, #tpu.memory_space<vmem>>, vector<2x1xf32>,
    %c4_i32_174 = arith.constant 4 : i32
    %c2_i32_175 = arith.constant 2 : i32
    %564 = arith.muli %c4_i32_174, %c2_i32_175 : i32
    %565 = arith.index_cast %564 : i32 to index
    %c0_176 = arith.constant 0 : index
    %566 = vector.load %arg6[%565, %c0_176] : memref<32x128xf32, #tpu.memory_space<vmem>>, vector<2x128xf32>
    %567 = arith.truncf %554 : vector<2x32xf32> to vector<2x32xbf16>
    %cst_177 = arith.constant dense<0.000000e+00> : vector<2x128xf32>
    %568 = tpu.matmul %567, %433, %cst_177 {dimension_numbers = #tpu.dot_dimension_numbers<[1], [0], [0], [1], [0, 0, 1, 1], [], []>} : vector<2x32xbf16>, vector<32x128xbf16>, vector<2x128xf32> -> vector<2x128xf32>
    %569 = arith.addf %566, %568 : vector<2x128xf32>
    %cst_178 = arith.constant 0.000000e+00 : f32
    %570 = vector.broadcast %cst_178 : f32 to vector<2x128xf32>
    %571 = arith.subf %570, %569 : vector<2x128xf32>
    %572 = math.exp %571 : vector<2x128xf32>
    %cst_179 = arith.constant 1.000000e+00 : f32
    %573 = vector.broadcast %cst_179 : f32 to vector<2x128xf32>
    %574 = arith.addf %573, %572 : vector<2x128xf32>
    %575 = tpu.reciprocal %574 : vector<2x128xf32> -> vector<2x128xf32>
    %576 = math.tanh %569 : vector<2x128xf32>
    %577 = vector.extract_strided_slice %575 {offsets = [0, 0], sizes = [2, 32], strides = [1, 1]} : vector<2x128xf32> to vector<2x32xf32>
    %578 = vector.extract_strided_slice %575 {offsets = [0, 32], sizes = [2, 32], strides = [1, 1]} : vector<2x128xf32> to vector<2x32xf32>
    %579 = vector.extract_strided_slice %576 {offsets = [0, 64], sizes = [2, 32], strides = [1, 1]} : vector<2x128xf32> to vector<2x32xf32>
    %580 = vector.extract_strided_slice %575 {offsets = [0, 96], sizes = [2, 32], strides = [1, 1]} : vector<2x128xf32> to vector<2x32xf32>
    %581 = arith.mulf %578, %552 : vector<2x32xf32>
    %582 = arith.mulf %577, %579 : vector<2x32xf32>
    %583 = arith.addf %581, %582 : vector<2x32xf32>
    %584 = math.tanh %583 : vector<2x32xf32>
    %585 = arith.mulf %580, %584 : vector<2x32xf32>
    %586 = vector.broadcast %19 : vector<1x32xf32> to vector<2x32xf32>
    %587 = arith.mulf %585, %586 : vector<2x32xf32>
    %cst_180 = arith.constant dense<0.000000e+00> : vector<2xf32>
    %588 = vector.multi_reduction <add>, %587, %cst_180 [1] : vector<2x32xf32> to vector<2xf32>
    %589 = vector.shape_cast %588 : vector<2xf32> to vector<2x1xf32>
    %590 = vector.broadcast %20 : vector<1x1xf32> to vector<2x1xf32>
    %591 = arith.addf %589, %590 : vector<2x1xf32>
    %c2_i32_181 = arith.constant 2 : i32
    %592 = arith.muli %c4_i32_174, %c2_i32_181 : i32
    %593 = arith.index_cast %592 : i32 to index
    %c0_182 = arith.constant 0 : index
    %594 = vector.load %arg5[%593, %c0_182] : memref<32x1xf32, #tpu.memory_space<vmem>>, vector<2x1xf32>
    tpu.vector_store %arg5[%593, %c0_182], %591 {strides = array<i32>} : memref<32x1xf32, #tpu.memory_space<vmem>>, vector<2x1xf32>,
    %c5_i32_183 = arith.constant 5 : i32
    %c2_i32_184 = arith.constant 2 : i32
    %595 = arith.muli %c5_i32_183, %c2_i32_184 : i32
    %596 = arith.index_cast %595 : i32 to index
    %c0_185 = arith.constant 0 : index
    %597 = vector.load %arg6[%596, %c0_185] : memref<32x128xf32, #tpu.memory_space<vmem>>, vector<2x128xf32>
    %598 = arith.truncf %585 : vector<2x32xf32> to vector<2x32xbf16>
    %cst_186 = arith.constant dense<0.000000e+00> : vector<2x128xf32>
    %599 = tpu.matmul %598, %433, %cst_186 {dimension_numbers = #tpu.dot_dimension_numbers<[1], [0], [0], [1], [0, 0, 1, 1], [], []>} : vector<2x32xbf16>, vector<32x128xbf16>, vector<2x128xf32> -> vector<2x128xf32>
    %600 = arith.addf %597, %599 : vector<2x128xf32>
    %cst_187 = arith.constant 0.000000e+00 : f32
    %601 = vector.broadcast %cst_187 : f32 to vector<2x128xf32>
    %602 = arith.subf %601, %600 : vector<2x128xf32>
    %603 = math.exp %602 : vector<2x128xf32>
    %cst_188 = arith.constant 1.000000e+00 : f32
    %604 = vector.broadcast %cst_188 : f32 to vector<2x128xf32>
    %605 = arith.addf %604, %603 : vector<2x128xf32>
    %606 = tpu.reciprocal %605 : vector<2x128xf32> -> vector<2x128xf32>
    %607 = math.tanh %600 : vector<2x128xf32>
    %608 = vector.extract_strided_slice %606 {offsets = [0, 0], sizes = [2, 32], strides = [1, 1]} : vector<2x128xf32> to vector<2x32xf32>
    %609 = vector.extract_strided_slice %606 {offsets = [0, 32], sizes = [2, 32], strides = [1, 1]} : vector<2x128xf32> to vector<2x32xf32>
    %610 = vector.extract_strided_slice %607 {offsets = [0, 64], sizes = [2, 32], strides = [1, 1]} : vector<2x128xf32> to vector<2x32xf32>
    %611 = vector.extract_strided_slice %606 {offsets = [0, 96], sizes = [2, 32], strides = [1, 1]} : vector<2x128xf32> to vector<2x32xf32>
    %612 = arith.mulf %609, %583 : vector<2x32xf32>
    %613 = arith.mulf %608, %610 : vector<2x32xf32>
    %614 = arith.addf %612, %613 : vector<2x32xf32>
    %615 = math.tanh %614 : vector<2x32xf32>
    %616 = arith.mulf %611, %615 : vector<2x32xf32>
    %617 = vector.broadcast %19 : vector<1x32xf32> to vector<2x32xf32>
    %618 = arith.mulf %616, %617 : vector<2x32xf32>
    %cst_189 = arith.constant dense<0.000000e+00> : vector<2xf32>
    %619 = vector.multi_reduction <add>, %618, %cst_189 [1] : vector<2x32xf32> to vector<2xf32>
    %620 = vector.shape_cast %619 : vector<2xf32> to vector<2x1xf32>
    %621 = vector.broadcast %20 : vector<1x1xf32> to vector<2x1xf32>
    %622 = arith.addf %620, %621 : vector<2x1xf32>
    %c2_i32_190 = arith.constant 2 : i32
    %623 = arith.muli %c5_i32_183, %c2_i32_190 : i32
    %624 = arith.index_cast %623 : i32 to index
    %c0_191 = arith.constant 0 : index
    %625 = vector.load %arg5[%624, %c0_191] : memref<32x1xf32, #tpu.memory_space<vmem>>, vector<2x1xf32>
    tpu.vector_store %arg5[%624, %c0_191], %622 {strides = array<i32>} : memref<32x1xf32, #tpu.memory_space<vmem>>, vector<2x1xf32>,
    %c6_i32_192 = arith.constant 6 : i32
    %c2_i32_193 = arith.constant 2 : i32
    %626 = arith.muli %c6_i32_192, %c2_i32_193 : i32
    %627 = arith.index_cast %626 : i32 to index
    %c0_194 = arith.constant 0 : index
    %628 = vector.load %arg6[%627, %c0_194] : memref<32x128xf32, #tpu.memory_space<vmem>>, vector<2x128xf32>
    %629 = arith.truncf %616 : vector<2x32xf32> to vector<2x32xbf16>
    %cst_195 = arith.constant dense<0.000000e+00> : vector<2x128xf32>
    %630 = tpu.matmul %629, %433, %cst_195 {dimension_numbers = #tpu.dot_dimension_numbers<[1], [0], [0], [1], [0, 0, 1, 1], [], []>} : vector<2x32xbf16>, vector<32x128xbf16>, vector<2x128xf32> -> vector<2x128xf32>
    %631 = arith.addf %628, %630 : vector<2x128xf32>
    %cst_196 = arith.constant 0.000000e+00 : f32
    %632 = vector.broadcast %cst_196 : f32 to vector<2x128xf32>
    %633 = arith.subf %632, %631 : vector<2x128xf32>
    %634 = math.exp %633 : vector<2x128xf32>
    %cst_197 = arith.constant 1.000000e+00 : f32
    %635 = vector.broadcast %cst_197 : f32 to vector<2x128xf32>
    %636 = arith.addf %635, %634 : vector<2x128xf32>
    %637 = tpu.reciprocal %636 : vector<2x128xf32> -> vector<2x128xf32>
    %638 = math.tanh %631 : vector<2x128xf32>
    %639 = vector.extract_strided_slice %637 {offsets = [0, 0], sizes = [2, 32], strides = [1, 1]} : vector<2x128xf32> to vector<2x32xf32>
    %640 = vector.extract_strided_slice %637 {offsets = [0, 32], sizes = [2, 32], strides = [1, 1]} : vector<2x128xf32> to vector<2x32xf32>
    %641 = vector.extract_strided_slice %638 {offsets = [0, 64], sizes = [2, 32], strides = [1, 1]} : vector<2x128xf32> to vector<2x32xf32>
    %642 = vector.extract_strided_slice %637 {offsets = [0, 96], sizes = [2, 32], strides = [1, 1]} : vector<2x128xf32> to vector<2x32xf32>
    %643 = arith.mulf %640, %614 : vector<2x32xf32>
    %644 = arith.mulf %639, %641 : vector<2x32xf32>
    %645 = arith.addf %643, %644 : vector<2x32xf32>
    %646 = math.tanh %645 : vector<2x32xf32>
    %647 = arith.mulf %642, %646 : vector<2x32xf32>
    %648 = vector.broadcast %19 : vector<1x32xf32> to vector<2x32xf32>
    %649 = arith.mulf %647, %648 : vector<2x32xf32>
    %cst_198 = arith.constant dense<0.000000e+00> : vector<2xf32>
    %650 = vector.multi_reduction <add>, %649, %cst_198 [1] : vector<2x32xf32> to vector<2xf32>
    %651 = vector.shape_cast %650 : vector<2xf32> to vector<2x1xf32>
    %652 = vector.broadcast %20 : vector<1x1xf32> to vector<2x1xf32>
    %653 = arith.addf %651, %652 : vector<2x1xf32>
    %c2_i32_199 = arith.constant 2 : i32
    %654 = arith.muli %c6_i32_192, %c2_i32_199 : i32
    %655 = arith.index_cast %654 : i32 to index
    %c0_200 = arith.constant 0 : index
    %656 = vector.load %arg5[%655, %c0_200] : memref<32x1xf32, #tpu.memory_space<vmem>>, vector<2x1xf32>
    tpu.vector_store %arg5[%655, %c0_200], %653 {strides = array<i32>} : memref<32x1xf32, #tpu.memory_space<vmem>>, vector<2x1xf32>,
    %c7_i32_201 = arith.constant 7 : i32
    %c2_i32_202 = arith.constant 2 : i32
    %657 = arith.muli %c7_i32_201, %c2_i32_202 : i32
    %658 = arith.index_cast %657 : i32 to index
    %c0_203 = arith.constant 0 : index
    %659 = vector.load %arg6[%658, %c0_203] : memref<32x128xf32, #tpu.memory_space<vmem>>, vector<2x128xf32>
    %660 = arith.truncf %647 : vector<2x32xf32> to vector<2x32xbf16>
    %cst_204 = arith.constant dense<0.000000e+00> : vector<2x128xf32>
    %661 = tpu.matmul %660, %433, %cst_204 {dimension_numbers = #tpu.dot_dimension_numbers<[1], [0], [0], [1], [0, 0, 1, 1], [], []>} : vector<2x32xbf16>, vector<32x128xbf16>, vector<2x128xf32> -> vector<2x128xf32>
    %662 = arith.addf %659, %661 : vector<2x128xf32>
    %cst_205 = arith.constant 0.000000e+00 : f32
    %663 = vector.broadcast %cst_205 : f32 to vector<2x128xf32>
    %664 = arith.subf %663, %662 : vector<2x128xf32>
    %665 = math.exp %664 : vector<2x128xf32>
    %cst_206 = arith.constant 1.000000e+00 : f32
    %666 = vector.broadcast %cst_206 : f32 to vector<2x128xf32>
    %667 = arith.addf %666, %665 : vector<2x128xf32>
    %668 = tpu.reciprocal %667 : vector<2x128xf32> -> vector<2x128xf32>
    %669 = math.tanh %662 : vector<2x128xf32>
    %670 = vector.extract_strided_slice %668 {offsets = [0, 0], sizes = [2, 32], strides = [1, 1]} : vector<2x128xf32> to vector<2x32xf32>
    %671 = vector.extract_strided_slice %668 {offsets = [0, 32], sizes = [2, 32], strides = [1, 1]} : vector<2x128xf32> to vector<2x32xf32>
    %672 = vector.extract_strided_slice %669 {offsets = [0, 64], sizes = [2, 32], strides = [1, 1]} : vector<2x128xf32> to vector<2x32xf32>
    %673 = vector.extract_strided_slice %668 {offsets = [0, 96], sizes = [2, 32], strides = [1, 1]} : vector<2x128xf32> to vector<2x32xf32>
    %674 = arith.mulf %671, %645 : vector<2x32xf32>
    %675 = arith.mulf %670, %672 : vector<2x32xf32>
    %676 = arith.addf %674, %675 : vector<2x32xf32>
    %677 = math.tanh %676 : vector<2x32xf32>
    %678 = arith.mulf %673, %677 : vector<2x32xf32>
    %679 = vector.broadcast %19 : vector<1x32xf32> to vector<2x32xf32>
    %680 = arith.mulf %678, %679 : vector<2x32xf32>
    %cst_207 = arith.constant dense<0.000000e+00> : vector<2xf32>
    %681 = vector.multi_reduction <add>, %680, %cst_207 [1] : vector<2x32xf32> to vector<2xf32>
    %682 = vector.shape_cast %681 : vector<2xf32> to vector<2x1xf32>
    %683 = vector.broadcast %20 : vector<1x1xf32> to vector<2x1xf32>
    %684 = arith.addf %682, %683 : vector<2x1xf32>
    %c2_i32_208 = arith.constant 2 : i32
    %685 = arith.muli %c7_i32_201, %c2_i32_208 : i32
    %686 = arith.index_cast %685 : i32 to index
    %c0_209 = arith.constant 0 : index
    %687 = vector.load %arg5[%686, %c0_209] : memref<32x1xf32, #tpu.memory_space<vmem>>, vector<2x1xf32>
    tpu.vector_store %arg5[%686, %c0_209], %684 {strides = array<i32>} : memref<32x1xf32, #tpu.memory_space<vmem>>, vector<2x1xf32>,
    %c8_i32_210 = arith.constant 8 : i32
    %c2_i32_211 = arith.constant 2 : i32
    %688 = arith.muli %c8_i32_210, %c2_i32_211 : i32
    %689 = arith.index_cast %688 : i32 to index
    %c0_212 = arith.constant 0 : index
    %690 = vector.load %arg6[%689, %c0_212] : memref<32x128xf32, #tpu.memory_space<vmem>>, vector<2x128xf32>
    %691 = arith.truncf %678 : vector<2x32xf32> to vector<2x32xbf16>
    %cst_213 = arith.constant dense<0.000000e+00> : vector<2x128xf32>
    %692 = tpu.matmul %691, %433, %cst_213 {dimension_numbers = #tpu.dot_dimension_numbers<[1], [0], [0], [1], [0, 0, 1, 1], [], []>} : vector<2x32xbf16>, vector<32x128xbf16>, vector<2x128xf32> -> vector<2x128xf32>
    %693 = arith.addf %690, %692 : vector<2x128xf32>
    %cst_214 = arith.constant 0.000000e+00 : f32
    %694 = vector.broadcast %cst_214 : f32 to vector<2x128xf32>
    %695 = arith.subf %694, %693 : vector<2x128xf32>
    %696 = math.exp %695 : vector<2x128xf32>
    %cst_215 = arith.constant 1.000000e+00 : f32
    %697 = vector.broadcast %cst_215 : f32 to vector<2x128xf32>
    %698 = arith.addf %697, %696 : vector<2x128xf32>
    %699 = tpu.reciprocal %698 : vector<2x128xf32> -> vector<2x128xf32>
    %700 = math.tanh %693 : vector<2x128xf32>
    %701 = vector.extract_strided_slice %699 {offsets = [0, 0], sizes = [2, 32], strides = [1, 1]} : vector<2x128xf32> to vector<2x32xf32>
    %702 = vector.extract_strided_slice %699 {offsets = [0, 32], sizes = [2, 32], strides = [1, 1]} : vector<2x128xf32> to vector<2x32xf32>
    %703 = vector.extract_strided_slice %700 {offsets = [0, 64], sizes = [2, 32], strides = [1, 1]} : vector<2x128xf32> to vector<2x32xf32>
    %704 = vector.extract_strided_slice %699 {offsets = [0, 96], sizes = [2, 32], strides = [1, 1]} : vector<2x128xf32> to vector<2x32xf32>
    %705 = arith.mulf %702, %676 : vector<2x32xf32>
    %706 = arith.mulf %701, %703 : vector<2x32xf32>
    %707 = arith.addf %705, %706 : vector<2x32xf32>
    %708 = math.tanh %707 : vector<2x32xf32>
    %709 = arith.mulf %704, %708 : vector<2x32xf32>
    %710 = vector.broadcast %19 : vector<1x32xf32> to vector<2x32xf32>
    %711 = arith.mulf %709, %710 : vector<2x32xf32>
    %cst_216 = arith.constant dense<0.000000e+00> : vector<2xf32>
    %712 = vector.multi_reduction <add>, %711, %cst_216 [1] : vector<2x32xf32> to vector<2xf32>
    %713 = vector.shape_cast %712 : vector<2xf32> to vector<2x1xf32>
    %714 = vector.broadcast %20 : vector<1x1xf32> to vector<2x1xf32>
    %715 = arith.addf %713, %714 : vector<2x1xf32>
    %c2_i32_217 = arith.constant 2 : i32
    %716 = arith.muli %c8_i32_210, %c2_i32_217 : i32
    %717 = arith.index_cast %716 : i32 to index
    %c0_218 = arith.constant 0 : index
    %718 = vector.load %arg5[%717, %c0_218] : memref<32x1xf32, #tpu.memory_space<vmem>>, vector<2x1xf32>
    tpu.vector_store %arg5[%717, %c0_218], %715 {strides = array<i32>} : memref<32x1xf32, #tpu.memory_space<vmem>>, vector<2x1xf32>,
    %c9_i32_219 = arith.constant 9 : i32
    %c2_i32_220 = arith.constant 2 : i32
    %719 = arith.muli %c9_i32_219, %c2_i32_220 : i32
    %720 = arith.index_cast %719 : i32 to index
    %c0_221 = arith.constant 0 : index
    %721 = vector.load %arg6[%720, %c0_221] : memref<32x128xf32, #tpu.memory_space<vmem>>, vector<2x128xf32>
    %722 = arith.truncf %709 : vector<2x32xf32> to vector<2x32xbf16>
    %cst_222 = arith.constant dense<0.000000e+00> : vector<2x128xf32>
    %723 = tpu.matmul %722, %433, %cst_222 {dimension_numbers = #tpu.dot_dimension_numbers<[1], [0], [0], [1], [0, 0, 1, 1], [], []>} : vector<2x32xbf16>, vector<32x128xbf16>, vector<2x128xf32> -> vector<2x128xf32>
    %724 = arith.addf %721, %723 : vector<2x128xf32>
    %cst_223 = arith.constant 0.000000e+00 : f32
    %725 = vector.broadcast %cst_223 : f32 to vector<2x128xf32>
    %726 = arith.subf %725, %724 : vector<2x128xf32>
    %727 = math.exp %726 : vector<2x128xf32>
    %cst_224 = arith.constant 1.000000e+00 : f32
    %728 = vector.broadcast %cst_224 : f32 to vector<2x128xf32>
    %729 = arith.addf %728, %727 : vector<2x128xf32>
    %730 = tpu.reciprocal %729 : vector<2x128xf32> -> vector<2x128xf32>
    %731 = math.tanh %724 : vector<2x128xf32>
    %732 = vector.extract_strided_slice %730 {offsets = [0, 0], sizes = [2, 32], strides = [1, 1]} : vector<2x128xf32> to vector<2x32xf32>
    %733 = vector.extract_strided_slice %730 {offsets = [0, 32], sizes = [2, 32], strides = [1, 1]} : vector<2x128xf32> to vector<2x32xf32>
    %734 = vector.extract_strided_slice %731 {offsets = [0, 64], sizes = [2, 32], strides = [1, 1]} : vector<2x128xf32> to vector<2x32xf32>
    %735 = vector.extract_strided_slice %730 {offsets = [0, 96], sizes = [2, 32], strides = [1, 1]} : vector<2x128xf32> to vector<2x32xf32>
    %736 = arith.mulf %733, %707 : vector<2x32xf32>
    %737 = arith.mulf %732, %734 : vector<2x32xf32>
    %738 = arith.addf %736, %737 : vector<2x32xf32>
    %739 = math.tanh %738 : vector<2x32xf32>
    %740 = arith.mulf %735, %739 : vector<2x32xf32>
    %741 = vector.broadcast %19 : vector<1x32xf32> to vector<2x32xf32>
    %742 = arith.mulf %740, %741 : vector<2x32xf32>
    %cst_225 = arith.constant dense<0.000000e+00> : vector<2xf32>
    %743 = vector.multi_reduction <add>, %742, %cst_225 [1] : vector<2x32xf32> to vector<2xf32>
    %744 = vector.shape_cast %743 : vector<2xf32> to vector<2x1xf32>
    %745 = vector.broadcast %20 : vector<1x1xf32> to vector<2x1xf32>
    %746 = arith.addf %744, %745 : vector<2x1xf32>
    %c2_i32_226 = arith.constant 2 : i32
    %747 = arith.muli %c9_i32_219, %c2_i32_226 : i32
    %748 = arith.index_cast %747 : i32 to index
    %c0_227 = arith.constant 0 : index
    %749 = vector.load %arg5[%748, %c0_227] : memref<32x1xf32, #tpu.memory_space<vmem>>, vector<2x1xf32>
    tpu.vector_store %arg5[%748, %c0_227], %746 {strides = array<i32>} : memref<32x1xf32, #tpu.memory_space<vmem>>, vector<2x1xf32>,
    %c10_i32_228 = arith.constant 10 : i32
    %c2_i32_229 = arith.constant 2 : i32
    %750 = arith.muli %c10_i32_228, %c2_i32_229 : i32
    %751 = arith.index_cast %750 : i32 to index
    %c0_230 = arith.constant 0 : index
    %752 = vector.load %arg6[%751, %c0_230] : memref<32x128xf32, #tpu.memory_space<vmem>>, vector<2x128xf32>
    %753 = arith.truncf %740 : vector<2x32xf32> to vector<2x32xbf16>
    %cst_231 = arith.constant dense<0.000000e+00> : vector<2x128xf32>
    %754 = tpu.matmul %753, %433, %cst_231 {dimension_numbers = #tpu.dot_dimension_numbers<[1], [0], [0], [1], [0, 0, 1, 1], [], []>} : vector<2x32xbf16>, vector<32x128xbf16>, vector<2x128xf32> -> vector<2x128xf32>
    %755 = arith.addf %752, %754 : vector<2x128xf32>
    %cst_232 = arith.constant 0.000000e+00 : f32
    %756 = vector.broadcast %cst_232 : f32 to vector<2x128xf32>
    %757 = arith.subf %756, %755 : vector<2x128xf32>
    %758 = math.exp %757 : vector<2x128xf32>
    %cst_233 = arith.constant 1.000000e+00 : f32
    %759 = vector.broadcast %cst_233 : f32 to vector<2x128xf32>
    %760 = arith.addf %759, %758 : vector<2x128xf32>
    %761 = tpu.reciprocal %760 : vector<2x128xf32> -> vector<2x128xf32>
    %762 = math.tanh %755 : vector<2x128xf32>
    %763 = vector.extract_strided_slice %761 {offsets = [0, 0], sizes = [2, 32], strides = [1, 1]} : vector<2x128xf32> to vector<2x32xf32>
    %764 = vector.extract_strided_slice %761 {offsets = [0, 32], sizes = [2, 32], strides = [1, 1]} : vector<2x128xf32> to vector<2x32xf32>
    %765 = vector.extract_strided_slice %762 {offsets = [0, 64], sizes = [2, 32], strides = [1, 1]} : vector<2x128xf32> to vector<2x32xf32>
    %766 = vector.extract_strided_slice %761 {offsets = [0, 96], sizes = [2, 32], strides = [1, 1]} : vector<2x128xf32> to vector<2x32xf32>
    %767 = arith.mulf %764, %738 : vector<2x32xf32>
    %768 = arith.mulf %763, %765 : vector<2x32xf32>
    %769 = arith.addf %767, %768 : vector<2x32xf32>
    %770 = math.tanh %769 : vector<2x32xf32>
    %771 = arith.mulf %766, %770 : vector<2x32xf32>
    %772 = vector.broadcast %19 : vector<1x32xf32> to vector<2x32xf32>
    %773 = arith.mulf %771, %772 : vector<2x32xf32>
    %cst_234 = arith.constant dense<0.000000e+00> : vector<2xf32>
    %774 = vector.multi_reduction <add>, %773, %cst_234 [1] : vector<2x32xf32> to vector<2xf32>
    %775 = vector.shape_cast %774 : vector<2xf32> to vector<2x1xf32>
    %776 = vector.broadcast %20 : vector<1x1xf32> to vector<2x1xf32>
    %777 = arith.addf %775, %776 : vector<2x1xf32>
    %c2_i32_235 = arith.constant 2 : i32
    %778 = arith.muli %c10_i32_228, %c2_i32_235 : i32
    %779 = arith.index_cast %778 : i32 to index
    %c0_236 = arith.constant 0 : index
    %780 = vector.load %arg5[%779, %c0_236] : memref<32x1xf32, #tpu.memory_space<vmem>>, vector<2x1xf32>
    tpu.vector_store %arg5[%779, %c0_236], %777 {strides = array<i32>} : memref<32x1xf32, #tpu.memory_space<vmem>>, vector<2x1xf32>,
    %c11_i32_237 = arith.constant 11 : i32
    %c2_i32_238 = arith.constant 2 : i32
    %781 = arith.muli %c11_i32_237, %c2_i32_238 : i32
    %782 = arith.index_cast %781 : i32 to index
    %c0_239 = arith.constant 0 : index
    %783 = vector.load %arg6[%782, %c0_239] : memref<32x128xf32, #tpu.memory_space<vmem>>, vector<2x128xf32>
    %784 = arith.truncf %771 : vector<2x32xf32> to vector<2x32xbf16>
    %cst_240 = arith.constant dense<0.000000e+00> : vector<2x128xf32>
    %785 = tpu.matmul %784, %433, %cst_240 {dimension_numbers = #tpu.dot_dimension_numbers<[1], [0], [0], [1], [0, 0, 1, 1], [], []>} : vector<2x32xbf16>, vector<32x128xbf16>, vector<2x128xf32> -> vector<2x128xf32>
    %786 = arith.addf %783, %785 : vector<2x128xf32>
    %cst_241 = arith.constant 0.000000e+00 : f32
    %787 = vector.broadcast %cst_241 : f32 to vector<2x128xf32>
    %788 = arith.subf %787, %786 : vector<2x128xf32>
    %789 = math.exp %788 : vector<2x128xf32>
    %cst_242 = arith.constant 1.000000e+00 : f32
    %790 = vector.broadcast %cst_242 : f32 to vector<2x128xf32>
    %791 = arith.addf %790, %789 : vector<2x128xf32>
    %792 = tpu.reciprocal %791 : vector<2x128xf32> -> vector<2x128xf32>
    %793 = math.tanh %786 : vector<2x128xf32>
    %794 = vector.extract_strided_slice %792 {offsets = [0, 0], sizes = [2, 32], strides = [1, 1]} : vector<2x128xf32> to vector<2x32xf32>
    %795 = vector.extract_strided_slice %792 {offsets = [0, 32], sizes = [2, 32], strides = [1, 1]} : vector<2x128xf32> to vector<2x32xf32>
    %796 = vector.extract_strided_slice %793 {offsets = [0, 64], sizes = [2, 32], strides = [1, 1]} : vector<2x128xf32> to vector<2x32xf32>
    %797 = vector.extract_strided_slice %792 {offsets = [0, 96], sizes = [2, 32], strides = [1, 1]} : vector<2x128xf32> to vector<2x32xf32>
    %798 = arith.mulf %795, %769 : vector<2x32xf32>
    %799 = arith.mulf %794, %796 : vector<2x32xf32>
    %800 = arith.addf %798, %799 : vector<2x32xf32>
    %801 = math.tanh %800 : vector<2x32xf32>
    %802 = arith.mulf %797, %801 : vector<2x32xf32>
    %803 = vector.broadcast %19 : vector<1x32xf32> to vector<2x32xf32>
    %804 = arith.mulf %802, %803 : vector<2x32xf32>
    %cst_243 = arith.constant dense<0.000000e+00> : vector<2xf32>
    %805 = vector.multi_reduction <add>, %804, %cst_243 [1] : vector<2x32xf32> to vector<2xf32>
    %806 = vector.shape_cast %805 : vector<2xf32> to vector<2x1xf32>
    %807 = vector.broadcast %20 : vector<1x1xf32> to vector<2x1xf32>
    %808 = arith.addf %806, %807 : vector<2x1xf32>
    %c2_i32_244 = arith.constant 2 : i32
    %809 = arith.muli %c11_i32_237, %c2_i32_244 : i32
    %810 = arith.index_cast %809 : i32 to index
    %c0_245 = arith.constant 0 : index
    %811 = vector.load %arg5[%810, %c0_245] : memref<32x1xf32, #tpu.memory_space<vmem>>, vector<2x1xf32>
    tpu.vector_store %arg5[%810, %c0_245], %808 {strides = array<i32>} : memref<32x1xf32, #tpu.memory_space<vmem>>, vector<2x1xf32>,
    %c12_i32_246 = arith.constant 12 : i32
    %c2_i32_247 = arith.constant 2 : i32
    %812 = arith.muli %c12_i32_246, %c2_i32_247 : i32
    %813 = arith.index_cast %812 : i32 to index
    %c0_248 = arith.constant 0 : index
    %814 = vector.load %arg6[%813, %c0_248] : memref<32x128xf32, #tpu.memory_space<vmem>>, vector<2x128xf32>
    %815 = arith.truncf %802 : vector<2x32xf32> to vector<2x32xbf16>
    %cst_249 = arith.constant dense<0.000000e+00> : vector<2x128xf32>
    %816 = tpu.matmul %815, %433, %cst_249 {dimension_numbers = #tpu.dot_dimension_numbers<[1], [0], [0], [1], [0, 0, 1, 1], [], []>} : vector<2x32xbf16>, vector<32x128xbf16>, vector<2x128xf32> -> vector<2x128xf32>
    %817 = arith.addf %814, %816 : vector<2x128xf32>
    %cst_250 = arith.constant 0.000000e+00 : f32
    %818 = vector.broadcast %cst_250 : f32 to vector<2x128xf32>
    %819 = arith.subf %818, %817 : vector<2x128xf32>
    %820 = math.exp %819 : vector<2x128xf32>
    %cst_251 = arith.constant 1.000000e+00 : f32
    %821 = vector.broadcast %cst_251 : f32 to vector<2x128xf32>
    %822 = arith.addf %821, %820 : vector<2x128xf32>
    %823 = tpu.reciprocal %822 : vector<2x128xf32> -> vector<2x128xf32>
    %824 = math.tanh %817 : vector<2x128xf32>
    %825 = vector.extract_strided_slice %823 {offsets = [0, 0], sizes = [2, 32], strides = [1, 1]} : vector<2x128xf32> to vector<2x32xf32>
    %826 = vector.extract_strided_slice %823 {offsets = [0, 32], sizes = [2, 32], strides = [1, 1]} : vector<2x128xf32> to vector<2x32xf32>
    %827 = vector.extract_strided_slice %824 {offsets = [0, 64], sizes = [2, 32], strides = [1, 1]} : vector<2x128xf32> to vector<2x32xf32>
    %828 = vector.extract_strided_slice %823 {offsets = [0, 96], sizes = [2, 32], strides = [1, 1]} : vector<2x128xf32> to vector<2x32xf32>
    %829 = arith.mulf %826, %800 : vector<2x32xf32>
    %830 = arith.mulf %825, %827 : vector<2x32xf32>
    %831 = arith.addf %829, %830 : vector<2x32xf32>
    %832 = math.tanh %831 : vector<2x32xf32>
    %833 = arith.mulf %828, %832 : vector<2x32xf32>
    %834 = vector.broadcast %19 : vector<1x32xf32> to vector<2x32xf32>
    %835 = arith.mulf %833, %834 : vector<2x32xf32>
    %cst_252 = arith.constant dense<0.000000e+00> : vector<2xf32>
    %836 = vector.multi_reduction <add>, %835, %cst_252 [1] : vector<2x32xf32> to vector<2xf32>
    %837 = vector.shape_cast %836 : vector<2xf32> to vector<2x1xf32>
    %838 = vector.broadcast %20 : vector<1x1xf32> to vector<2x1xf32>
    %839 = arith.addf %837, %838 : vector<2x1xf32>
    %c2_i32_253 = arith.constant 2 : i32
    %840 = arith.muli %c12_i32_246, %c2_i32_253 : i32
    %841 = arith.index_cast %840 : i32 to index
    %c0_254 = arith.constant 0 : index
    %842 = vector.load %arg5[%841, %c0_254] : memref<32x1xf32, #tpu.memory_space<vmem>>, vector<2x1xf32>
    tpu.vector_store %arg5[%841, %c0_254], %839 {strides = array<i32>} : memref<32x1xf32, #tpu.memory_space<vmem>>, vector<2x1xf32>,
    %c13_i32_255 = arith.constant 13 : i32
    %c2_i32_256 = arith.constant 2 : i32
    %843 = arith.muli %c13_i32_255, %c2_i32_256 : i32
    %844 = arith.index_cast %843 : i32 to index
    %c0_257 = arith.constant 0 : index
    %845 = vector.load %arg6[%844, %c0_257] : memref<32x128xf32, #tpu.memory_space<vmem>>, vector<2x128xf32>
    %846 = arith.truncf %833 : vector<2x32xf32> to vector<2x32xbf16>
    %cst_258 = arith.constant dense<0.000000e+00> : vector<2x128xf32>
    %847 = tpu.matmul %846, %433, %cst_258 {dimension_numbers = #tpu.dot_dimension_numbers<[1], [0], [0], [1], [0, 0, 1, 1], [], []>} : vector<2x32xbf16>, vector<32x128xbf16>, vector<2x128xf32> -> vector<2x128xf32>
    %848 = arith.addf %845, %847 : vector<2x128xf32>
    %cst_259 = arith.constant 0.000000e+00 : f32
    %849 = vector.broadcast %cst_259 : f32 to vector<2x128xf32>
    %850 = arith.subf %849, %848 : vector<2x128xf32>
    %851 = math.exp %850 : vector<2x128xf32>
    %cst_260 = arith.constant 1.000000e+00 : f32
    %852 = vector.broadcast %cst_260 : f32 to vector<2x128xf32>
    %853 = arith.addf %852, %851 : vector<2x128xf32>
    %854 = tpu.reciprocal %853 : vector<2x128xf32> -> vector<2x128xf32>
    %855 = math.tanh %848 : vector<2x128xf32>
    %856 = vector.extract_strided_slice %854 {offsets = [0, 0], sizes = [2, 32], strides = [1, 1]} : vector<2x128xf32> to vector<2x32xf32>
    %857 = vector.extract_strided_slice %854 {offsets = [0, 32], sizes = [2, 32], strides = [1, 1]} : vector<2x128xf32> to vector<2x32xf32>
    %858 = vector.extract_strided_slice %855 {offsets = [0, 64], sizes = [2, 32], strides = [1, 1]} : vector<2x128xf32> to vector<2x32xf32>
    %859 = vector.extract_strided_slice %854 {offsets = [0, 96], sizes = [2, 32], strides = [1, 1]} : vector<2x128xf32> to vector<2x32xf32>
    %860 = arith.mulf %857, %831 : vector<2x32xf32>
    %861 = arith.mulf %856, %858 : vector<2x32xf32>
    %862 = arith.addf %860, %861 : vector<2x32xf32>
    %863 = math.tanh %862 : vector<2x32xf32>
    %864 = arith.mulf %859, %863 : vector<2x32xf32>
    %865 = vector.broadcast %19 : vector<1x32xf32> to vector<2x32xf32>
    %866 = arith.mulf %864, %865 : vector<2x32xf32>
    %cst_261 = arith.constant dense<0.000000e+00> : vector<2xf32>
    %867 = vector.multi_reduction <add>, %866, %cst_261 [1] : vector<2x32xf32> to vector<2xf32>
    %868 = vector.shape_cast %867 : vector<2xf32> to vector<2x1xf32>
    %869 = vector.broadcast %20 : vector<1x1xf32> to vector<2x1xf32>
    %870 = arith.addf %868, %869 : vector<2x1xf32>
    %c2_i32_262 = arith.constant 2 : i32
    %871 = arith.muli %c13_i32_255, %c2_i32_262 : i32
    %872 = arith.index_cast %871 : i32 to index
    %c0_263 = arith.constant 0 : index
    %873 = vector.load %arg5[%872, %c0_263] : memref<32x1xf32, #tpu.memory_space<vmem>>, vector<2x1xf32>
    tpu.vector_store %arg5[%872, %c0_263], %870 {strides = array<i32>} : memref<32x1xf32, #tpu.memory_space<vmem>>, vector<2x1xf32>,
    %c14_i32_264 = arith.constant 14 : i32
    %c2_i32_265 = arith.constant 2 : i32
    %874 = arith.muli %c14_i32_264, %c2_i32_265 : i32
    %875 = arith.index_cast %874 : i32 to index
    %c0_266 = arith.constant 0 : index
    %876 = vector.load %arg6[%875, %c0_266] : memref<32x128xf32, #tpu.memory_space<vmem>>, vector<2x128xf32>
    %877 = arith.truncf %864 : vector<2x32xf32> to vector<2x32xbf16>
    %cst_267 = arith.constant dense<0.000000e+00> : vector<2x128xf32>
    %878 = tpu.matmul %877, %433, %cst_267 {dimension_numbers = #tpu.dot_dimension_numbers<[1], [0], [0], [1], [0, 0, 1, 1], [], []>} : vector<2x32xbf16>, vector<32x128xbf16>, vector<2x128xf32> -> vector<2x128xf32>
    %879 = arith.addf %876, %878 : vector<2x128xf32>
    %cst_268 = arith.constant 0.000000e+00 : f32
    %880 = vector.broadcast %cst_268 : f32 to vector<2x128xf32>
    %881 = arith.subf %880, %879 : vector<2x128xf32>
    %882 = math.exp %881 : vector<2x128xf32>
    %cst_269 = arith.constant 1.000000e+00 : f32
    %883 = vector.broadcast %cst_269 : f32 to vector<2x128xf32>
    %884 = arith.addf %883, %882 : vector<2x128xf32>
    %885 = tpu.reciprocal %884 : vector<2x128xf32> -> vector<2x128xf32>
    %886 = math.tanh %879 : vector<2x128xf32>
    %887 = vector.extract_strided_slice %885 {offsets = [0, 0], sizes = [2, 32], strides = [1, 1]} : vector<2x128xf32> to vector<2x32xf32>
    %888 = vector.extract_strided_slice %885 {offsets = [0, 32], sizes = [2, 32], strides = [1, 1]} : vector<2x128xf32> to vector<2x32xf32>
    %889 = vector.extract_strided_slice %886 {offsets = [0, 64], sizes = [2, 32], strides = [1, 1]} : vector<2x128xf32> to vector<2x32xf32>
    %890 = vector.extract_strided_slice %885 {offsets = [0, 96], sizes = [2, 32], strides = [1, 1]} : vector<2x128xf32> to vector<2x32xf32>
    %891 = arith.mulf %888, %862 : vector<2x32xf32>
    %892 = arith.mulf %887, %889 : vector<2x32xf32>
    %893 = arith.addf %891, %892 : vector<2x32xf32>
    %894 = math.tanh %893 : vector<2x32xf32>
    %895 = arith.mulf %890, %894 : vector<2x32xf32>
    %896 = vector.broadcast %19 : vector<1x32xf32> to vector<2x32xf32>
    %897 = arith.mulf %895, %896 : vector<2x32xf32>
    %cst_270 = arith.constant dense<0.000000e+00> : vector<2xf32>
    %898 = vector.multi_reduction <add>, %897, %cst_270 [1] : vector<2x32xf32> to vector<2xf32>
    %899 = vector.shape_cast %898 : vector<2xf32> to vector<2x1xf32>
    %900 = vector.broadcast %20 : vector<1x1xf32> to vector<2x1xf32>
    %901 = arith.addf %899, %900 : vector<2x1xf32>
    %c2_i32_271 = arith.constant 2 : i32
    %902 = arith.muli %c14_i32_264, %c2_i32_271 : i32
    %903 = arith.index_cast %902 : i32 to index
    %c0_272 = arith.constant 0 : index
    %904 = vector.load %arg5[%903, %c0_272] : memref<32x1xf32, #tpu.memory_space<vmem>>, vector<2x1xf32>
    tpu.vector_store %arg5[%903, %c0_272], %901 {strides = array<i32>} : memref<32x1xf32, #tpu.memory_space<vmem>>, vector<2x1xf32>,
    %c15_i32_273 = arith.constant 15 : i32
    %c2_i32_274 = arith.constant 2 : i32
    %905 = arith.muli %c15_i32_273, %c2_i32_274 : i32
    %906 = arith.index_cast %905 : i32 to index
    %c0_275 = arith.constant 0 : index
    %907 = vector.load %arg6[%906, %c0_275] : memref<32x128xf32, #tpu.memory_space<vmem>>, vector<2x128xf32>
    %908 = arith.truncf %895 : vector<2x32xf32> to vector<2x32xbf16>
    %cst_276 = arith.constant dense<0.000000e+00> : vector<2x128xf32>
    %909 = tpu.matmul %908, %433, %cst_276 {dimension_numbers = #tpu.dot_dimension_numbers<[1], [0], [0], [1], [0, 0, 1, 1], [], []>} : vector<2x32xbf16>, vector<32x128xbf16>, vector<2x128xf32> -> vector<2x128xf32>
    %910 = arith.addf %907, %909 : vector<2x128xf32>
    %cst_277 = arith.constant 0.000000e+00 : f32
    %911 = vector.broadcast %cst_277 : f32 to vector<2x128xf32>
    %912 = arith.subf %911, %910 : vector<2x128xf32>
    %913 = math.exp %912 : vector<2x128xf32>
    %cst_278 = arith.constant 1.000000e+00 : f32
    %914 = vector.broadcast %cst_278 : f32 to vector<2x128xf32>
    %915 = arith.addf %914, %913 : vector<2x128xf32>
    %916 = tpu.reciprocal %915 : vector<2x128xf32> -> vector<2x128xf32>
    %917 = math.tanh %910 : vector<2x128xf32>
    %918 = vector.extract_strided_slice %916 {offsets = [0, 0], sizes = [2, 32], strides = [1, 1]} : vector<2x128xf32> to vector<2x32xf32>
    %919 = vector.extract_strided_slice %916 {offsets = [0, 32], sizes = [2, 32], strides = [1, 1]} : vector<2x128xf32> to vector<2x32xf32>
    %920 = vector.extract_strided_slice %917 {offsets = [0, 64], sizes = [2, 32], strides = [1, 1]} : vector<2x128xf32> to vector<2x32xf32>
    %921 = vector.extract_strided_slice %916 {offsets = [0, 96], sizes = [2, 32], strides = [1, 1]} : vector<2x128xf32> to vector<2x32xf32>
    %922 = arith.mulf %919, %893 : vector<2x32xf32>
    %923 = arith.mulf %918, %920 : vector<2x32xf32>
    %924 = arith.addf %922, %923 : vector<2x32xf32>
    %925 = math.tanh %924 : vector<2x32xf32>
    %926 = arith.mulf %921, %925 : vector<2x32xf32>
    %927 = vector.broadcast %19 : vector<1x32xf32> to vector<2x32xf32>
    %928 = arith.mulf %926, %927 : vector<2x32xf32>
    %cst_279 = arith.constant dense<0.000000e+00> : vector<2xf32>
    %929 = vector.multi_reduction <add>, %928, %cst_279 [1] : vector<2x32xf32> to vector<2xf32>
    %930 = vector.shape_cast %929 : vector<2xf32> to vector<2x1xf32>
    %931 = vector.broadcast %20 : vector<1x1xf32> to vector<2x1xf32>
    %932 = arith.addf %930, %931 : vector<2x1xf32>
    %c2_i32_280 = arith.constant 2 : i32
    %933 = arith.muli %c15_i32_273, %c2_i32_280 : i32
    %934 = arith.index_cast %933 : i32 to index
    %c0_281 = arith.constant 0 : index
    %935 = vector.load %arg5[%934, %c0_281] : memref<32x1xf32, #tpu.memory_space<vmem>>, vector<2x1xf32>
    tpu.vector_store %arg5[%934, %c0_281], %932 {strides = array<i32>} : memref<32x1xf32, #tpu.memory_space<vmem>>, vector<2x1xf32>,
    %c16_i32_282 = arith.constant 16 : i32
    return
  }
}

</mosaic_0001>

<llo_original>
// kernel: tpu_custom_call.1
$region0: #{tpu_custom_call.1}
  #allocation0 [shape = 'u32[]', space=smem, size = 0x4, offset = 0x4, fixed_abs, tag = 'smem constant byte address 0x4 - core index']
  #allocation1 [shape = 'u32[144,128]{1,0:T(1,128)}', space=vmem, size = 0x12000, scoped, tag = 'internal scratch']
  #allocation2 [shape = 'f32[32,128]{1,0:T(8,128)}', space=vmem, size = 0x4000, scoped, tag = 'scratch operand']
  #allocation3 [shape = 'f32[32,32]{1,0:T(8,128)}', space=vmem, size = 0x4000, scoped, tag = 'scratch operand']
  %s0 = inlined_call_operand.vmem [shape: f32[36,13], index: 0, kind: input, shape index: {}]
  %s1 = inlined_call_operand.vmem [shape: f32[13,8], index: 1, kind: input, shape index: {}]
  %s2 = inlined_call_operand.hbm [shape: f32[41,128], index: 2, kind: input, shape index: {}]
  %s3 = inlined_call_operand.vmem [shape: f32[65,128], index: 3, kind: input, shape index: {}]
  %s4 = inlined_call_operand.vmem [shape: f32[1,33], index: 4, kind: input, shape index: {}]
  %s5 = inlined_call_operand.vmem [shape: f32[32,1], index: 5, kind: output, shape index: {}]
  %s6 = sld [smem:[#allocation0]]
  $region34: #{tpu_custom_call.1} parent=0
    _
  %s8 = ssub.s32 1, %s6
  %s9 = scalar_select 0, %s8, %s6
  $region1: #{tpu_custom_call.1} parent=0
    #allocation4 [shape = 'u8[24576]{0}', space=vmem, size = 0x6000, scoped, tag = 'input window, operand 2, single buffered']
    #allocation5 [shape = 's32[1]{0}', space=sflag, size = 0x4, scoped, tag = 'scoped memory for tpu_custom_call.1']
    %10 = vsyncpa [#allocation5], 0
    // Predicated region
    $region2: #{tpu_custom_call.1} parent=1 // pred_check
      _
    $region3: #{tpu_custom_call.1} parent=1 // pred_check_branch
      %12 = sbr.rel (0) target = $region5
    $region4: #{tpu_custom_call.1} parent=1 // pred_region
      _
    $region5: #{tpu_custom_call.1} parent=1 // pred_fallthru
      _
    // Predicated region
    $region6: #{tpu_custom_call.1} parent=1 // pred_check
      _
    $region7: #{tpu_custom_call.1} parent=1 // pred_check_branch
      %14 = sbr.rel (0) target = $region9
    $region8: #{tpu_custom_call.1} parent=1 // pred_region
      _
    $region9: #{tpu_custom_call.1} parent=1 // pred_fallthru
      _
    // Predicated region
    $region10: #{tpu_custom_call.1} parent=1 // pred_check
      _
    $region11: #{tpu_custom_call.1} parent=1 // pred_check_branch
      %16 = sbr.rel (0) target = $region13
    $region12: #{tpu_custom_call.1} parent=1 // pred_region
      %s18 = ssub.s32 768, 768
      %19 = vsyncadd [#allocation5], %s18
      %s20 = sshll.u32 [#allocation4], 4
      %s21 = int_to_ptr.vmem [resolvable:$true] %s20
      %26 = dma.hbm_to_vmem [thread:$0]  %s2, 768, %s21, [#allocation5], 128, 128, 8
    $region13: #{tpu_custom_call.1} parent=1 // pred_fallthru
      _
    // Predicated region
    $region14: #{tpu_custom_call.1} parent=1 // pred_check
      _
    $region15: #{tpu_custom_call.1} parent=1 // pred_check_branch
      %28 = sbr.rel (0) target = $region17
    $region16: #{tpu_custom_call.1} parent=1 // pred_region
      _
    $region17: #{tpu_custom_call.1} parent=1 // pred_fallthru
      _
    // Predicated region
    $region18: #{tpu_custom_call.1} parent=1 // pred_check
      _
    $region19: #{tpu_custom_call.1} parent=1 // pred_check_branch
      %30 = sbr.rel (0) target = $region21
    $region20: #{tpu_custom_call.1} parent=1 // pred_region
      _
    $region21: #{tpu_custom_call.1} parent=1 // pred_fallthru
      _
    // Predicated region
    $region22: #{tpu_custom_call.1} parent=1 // pred_check
      _
    $region23: #{tpu_custom_call.1} parent=1 // pred_check_branch
      %32 = sbr.rel (0) target = $region25
    $region24: #{tpu_custom_call.1} parent=1 // pred_region
      %33 = dma.done [#allocation5], 768
    $region25: #{tpu_custom_call.1} parent=1 // pred_fallthru
      _
    %v35 = vld [vmem:[%s0] sm:$0xff]
    %v36 = vld [vmem:[%s0 + $0x8] sm:$0xff]
    %v37 = vld [vmem:[%s0 + $0x10] sm:$0xff]
    %v38 = vld [vmem:[%s0 + $0x18] sm:$0xff]
    %v39 = vld [vmem:[%s0 + $0x20] sm:$0xf]
    %v40 = vld [vmem:[%s1] sm:$0xff]
    %v41 = vld [vmem:[%s1 + $0x8] sm:$0x1f]
    %vm42 = vcmask 105472
    %v44 = vsel %vm42, %v35, 0
    %v47 = vsel %vm42, %v36, 0
    %v50 = vsel %vm42, %v37, 0
    %v53 = vsel %vm42, %v38, 0
    %v56 = vsel %vm42, %v39, 0
    %vm58 = vcmask 1044480
    %v60 = vsel %vm58, %v41, 0
    %62 = vmatprep.subr.mxu0 0.0
    %v63 = vand.u32 %v40, 4294901760
    %64 = vmatpush1.msra.mxu0 %v63
    %65 = vmatprep.subr.mxu0 0.0
    %v66 = vand.u32 %v60, 4294901760
    %67 = vmatpush1.msra.mxu0 %v66
    %68 = vmatprep.subr.mxu0 0.0
    %69 = vmatpush1.msra.mxu0 0.0
    %70 = vmatprep.subr.mxu0 0.0
    %71 = vmatpush1.msra.mxu0 0.0
    %72 = vmatprep.subr.mxu0 0.0
    %73 = vmatpush1.msra.mxu0 0.0
    %74 = vmatprep.subr.mxu0 0.0
    %75 = vmatpush1.msra.mxu0 0.0
    %76 = vmatprep.subr.mxu0 0.0
    %77 = vmatpush1.msra.mxu0 0.0
    %78 = vmatprep.subr.mxu0 0.0
    %79 = vmatpush1.msra.mxu0 0.0
    %80 = vmatprep.subr.mxu0 0.0
    %81 = vmatpush1.msra.mxu0 0.0
    %82 = vmatprep.subr.mxu0 0.0
    %83 = vmatpush1.msra.mxu0 0.0
    %84 = vmatprep.subr.mxu0 0.0
    %85 = vmatpush1.msra.mxu0 0.0
    %86 = vmatprep.subr.mxu0 0.0
    %87 = vmatpush1.msra.mxu0 0.0
    %88 = vmatprep.subr.mxu0 0.0
    %89 = vmatpush1.msra.mxu0 0.0
    %90 = vmatprep.subr.mxu0 0.0
    %91 = vmatpush1.msra.mxu0 0.0
    %92 = vmatprep.subr.mxu0 0.0
    %93 = vmatpush1.msra.mxu0 0.0
    %94 = vmatprep.subr.mxu0 0.0
    %95 = vmatpush1.msra.mxu0 0.0
    %96 = vmatprep.subr.mxu0 0.0
    %97 = vmatpush1.msra.mxu0 0.0
    %98 = vmatprep.subr.mxu0 0.0
    %99 = vmatpush1.msra.mxu0 0.0
    %100 = vmatprep.subr.mxu0 0.0
    %101 = vmatpush1.msra.mxu0 0.0
    %102 = vmatprep.subr.mxu0 0.0
    %103 = vmatpush1.msra.mxu0 0.0
    %104 = vmatprep.subr.mxu0 0.0
    %105 = vmatpush1.msra.mxu0 0.0
    %106 = vmatprep.subr.mxu0 0.0
    %107 = vmatpush1.msra.mxu0 0.0
    %108 = vmatprep.subr.mxu0 0.0
    %109 = vmatpush1.msra.mxu0 0.0
    %110 = vmatprep.subr.mxu0 0.0
    %111 = vmatpush1.msra.mxu0 0.0
    %112 = vmatprep.subr.mxu0 0.0
    %113 = vmatpush1.msra.mxu0 0.0
    %114 = vmatprep.subr.mxu0 0.0
    %115 = vmatpush1.msra.mxu0 0.0
    %116 = vmatprep.subr.mxu0 0.0
    %117 = vmatpush1.msra.mxu0 0.0
    %118 = vmatprep.subr.mxu0 0.0
    %119 = vmatpush1.msra.mxu0 0.0
    %120 = vmatprep.subr.mxu0 0.0
    %121 = vmatpush1.msra.mxu0 0.0
    %122 = vmatprep.subr.mxu0 0.0
    %123 = vmatpush1.msra.mxu0 0.0
    %124 = vmatprep.subr.mxu0 0.0
    %125 = vmatpush1.msra.mxu0 0.0
    %126 = vmatprep.subr.mxu0 0.0
    %127 = vmatpush1.msra.mxu0 0.0
    %128 = vmatprep.mubr.f32.mxu0 0.0
    %v129 = vand.u32 %v44, 4294901760
    %v130 = vsub.f32 %v44, %v129
    %v131 = vand.u32 %v130, 4294901760
    %v132 = vsub.f32 %v130, %v131
    %v133 = vand.u32 %v132, 4294901760
    %134 = vmatmul.mubr.f32.gmra.mrb[0].mxu0 %v133
    %v135 = vpop.f32.mrb[0].mxu0
    %v136 = vadd.f32 0.0, %v135
    %v137 = vpop.f32.mrb[0].mxu0
    %138 = vmatprep.mubr.f32.mxu0 0.0
    %v139 = vand.u32 %v47, 4294901760
    %v140 = vsub.f32 %v47, %v139
    %v141 = vand.u32 %v140, 4294901760
    %v142 = vsub.f32 %v140, %v141
    %v143 = vand.u32 %v142, 4294901760
    %144 = vmatmul.mubr.f32.gmra.mrb[0].mxu0 %v143
    %v145 = vpop.f32.mrb[0].mxu0
    %v146 = vadd.f32 0.0, %v145
    %v147 = vpop.f32.mrb[0].mxu0
    %148 = vmatprep.mubr.f32.mxu0 0.0
    %v149 = vand.u32 %v50, 4294901760
    %v150 = vsub.f32 %v50, %v149
    %v151 = vand.u32 %v150, 4294901760
    %v152 = vsub.f32 %v150, %v151
    %v153 = vand.u32 %v152, 4294901760
    %154 = vmatmul.mubr.f32.gmra.mrb[0].mxu0 %v153
    %v155 = vpop.f32.mrb[0].mxu0
    %v156 = vadd.f32 0.0, %v155
    %v157 = vpop.f32.mrb[0].mxu0
    %158 = vmatprep.mubr.f32.mxu0 0.0
    %v159 = vand.u32 %v53, 4294901760
    %v160 = vsub.f32 %v53, %v159
    %v161 = vand.u32 %v160, 4294901760
    %v162 = vsub.f32 %v160, %v161
    %v163 = vand.u32 %v162, 4294901760
    %164 = vmatmul.mubr.f32.gmra.mrb[0].mxu0 %v163
    %v165 = vpop.f32.mrb[0].mxu0
    %v166 = vadd.f32 0.0, %v165
    %v167 = vpop.f32.mrb[0].mxu0
    %168 = vmatprep.mubr.f32.mxu0 0.0
    %v169 = vand.u32 %v56, 4294901760
    %v170 = vsub.f32 %v56, %v169
    %v171 = vand.u32 %v170, 4294901760
    %v172 = vsub.f32 %v170, %v171
    %v173 = vand.u32 %v172, 4294901760
    %174 = vmatmul.mubr.f32.gmra.mrb[0].mxu0 %v173
    %v175 = vpop.f32.mrb[0].mxu0
    %v176 = vadd.f32 0.0, %v175
    %v177 = vpop.f32.mrb[0].mxu0
    %178 = vdwg.mxu0
    %179 = vmatprep.subr.mxu0 0.0
    %v180 = vand.u32 %v40, 4294901760
    %v181 = vsub.f32 %v40, %v180
    %v182 = vand.u32 %v181, 4294901760
    %v183 = vsub.f32 %v181, %v182
    %v184 = vand.u32 %v183, 4294901760
    %185 = vmatpush1.msra.mxu0 %v184
    %186 = vmatprep.subr.mxu0 0.0
    %v187 = vand.u32 %v60, 4294901760
    %v188 = vsub.f32 %v60, %v187
    %v189 = vand.u32 %v188, 4294901760
    %v190 = vsub.f32 %v188, %v189
    %v191 = vand.u32 %v190, 4294901760
    %192 = vmatpush1.msra.mxu0 %v191
    %193 = vmatprep.subr.mxu0 0.0
    %194 = vmatpush1.msra.mxu0 0.0
    %195 = vmatprep.subr.mxu0 0.0
    %196 = vmatpush1.msra.mxu0 0.0
    %197 = vmatprep.subr.mxu0 0.0
    %198 = vmatpush1.msra.mxu0 0.0
    %199 = vmatprep.subr.mxu0 0.0
    %200 = vmatpush1.msra.mxu0 0.0
    %201 = vmatprep.subr.mxu0 0.0
    %202 = vmatpush1.msra.mxu0 0.0
    %203 = vmatprep.subr.mxu0 0.0
    %204 = vmatpush1.msra.mxu0 0.0
    %205 = vmatprep.subr.mxu0 0.0
    %206 = vmatpush1.msra.mxu0 0.0
    %207 = vmatprep.subr.mxu0 0.0
    %208 = vmatpush1.msra.mxu0 0.0
    %209 = vmatprep.subr.mxu0 0.0
    %210 = vmatpush1.msra.mxu0 0.0
    %211 = vmatprep.subr.mxu0 0.0
    %212 = vmatpush1.msra.mxu0 0.0
    %213 = vmatprep.subr.mxu0 0.0
    %214 = vmatpush1.msra.mxu0 0.0
    %215 = vmatprep.subr.mxu0 0.0
    %216 = vmatpush1.msra.mxu0 0.0
    %217 = vmatprep.subr.mxu0 0.0
    %218 = vmatpush1.msra.mxu0 0.0
    %219 = vmatprep.subr.mxu0 0.0
    %220 = vmatpush1.msra.mxu0 0.0
    %221 = vmatprep.subr.mxu0 0.0
    %222 = vmatpush1.msra.mxu0 0.0
    %223 = vmatprep.subr.mxu0 0.0
    %224 = vmatpush1.msra.mxu0 0.0
    %225 = vmatprep.subr.mxu0 0.0
    %226 = vmatpush1.msra.mxu0 0.0
    %227 = vmatprep.subr.mxu0 0.0
    %228 = vmatpush1.msra.mxu0 0.0
    %229 = vmatprep.subr.mxu0 0.0
    %230 = vmatpush1.msra.mxu0 0.0
    %231 = vmatprep.subr.mxu0 0.0
    %232 = vmatpush1.msra.mxu0 0.0
    %233 = vmatprep.subr.mxu0 0.0
    %234 = vmatpush1.msra.mxu0 0.0
    %235 = vmatprep.subr.mxu0 0.0
    %236 = vmatpush1.msra.mxu0 0.0
    %237 = vmatprep.subr.mxu0 0.0
    %238 = vmatpush1.msra.mxu0 0.0
    %239 = vmatprep.subr.mxu0 0.0
    %240 = vmatpush1.msra.mxu0 0.0
    %241 = vmatprep.subr.mxu0 0.0
    %242 = vmatpush1.msra.mxu0 0.0
    %243 = vmatprep.subr.mxu0 0.0
    %244 = vmatpush1.msra.mxu0 0.0
    %245 = vmatprep.subr.mxu0 0.0
    %246 = vmatpush1.msra.mxu0 0.0
    %247 = vmatprep.subr.mxu0 0.0
    %248 = vmatpush1.msra.mxu0 0.0
    %249 = vmatprep.subr.mxu0 0.0
    %250 = vmatpush1.msra.mxu0 0.0
    %251 = vmatprep.subr.mxu0 0.0
    %252 = vmatpush1.msra.mxu0 0.0
    %253 = vmatprep.mubr.f32.mxu0 0.0
    %v254 = vand.u32 %v44, 4294901760
    %255 = vmatmul.mubr.f32.gmra.mrb[0].mxu0 %v254
    %v256 = vpop.f32.mrb[0].mxu0
    %v257 = vadd.f32 %v136, %v256
    %v258 = vpop.f32.mrb[0].mxu0
    %259 = vmatprep.mubr.f32.mxu0 0.0
    %v260 = vand.u32 %v47, 4294901760
    %261 = vmatmul.mubr.f32.gmra.mrb[0].mxu0 %v260
    %v262 = vpop.f32.mrb[0].mxu0
    %v263 = vadd.f32 %v146, %v262
    %v264 = vpop.f32.mrb[0].mxu0
    %265 = vmatprep.mubr.f32.mxu0 0.0
    %v266 = vand.u32 %v50, 4294901760
    %267 = vmatmul.mubr.f32.gmra.mrb[0].mxu0 %v266
    %v268 = vpop.f32.mrb[0].mxu0
    %v269 = vadd.f32 %v156, %v268
    %v270 = vpop.f32.mrb[0].mxu0
    %271 = vmatprep.mubr.f32.mxu0 0.0
    %v272 = vand.u32 %v53, 4294901760
    %273 = vmatmul.mubr.f32.gmra.mrb[0].mxu0 %v272
    %v274 = vpop.f32.mrb[0].mxu0
    %v275 = vadd.f32 %v166, %v274
    %v276 = vpop.f32.mrb[0].mxu0
    %277 = vmatprep.mubr.f32.mxu0 0.0
    %v278 = vand.u32 %v56, 4294901760
    %279 = vmatmul.mubr.f32.gmra.mrb[0].mxu0 %v278
    %v280 = vpop.f32.mrb[0].mxu0
    %v281 = vadd.f32 %v176, %v280
    %v282 = vpop.f32.mrb[0].mxu0
    %283 = vdwg.mxu0
    %284 = vmatprep.subr.mxu0 0.0
    %v285 = vand.u32 %v40, 4294901760
    %v286 = vsub.f32 %v40, %v285
    %287 = vmatpush1.msra.mxu0 %v286
    %288 = vmatprep.subr.mxu0 0.0
    %v289 = vand.u32 %v60, 4294901760
    %v290 = vsub.f32 %v60, %v289
    %291 = vmatpush1.msra.mxu0 %v290
    %292 = vmatprep.subr.mxu0 0.0
    %293 = vmatpush1.msra.mxu0 0.0
    %294 = vmatprep.subr.mxu0 0.0
    %295 = vmatpush1.msra.mxu0 0.0
    %296 = vmatprep.subr.mxu0 0.0
    %297 = vmatpush1.msra.mxu0 0.0
    %298 = vmatprep.subr.mxu0 0.0
    %299 = vmatpush1.msra.mxu0 0.0
    %300 = vmatprep.subr.mxu0 0.0
    %301 = vmatpush1.msra.mxu0 0.0
    %302 = vmatprep.subr.mxu0 0.0
    %303 = vmatpush1.msra.mxu0 0.0
    %304 = vmatprep.subr.mxu0 0.0
    %305 = vmatpush1.msra.mxu0 0.0
    %306 = vmatprep.subr.mxu0 0.0
    %307 = vmatpush1.msra.mxu0 0.0
    %308 = vmatprep.subr.mxu0 0.0
    %309 = vmatpush1.msra.mxu0 0.0
    %310 = vmatprep.subr.mxu0 0.0
    %311 = vmatpush1.msra.mxu0 0.0
    %312 = vmatprep.subr.mxu0 0.0
    %313 = vmatpush1.msra.mxu0 0.0
    %314 = vmatprep.subr.mxu0 0.0
    %315 = vmatpush1.msra.mxu0 0.0
    %316 = vmatprep.subr.mxu0 0.0
    %317 = vmatpush1.msra.mxu0 0.0
    %318 = vmatprep.subr.mxu0 0.0
    %319 = vmatpush1.msra.mxu0 0.0
    %320 = vmatprep.subr.mxu0 0.0
    %321 = vmatpush1.msra.mxu0 0.0
    %322 = vmatprep.subr.mxu0 0.0
    %323 = vmatpush1.msra.mxu0 0.0
    %324 = vmatprep.subr.mxu0 0.0
    %325 = vmatpush1.msra.mxu0 0.0
    %326 = vmatprep.subr.mxu0 0.0
    %327 = vmatpush1.msra.mxu0 0.0
    %328 = vmatprep.subr.mxu0 0.0
    %329 = vmatpush1.msra.mxu0 0.0
    %330 = vmatprep.subr.mxu0 0.0
    %331 = vmatpush1.msra.mxu0 0.0
    %332 = vmatprep.subr.mxu0 0.0
    %333 = vmatpush1.msra.mxu0 0.0
    %334 = vmatprep.subr.mxu0 0.0
    %335 = vmatpush1.msra.mxu0 0.0
    %336 = vmatprep.subr.mxu0 0.0
    %337 = vmatpush1.msra.mxu0 0.0
    %338 = vmatprep.subr.mxu0 0.0
    %339 = vmatpush1.msra.mxu0 0.0
    %340 = vmatprep.subr.mxu0 0.0
    %341 = vmatpush1.msra.mxu0 0.0
    %342 = vmatprep.subr.mxu0 0.0
    %343 = vmatpush1.msra.mxu0 0.0
    %344 = vmatprep.subr.mxu0 0.0
    %345 = vmatpush1.msra.mxu0 0.0
    %346 = vmatprep.subr.mxu0 0.0
    %347 = vmatpush1.msra.mxu0 0.0
    %348 = vmatprep.subr.mxu0 0.0
    %349 = vmatpush1.msra.mxu0 0.0
    %350 = vmatprep.subr.mxu0 0.0
    %351 = vmatpush1.msra.mxu0 0.0
    %352 = vmatprep.mubr.f32.mxu0 0.0
    %v353 = vand.u32 %v44, 4294901760
    %v354 = vsub.f32 %v44, %v353
    %355 = vmatmul.mubr.f32.gmra.mrb[0].mxu0 %v354
    %v356 = vpop.f32.mrb[0].mxu0
    %v357 = vadd.f32 %v257, %v356
    %v358 = vpop.f32.mrb[0].mxu0
    %359 = vmatprep.mubr.f32.mxu0 0.0
    %v360 = vand.u32 %v47, 4294901760
    %v361 = vsub.f32 %v47, %v360
    %362 = vmatmul.mubr.f32.gmra.mrb[0].mxu0 %v361
    %v363 = vpop.f32.mrb[0].mxu0
    %v364 = vadd.f32 %v263, %v363
    %v365 = vpop.f32.mrb[0].mxu0
    %366 = vmatprep.mubr.f32.mxu0 0.0
    %v367 = vand.u32 %v50, 4294901760
    %v368 = vsub.f32 %v50, %v367
    %369 = vmatmul.mubr.f32.gmra.mrb[0].mxu0 %v368
    %v370 = vpop.f32.mrb[0].mxu0
    %v371 = vadd.f32 %v269, %v370
    %v372 = vpop.f32.mrb[0].mxu0
    %373 = vmatprep.mubr.f32.mxu0 0.0
    %v374 = vand.u32 %v53, 4294901760
    %v375 = vsub.f32 %v53, %v374
    %376 = vmatmul.mubr.f32.gmra.mrb[0].mxu0 %v375
    %v377 = vpop.f32.mrb[0].mxu0
    %v378 = vadd.f32 %v275, %v377
    %v379 = vpop.f32.mrb[0].mxu0
    %380 = vmatprep.mubr.f32.mxu0 0.0
    %v381 = vand.u32 %v56, 4294901760
    %v382 = vsub.f32 %v56, %v381
    %383 = vmatmul.mubr.f32.gmra.mrb[0].mxu0 %v382
    %v384 = vpop.f32.mrb[0].mxu0
    %v385 = vadd.f32 %v281, %v384
    %v386 = vpop.f32.mrb[0].mxu0
    %387 = vdwg.mxu0
    %388 = vmatprep.subr.mxu0 0.0
    %v389 = vand.u32 %v40, 4294901760
    %390 = vmatpush1.msra.mxu0 %v389
    %391 = vmatprep.subr.mxu0 0.0
    %v392 = vand.u32 %v60, 4294901760
    %393 = vmatpush1.msra.mxu0 %v392
    %394 = vmatprep.subr.mxu0 0.0
    %395 = vmatpush1.msra.mxu0 0.0
    %396 = vmatprep.subr.mxu0 0.0
    %397 = vmatpush1.msra.mxu0 0.0
    %398 = vmatprep.subr.mxu0 0.0
    %399 = vmatpush1.msra.mxu0 0.0
    %400 = vmatprep.subr.mxu0 0.0
    %401 = vmatpush1.msra.mxu0 0.0
    %402 = vmatprep.subr.mxu0 0.0
    %403 = vmatpush1.msra.mxu0 0.0
    %404 = vmatprep.subr.mxu0 0.0
    %405 = vmatpush1.msra.mxu0 0.0
    %406 = vmatprep.subr.mxu0 0.0
    %407 = vmatpush1.msra.mxu0 0.0
    %408 = vmatprep.subr.mxu0 0.0
    %409 = vmatpush1.msra.mxu0 0.0
    %410 = vmatprep.subr.mxu0 0.0
    %411 = vmatpush1.msra.mxu0 0.0
    %412 = vmatprep.subr.mxu0 0.0
    %413 = vmatpush1.msra.mxu0 0.0
    %414 = vmatprep.subr.mxu0 0.0
    %415 = vmatpush1.msra.mxu0 0.0
    %416 = vmatprep.subr.mxu0 0.0
    %417 = vmatpush1.msra.mxu0 0.0
    %418 = vmatprep.subr.mxu0 0.0
    %419 = vmatpush1.msra.mxu0 0.0
    %420 = vmatprep.subr.mxu0 0.0
    %421 = vmatpush1.msra.mxu0 0.0
    %422 = vmatprep.subr.mxu0 0.0
    %423 = vmatpush1.msra.mxu0 0.0
    %424 = vmatprep.subr.mxu0 0.0
    %425 = vmatpush1.msra.mxu0 0.0
    %426 = vmatprep.subr.mxu0 0.0
    %427 = vmatpush1.msra.mxu0 0.0
    %428 = vmatprep.subr.mxu0 0.0
    %429 = vmatpush1.msra.mxu0 0.0
    %430 = vmatprep.subr.mxu0 0.0
    %431 = vmatpush1.msra.mxu0 0.0
    %432 = vmatprep.subr.mxu0 0.0
    %433 = vmatpush1.msra.mxu0 0.0
    %434 = vmatprep.subr.mxu0 0.0
    %435 = vmatpush1.msra.mxu0 0.0
    %436 = vmatprep.subr.mxu0 0.0
    %437 = vmatpush1.msra.mxu0 0.0
    %438 = vmatprep.subr.mxu0 0.0
    %439 = vmatpush1.msra.mxu0 0.0
    %440 = vmatprep.subr.mxu0 0.0
    %441 = vmatpush1.msra.mxu0 0.0
    %442 = vmatprep.subr.mxu0 0.0
    %443 = vmatpush1.msra.mxu0 0.0
    %444 = vmatprep.subr.mxu0 0.0
    %445 = vmatpush1.msra.mxu0 0.0
    %446 = vmatprep.subr.mxu0 0.0
    %447 = vmatpush1.msra.mxu0 0.0
    %448 = vmatprep.subr.mxu0 0.0
    %449 = vmatpush1.msra.mxu0 0.0
    %450 = vmatprep.subr.mxu0 0.0
    %451 = vmatpush1.msra.mxu0 0.0
    %452 = vmatprep.subr.mxu0 0.0
    %453 = vmatpush1.msra.mxu0 0.0
    %454 = vmatprep.mubr.f32.mxu0 0.0
    %v455 = vand.u32 %v44, 4294901760
    %v456 = vsub.f32 %v44, %v455
    %v457 = vand.u32 %v456, 4294901760
    %458 = vmatmul.mubr.f32.gmra.mrb[0].mxu0 %v457
    %v459 = vpop.f32.mrb[0].mxu0
    %v460 = vadd.f32 %v357, %v459
    %v461 = vpop.f32.mrb[0].mxu0
    %462 = vmatprep.mubr.f32.mxu0 0.0
    %v463 = vand.u32 %v47, 4294901760
    %v464 = vsub.f32 %v47, %v463
    %v465 = vand.u32 %v464, 4294901760
    %466 = vmatmul.mubr.f32.gmra.mrb[0].mxu0 %v465
    %v467 = vpop.f32.mrb[0].mxu0
    %v468 = vadd.f32 %v364, %v467
    %v469 = vpop.f32.mrb[0].mxu0
    %470 = vmatprep.mubr.f32.mxu0 0.0
    %v471 = vand.u32 %v50, 4294901760
    %v472 = vsub.f32 %v50, %v471
    %v473 = vand.u32 %v472, 4294901760
    %474 = vmatmul.mubr.f32.gmra.mrb[0].mxu0 %v473
    %v475 = vpop.f32.mrb[0].mxu0
    %v476 = vadd.f32 %v371, %v475
    %v477 = vpop.f32.mrb[0].mxu0
    %478 = vmatprep.mubr.f32.mxu0 0.0
    %v479 = vand.u32 %v53, 4294901760
    %v480 = vsub.f32 %v53, %v479
    %v481 = vand.u32 %v480, 4294901760
    %482 = vmatmul.mubr.f32.gmra.mrb[0].mxu0 %v481
    %v483 = vpop.f32.mrb[0].mxu0
    %v484 = vadd.f32 %v378, %v483
    %v485 = vpop.f32.mrb[0].mxu0
    %486 = vmatprep.mubr.f32.mxu0 0.0
    %v487 = vand.u32 %v56, 4294901760
    %v488 = vsub.f32 %v56, %v487
    %v489 = vand.u32 %v488, 4294901760
    %490 = vmatmul.mubr.f32.gmra.mrb[0].mxu0 %v489
    %v491 = vpop.f32.mrb[0].mxu0
    %v492 = vadd.f32 %v385, %v491
    %v493 = vpop.f32.mrb[0].mxu0
    %494 = vdwg.mxu0
    %495 = vmatprep.subr.mxu0 0.0
    %v496 = vand.u32 %v40, 4294901760
    %v497 = vsub.f32 %v40, %v496
    %v498 = vand.u32 %v497, 4294901760
    %499 = vmatpush1.msra.mxu0 %v498
    %500 = vmatprep.subr.mxu0 0.0
    %v501 = vand.u32 %v60, 4294901760
    %v502 = vsub.f32 %v60, %v501
    %v503 = vand.u32 %v502, 4294901760
    %504 = vmatpush1.msra.mxu0 %v503
    %505 = vmatprep.subr.mxu0 0.0
    %506 = vmatpush1.msra.mxu0 0.0
    %507 = vmatprep.subr.mxu0 0.0
    %508 = vmatpush1.msra.mxu0 0.0
    %509 = vmatprep.subr.mxu0 0.0
    %510 = vmatpush1.msra.mxu0 0.0
    %511 = vmatprep.subr.mxu0 0.0
    %512 = vmatpush1.msra.mxu0 0.0
    %513 = vmatprep.subr.mxu0 0.0
    %514 = vmatpush1.msra.mxu0 0.0
    %515 = vmatprep.subr.mxu0 0.0
    %516 = vmatpush1.msra.mxu0 0.0
    %517 = vmatprep.subr.mxu0 0.0
    %518 = vmatpush1.msra.mxu0 0.0
    %519 = vmatprep.subr.mxu0 0.0
    %520 = vmatpush1.msra.mxu0 0.0
    %521 = vmatprep.subr.mxu0 0.0
    %522 = vmatpush1.msra.mxu0 0.0
    %523 = vmatprep.subr.mxu0 0.0
    %524 = vmatpush1.msra.mxu0 0.0
    %525 = vmatprep.subr.mxu0 0.0
    %526 = vmatpush1.msra.mxu0 0.0
    %527 = vmatprep.subr.mxu0 0.0
    %528 = vmatpush1.msra.mxu0 0.0
    %529 = vmatprep.subr.mxu0 0.0
    %530 = vmatpush1.msra.mxu0 0.0
    %531 = vmatprep.subr.mxu0 0.0
    %532 = vmatpush1.msra.mxu0 0.0
    %533 = vmatprep.subr.mxu0 0.0
    %534 = vmatpush1.msra.mxu0 0.0
    %535 = vmatprep.subr.mxu0 0.0
    %536 = vmatpush1.msra.mxu0 0.0
    %537 = vmatprep.subr.mxu0 0.0
    %538 = vmatpush1.msra.mxu0 0.0
    %539 = vmatprep.subr.mxu0 0.0
    %540 = vmatpush1.msra.mxu0 0.0
    %541 = vmatprep.subr.mxu0 0.0
    %542 = vmatpush1.msra.mxu0 0.0
    %543 = vmatprep.subr.mxu0 0.0
    %544 = vmatpush1.msra.mxu0 0.0
    %545 = vmatprep.subr.mxu0 0.0
    %546 = vmatpush1.msra.mxu0 0.0
    %547 = vmatprep.subr.mxu0 0.0
    %548 = vmatpush1.msra.mxu0 0.0
    %549 = vmatprep.subr.mxu0 0.0
    %550 = vmatpush1.msra.mxu0 0.0
    %551 = vmatprep.subr.mxu0 0.0
    %552 = vmatpush1.msra.mxu0 0.0
    %553 = vmatprep.subr.mxu0 0.0
    %554 = vmatpush1.msra.mxu0 0.0
    %555 = vmatprep.subr.mxu0 0.0
    %556 = vmatpush1.msra.mxu0 0.0
    %557 = vmatprep.subr.mxu0 0.0
    %558 = vmatpush1.msra.mxu0 0.0
    %559 = vmatprep.subr.mxu0 0.0
    %560 = vmatpush1.msra.mxu0 0.0
    %561 = vmatprep.subr.mxu0 0.0
    %562 = vmatpush1.msra.mxu0 0.0
    %563 = vmatprep.subr.mxu0 0.0
    %564 = vmatpush1.msra.mxu0 0.0
    %565 = vmatprep.mubr.f32.mxu0 0.0
    %v566 = vand.u32 %v44, 4294901760
    %567 = vmatmul.mubr.f32.gmra.mrb[0].mxu0 %v566
    %v568 = vpop.f32.mrb[0].mxu0
    %v569 = vadd.f32 %v460, %v568
    %v570 = vpop.f32.mrb[0].mxu0
    %571 = vmatprep.mubr.f32.mxu0 0.0
    %v572 = vand.u32 %v47, 4294901760
    %573 = vmatmul.mubr.f32.gmra.mrb[0].mxu0 %v572
    %v574 = vpop.f32.mrb[0].mxu0
    %v575 = vadd.f32 %v468, %v574
    %v576 = vpop.f32.mrb[0].mxu0
    %577 = vmatprep.mubr.f32.mxu0 0.0
    %v578 = vand.u32 %v50, 4294901760
    %579 = vmatmul.mubr.f32.gmra.mrb[0].mxu0 %v578
    %v580 = vpop.f32.mrb[0].mxu0
    %v581 = vadd.f32 %v476, %v580
    %v582 = vpop.f32.mrb[0].mxu0
    %583 = vmatprep.mubr.f32.mxu0 0.0
    %v584 = vand.u32 %v53, 4294901760
    %585 = vmatmul.mubr.f32.gmra.mrb[0].mxu0 %v584
    %v586 = vpop.f32.mrb[0].mxu0
    %v587 = vadd.f32 %v484, %v586
    %v588 = vpop.f32.mrb[0].mxu0
    %589 = vmatprep.mubr.f32.mxu0 0.0
    %v590 = vand.u32 %v56, 4294901760
    %591 = vmatmul.mubr.f32.gmra.mrb[0].mxu0 %v590
    %v592 = vpop.f32.mrb[0].mxu0
    %v593 = vadd.f32 %v492, %v592
    %v594 = vpop.f32.mrb[0].mxu0
    %595 = vdwg.mxu0
    %596 = vmatprep.subr.mxu0 0.0
    %v597 = vand.u32 %v40, 4294901760
    %598 = vmatpush1.msra.mxu0 %v597
    %599 = vmatprep.subr.mxu0 0.0
    %v600 = vand.u32 %v60, 4294901760
    %601 = vmatpush1.msra.mxu0 %v600
    %602 = vmatprep.subr.mxu0 0.0
    %603 = vmatpush1.msra.mxu0 0.0
    %604 = vmatprep.subr.mxu0 0.0
    %605 = vmatpush1.msra.mxu0 0.0
    %606 = vmatprep.subr.mxu0 0.0
    %607 = vmatpush1.msra.mxu0 0.0
    %608 = vmatprep.subr.mxu0 0.0
    %609 = vmatpush1.msra.mxu0 0.0
    %610 = vmatprep.subr.mxu0 0.0
    %611 = vmatpush1.msra.mxu0 0.0
    %612 = vmatprep.subr.mxu0 0.0
    %613 = vmatpush1.msra.mxu0 0.0
    %614 = vmatprep.subr.mxu0 0.0
    %615 = vmatpush1.msra.mxu0 0.0
    %616 = vmatprep.subr.mxu0 0.0
    %617 = vmatpush1.msra.mxu0 0.0
    %618 = vmatprep.subr.mxu0 0.0
    %619 = vmatpush1.msra.mxu0 0.0
    %620 = vmatprep.subr.mxu0 0.0
    %621 = vmatpush1.msra.mxu0 0.0
    %622 = vmatprep.subr.mxu0 0.0
    %623 = vmatpush1.msra.mxu0 0.0
    %624 = vmatprep.subr.mxu0 0.0
    %625 = vmatpush1.msra.mxu0 0.0
    %626 = vmatprep.subr.mxu0 0.0
    %627 = vmatpush1.msra.mxu0 0.0
    %628 = vmatprep.subr.mxu0 0.0
    %629 = vmatpush1.msra.mxu0 0.0
    %630 = vmatprep.subr.mxu0 0.0
    %631 = vmatpush1.msra.mxu0 0.0
    %632 = vmatprep.subr.mxu0 0.0
    %633 = vmatpush1.msra.mxu0 0.0
    %634 = vmatprep.subr.mxu0 0.0
    %635 = vmatpush1.msra.mxu0 0.0
    %636 = vmatprep.subr.mxu0 0.0
    %637 = vmatpush1.msra.mxu0 0.0
    %638 = vmatprep.subr.mxu0 0.0
    %639 = vmatpush1.msra.mxu0 0.0
    %640 = vmatprep.subr.mxu0 0.0
    %641 = vmatpush1.msra.mxu0 0.0
    %642 = vmatprep.subr.mxu0 0.0
    %643 = vmatpush1.msra.mxu0 0.0
    %644 = vmatprep.subr.mxu0 0.0
    %645 = vmatpush1.msra.mxu0 0.0
    %646 = vmatprep.subr.mxu0 0.0
    %647 = vmatpush1.msra.mxu0 0.0
    %648 = vmatprep.subr.mxu0 0.0
    %649 = vmatpush1.msra.mxu0 0.0
    %650 = vmatprep.subr.mxu0 0.0
    %651 = vmatpush1.msra.mxu0 0.0
    %652 = vmatprep.subr.mxu0 0.0
    %653 = vmatpush1.msra.mxu0 0.0
    %654 = vmatprep.subr.mxu0 0.0
    %655 = vmatpush1.msra.mxu0 0.0
    %656 = vmatprep.subr.mxu0 0.0
    %657 = vmatpush1.msra.mxu0 0.0
    %658 = vmatprep.subr.mxu0 0.0
    %659 = vmatpush1.msra.mxu0 0.0
    %660 = vmatprep.subr.mxu0 0.0
    %661 = vmatpush1.msra.mxu0 0.0
    %662 = vmatprep.mubr.f32.mxu0 0.0
    %v663 = vand.u32 %v44, 4294901760
    %664 = vmatmul.mubr.f32.gmra.mrb[0].mxu0 %v663
    %v665 = vpop.f32.mrb[0].mxu0
    %v666 = vadd.f32 %v569, %v665
    %v667 = vpop.f32.mrb[0].mxu0
    %668 = vmatprep.mubr.f32.mxu0 0.0
    %v669 = vand.u32 %v47, 4294901760
    %670 = vmatmul.mubr.f32.gmra.mrb[0].mxu0 %v669
    %v671 = vpop.f32.mrb[0].mxu0
    %v672 = vadd.f32 %v575, %v671
    %v673 = vpop.f32.mrb[0].mxu0
    %674 = vmatprep.mubr.f32.mxu0 0.0
    %v675 = vand.u32 %v50, 4294901760
    %676 = vmatmul.mubr.f32.gmra.mrb[0].mxu0 %v675
    %v677 = vpop.f32.mrb[0].mxu0
    %v678 = vadd.f32 %v581, %v677
    %v679 = vpop.f32.mrb[0].mxu0
    %680 = vmatprep.mubr.f32.mxu0 0.0
    %v681 = vand.u32 %v53, 4294901760
    %682 = vmatmul.mubr.f32.gmra.mrb[0].mxu0 %v681
    %v683 = vpop.f32.mrb[0].mxu0
    %v684 = vadd.f32 %v587, %v683
    %v685 = vpop.f32.mrb[0].mxu0
    %686 = vmatprep.mubr.f32.mxu0 0.0
    %v687 = vand.u32 %v56, 4294901760
    %688 = vmatmul.mubr.f32.gmra.mrb[0].mxu0 %v687
    %v689 = vpop.f32.mrb[0].mxu0
    %v690 = vadd.f32 %v593, %v689
    %v691 = vpop.f32.mrb[0].mxu0
    %692 = vdwg.mxu0
    %v693 = vmax.f32 %v666, 0.0
    %v694 = vmax.f32 %v672, 0.0
    %v695 = vmax.f32 %v678, 0.0
    %v696 = vmax.f32 %v684, 0.0
    %v697 = vmax.f32 %v690, 0.0
    %v698 = vlaneseq
    %v699 = vshrl.u32 %v698, 7
    %v700 = vadd.s32 %v699, 8
    %v701 = vadd.s32 %v699, 16
    %v702 = vadd.s32 %v699, 24
    %v703 = vadd.s32 %v699, 32
    %vm704 = vcmp.ge.s32.totalorder %v699, 2
    %vm705 = vcmp.ge.s32.totalorder %v700, 2
    %vm706 = vcmp.ge.s32.totalorder %v701, 2
    %vm707 = vcmp.ge.s32.totalorder %v702, 2
    %vm708 = vcmp.ge.s32.totalorder %v703, 2
    %vm709 = vcmp.lt.s32.totalorder %v699, 34
    %vm710 = vcmp.lt.s32.totalorder %v700, 34
    %vm711 = vcmp.lt.s32.totalorder %v701, 34
    %vm712 = vcmp.lt.s32.totalorder %v702, 34
    %vm713 = vcmp.lt.s32.totalorder %v703, 34
    %vm714 = vmand %vm704, %vm709
    %vm715 = vmand %vm705, %vm710
    %vm716 = vmand %vm706, %vm711
    %vm717 = vmand %vm707, %vm712
    %vm718 = vmand %vm708, %vm713
    %v719 = vsel %vm714, %v693, -inf
    %v720 = vsel %vm715, %v694, -inf
    %v721 = vsel %vm716, %v695, -inf
    %v722 = vsel %vm717, %v696, -inf
    %v723 = vsel %vm718, %v697, -inf
    %vm729 = vcmask 1045504
    %v730 = vrot.slane %v719, 2
    %v731 = vrot.slane %v720, 2
    %v732 = vsel %vm729, %v730, %v731
    %v733 = vrot.slane %v721, 2
    %v734 = vsel %vm729, %v731, %v733
    %v735 = vrot.slane %v722, 2
    %v736 = vsel %vm729, %v733, %v735
    %v737 = vrot.slane %v723, 2
    %v738 = vsel %vm729, %v735, %v737
    %v743 = vmax.f32 %v719, %v732
    %v744 = vmax.f32 %v720, %v734
    %v745 = vmax.f32 %v721, %v736
    %v746 = vmax.f32 %v722, %v738
    %vm747 = vcmask 1043456
    %v748 = vrot.slane %v719, 4
    %v749 = vrot.slane %v720, 4
    %v750 = vsel %vm747, %v748, %v749
    %v751 = vrot.slane %v721, 4
    %v752 = vsel %vm747, %v749, %v751
    %v753 = vrot.slane %v722, 4
    %v754 = vsel %vm747, %v751, %v753
    %v755 = vrot.slane %v723, 4
    %v756 = vsel %vm747, %v753, %v755
    %v761 = vmax.f32 %v743, %v750
    %v762 = vmax.f32 %v744, %v752
    %v763 = vmax.f32 %v745, %v754
    %v764 = vmax.f32 %v746, %v756
    %v765 = vld [vmem:[%s4] sm:$0x1]
    %v766 = vld [vmem:[#allocation4] sm:$0xff]
    %v767 = vld [vmem:[#allocation4 + $0x8] sm:$0xff]
    %v768 = vld [vmem:[#allocation4 + $0x10] sm:$0xff]
    %v769 = vld [vmem:[#allocation4 + $0x18] sm:$0xff]
    %v770 = vld [vmem:[#allocation4 + $0x20] sm:$0xff]
    %v771 = vpack.c.bf16 %v768, %v767
    %v772 = vpack.c.bf16 %v770, %v769
    %v773 = vld [vmem:[#allocation4 + $0x28] sm:$0x1]
    %v774 = vlaneseq
    %v775 = vshrl.u32 %v774, 7
    %v776 = vsub.s32 0, %v775
    %v777 = vrot.slane %v773, %v776
    %vm778 = vcmask 64512
    %v780 = vsel %vm778, %v761, 0
    %v783 = vsel %vm778, %v762, 0
    %v786 = vsel %vm778, %v763, 0
    %v789 = vsel %vm778, %v764, 0
    %791 = vmatprep.subr.mxu0 0.0
    %v792 = vand.u32 %v766, 4294901760
    %793 = vmatpush1.msra.mxu0 %v792
    %794 = vmatprep.subr.mxu0 0.0
    %795 = vmatpush1.msra.mxu0 0.0
    %796 = vmatprep.subr.mxu0 0.0
    %797 = vmatpush1.msra.mxu0 0.0
    %798 = vmatprep.subr.mxu0 0.0
    %799 = vmatpush1.msra.mxu0 0.0
    %800 = vmatprep.subr.mxu0 0.0
    %801 = vmatpush1.msra.mxu0 0.0
    %802 = vmatprep.subr.mxu0 0.0
    %803 = vmatpush1.msra.mxu0 0.0
    %804 = vmatprep.subr.mxu0 0.0
    %805 = vmatpush1.msra.mxu0 0.0
    %806 = vmatprep.subr.mxu0 0.0
    %807 = vmatpush1.msra.mxu0 0.0
    %808 = vmatprep.subr.mxu0 0.0
    %809 = vmatpush1.msra.mxu0 0.0
    %810 = vmatprep.subr.mxu0 0.0
    %811 = vmatpush1.msra.mxu0 0.0
    %812 = vmatprep.subr.mxu0 0.0
    %813 = vmatpush1.msra.mxu0 0.0
    %814 = vmatprep.subr.mxu0 0.0
    %815 = vmatpush1.msra.mxu0 0.0
    %816 = vmatprep.subr.mxu0 0.0
    %817 = vmatpush1.msra.mxu0 0.0
    %818 = vmatprep.subr.mxu0 0.0
    %819 = vmatpush1.msra.mxu0 0.0
    %820 = vmatprep.subr.mxu0 0.0
    %821 = vmatpush1.msra.mxu0 0.0
    %822 = vmatprep.subr.mxu0 0.0
    %823 = vmatpush1.msra.mxu0 0.0
    %824 = vmatprep.subr.mxu0 0.0
    %825 = vmatpush1.msra.mxu0 0.0
    %826 = vmatprep.subr.mxu0 0.0
    %827 = vmatpush1.msra.mxu0 0.0
    %828 = vmatprep.subr.mxu0 0.0
    %829 = vmatpush1.msra.mxu0 0.0
    %830 = vmatprep.subr.mxu0 0.0
    %831 = vmatpush1.msra.mxu0 0.0
    %832 = vmatprep.subr.mxu0 0.0
    %833 = vmatpush1.msra.mxu0 0.0
    %834 = vmatprep.subr.mxu0 0.0
    %835 = vmatpush1.msra.mxu0 0.0
    %836 = vmatprep.subr.mxu0 0.0
    %837 = vmatpush1.msra.mxu0 0.0
    %838 = vmatprep.subr.mxu0 0.0
    %839 = vmatpush1.msra.mxu0 0.0
    %840 = vmatprep.subr.mxu0 0.0
    %841 = vmatpush1.msra.mxu0 0.0
    %842 = vmatprep.subr.mxu0 0.0
    %843 = vmatpush1.msra.mxu0 0.0
    %844 = vmatprep.subr.mxu0 0.0
    %845 = vmatpush1.msra.mxu0 0.0
    %846 = vmatprep.subr.mxu0 0.0
    %847 = vmatpush1.msra.mxu0 0.0
    %848 = vmatprep.subr.mxu0 0.0
    %849 = vmatpush1.msra.mxu0 0.0
    %850 = vmatprep.subr.mxu0 0.0
    %851 = vmatpush1.msra.mxu0 0.0
    %852 = vmatprep.subr.mxu0 0.0
    %853 = vmatpush1.msra.mxu0 0.0
    %854 = vmatprep.subr.mxu0 0.0
    %855 = vmatpush1.msra.mxu0 0.0
    %856 = vmatprep.mubr.f32.mxu0 0.0
    %v857 = vand.u32 %v780, 4294901760
    %v858 = vsub.f32 %v780, %v857
    %v859 = vand.u32 %v858, 4294901760
    %v860 = vsub.f32 %v858, %v859
    %v861 = vand.u32 %v860, 4294901760
    %862 = vmatmul.mubr.f32.gmra.mrb[0].mxu0 %v861
    %v863 = vpop.f32.mrb[0].mxu0
    %v864 = vadd.f32 %v777, %v863
    %v865 = vpop.f32.mrb[0].mxu0
    %866 = vmatprep.mubr.f32.mxu0 0.0
    %v867 = vand.u32 %v783, 4294901760
    %v868 = vsub.f32 %v783, %v867
    %v869 = vand.u32 %v868, 4294901760
    %v870 = vsub.f32 %v868, %v869
    %v871 = vand.u32 %v870, 4294901760
    %872 = vmatmul.mubr.f32.gmra.mrb[0].mxu0 %v871
    %v873 = vpop.f32.mrb[0].mxu0
    %v874 = vadd.f32 %v777, %v873
    %v875 = vpop.f32.mrb[0].mxu0
    %876 = vmatprep.mubr.f32.mxu0 0.0
    %v877 = vand.u32 %v786, 4294901760
    %v878 = vsub.f32 %v786, %v877
    %v879 = vand.u32 %v878, 4294901760
    %v880 = vsub.f32 %v878, %v879
    %v881 = vand.u32 %v880, 4294901760
    %882 = vmatmul.mubr.f32.gmra.mrb[0].mxu0 %v881
    %v883 = vpop.f32.mrb[0].mxu0
    %v884 = vadd.f32 %v777, %v883
    %v885 = vpop.f32.mrb[0].mxu0
    %886 = vmatprep.mubr.f32.mxu0 0.0
    %v887 = vand.u32 %v789, 4294901760
    %v888 = vsub.f32 %v789, %v887
    %v889 = vand.u32 %v888, 4294901760
    %v890 = vsub.f32 %v888, %v889
    %v891 = vand.u32 %v890, 4294901760
    %892 = vmatmul.mubr.f32.gmra.mrb[0].mxu0 %v891
    %v893 = vpop.f32.mrb[0].mxu0
    %v894 = vadd.f32 %v777, %v893
    %v895 = vpop.f32.mrb[0].mxu0
    %896 = vdwg.mxu0
    %897 = vmatprep.subr.mxu0 0.0
    %v898 = vand.u32 %v766, 4294901760
    %v899 = vsub.f32 %v766, %v898
    %v900 = vand.u32 %v899, 4294901760
    %v901 = vsub.f32 %v899, %v900
    %v902 = vand.u32 %v901, 4294901760
    %903 = vmatpush1.msra.mxu0 %v902
    %904 = vmatprep.subr.mxu0 0.0
    %905 = vmatpush1.msra.mxu0 0.0
    %906 = vmatprep.subr.mxu0 0.0
    %907 = vmatpush1.msra.mxu0 0.0
    %908 = vmatprep.subr.mxu0 0.0
    %909 = vmatpush1.msra.mxu0 0.0
    %910 = vmatprep.subr.mxu0 0.0
    %911 = vmatpush1.msra.mxu0 0.0
    %912 = vmatprep.subr.mxu0 0.0
    %913 = vmatpush1.msra.mxu0 0.0
    %914 = vmatprep.subr.mxu0 0.0
    %915 = vmatpush1.msra.mxu0 0.0
    %916 = vmatprep.subr.mxu0 0.0
    %917 = vmatpush1.msra.mxu0 0.0
    %918 = vmatprep.subr.mxu0 0.0
    %919 = vmatpush1.msra.mxu0 0.0
    %920 = vmatprep.subr.mxu0 0.0
    %921 = vmatpush1.msra.mxu0 0.0
    %922 = vmatprep.subr.mxu0 0.0
    %923 = vmatpush1.msra.mxu0 0.0
    %924 = vmatprep.subr.mxu0 0.0
    %925 = vmatpush1.msra.mxu0 0.0
    %926 = vmatprep.subr.mxu0 0.0
    %927 = vmatpush1.msra.mxu0 0.0
    %928 = vmatprep.subr.mxu0 0.0
    %929 = vmatpush1.msra.mxu0 0.0
    %930 = vmatprep.subr.mxu0 0.0
    %931 = vmatpush1.msra.mxu0 0.0
    %932 = vmatprep.subr.mxu0 0.0
    %933 = vmatpush1.msra.mxu0 0.0
    %934 = vmatprep.subr.mxu0 0.0
    %935 = vmatpush1.msra.mxu0 0.0
    %936 = vmatprep.subr.mxu0 0.0
    %937 = vmatpush1.msra.mxu0 0.0
    %938 = vmatprep.subr.mxu0 0.0
    %939 = vmatpush1.msra.mxu0 0.0
    %940 = vmatprep.subr.mxu0 0.0
    %941 = vmatpush1.msra.mxu0 0.0
    %942 = vmatprep.subr.mxu0 0.0
    %943 = vmatpush1.msra.mxu0 0.0
    %944 = vmatprep.subr.mxu0 0.0
    %945 = vmatpush1.msra.mxu0 0.0
    %946 = vmatprep.subr.mxu0 0.0
    %947 = vmatpush1.msra.mxu0 0.0
    %948 = vmatprep.subr.mxu0 0.0
    %949 = vmatpush1.msra.mxu0 0.0
    %950 = vmatprep.subr.mxu0 0.0
    %951 = vmatpush1.msra.mxu0 0.0
    %952 = vmatprep.subr.mxu0 0.0
    %953 = vmatpush1.msra.mxu0 0.0
    %954 = vmatprep.subr.mxu0 0.0
    %955 = vmatpush1.msra.mxu0 0.0
    %956 = vmatprep.subr.mxu0 0.0
    %957 = vmatpush1.msra.mxu0 0.0
    %958 = vmatprep.subr.mxu0 0.0
    %959 = vmatpush1.msra.mxu0 0.0
    %960 = vmatprep.subr.mxu0 0.0
    %961 = vmatpush1.msra.mxu0 0.0
    %962 = vmatprep.subr.mxu0 0.0
    %963 = vmatpush1.msra.mxu0 0.0
    %964 = vmatprep.subr.mxu0 0.0
    %965 = vmatpush1.msra.mxu0 0.0
    %966 = vmatprep.mubr.f32.mxu0 0.0
    %v967 = vand.u32 %v780, 4294901760
    %968 = vmatmul.mubr.f32.gmra.mrb[0].mxu0 %v967
    %v969 = vpop.f32.mrb[0].mxu0
    %v970 = vadd.f32 %v864, %v969
    %v971 = vpop.f32.mrb[0].mxu0
    %972 = vmatprep.mubr.f32.mxu0 0.0
    %v973 = vand.u32 %v783, 4294901760
    %974 = vmatmul.mubr.f32.gmra.mrb[0].mxu0 %v973
    %v975 = vpop.f32.mrb[0].mxu0
    %v976 = vadd.f32 %v874, %v975
    %v977 = vpop.f32.mrb[0].mxu0
    %978 = vmatprep.mubr.f32.mxu0 0.0
    %v979 = vand.u32 %v786, 4294901760
    %980 = vmatmul.mubr.f32.gmra.mrb[0].mxu0 %v979
    %v981 = vpop.f32.mrb[0].mxu0
    %v982 = vadd.f32 %v884, %v981
    %v983 = vpop.f32.mrb[0].mxu0
    %984 = vmatprep.mubr.f32.mxu0 0.0
    %v985 = vand.u32 %v789, 4294901760
    %986 = vmatmul.mubr.f32.gmra.mrb[0].mxu0 %v985
    %v987 = vpop.f32.mrb[0].mxu0
    %v988 = vadd.f32 %v894, %v987
    %v989 = vpop.f32.mrb[0].mxu0
    %990 = vdwg.mxu0
    %991 = vmatprep.subr.mxu0 0.0
    %v992 = vand.u32 %v766, 4294901760
    %v993 = vsub.f32 %v766, %v992
    %994 = vmatpush1.msra.mxu0 %v993
    %995 = vmatprep.subr.mxu0 0.0
    %996 = vmatpush1.msra.mxu0 0.0
    %997 = vmatprep.subr.mxu0 0.0
    %998 = vmatpush1.msra.mxu0 0.0
    %999 = vmatprep.subr.mxu0 0.0
    %1000 = vmatpush1.msra.mxu0 0.0
    %1001 = vmatprep.subr.mxu0 0.0
    %1002 = vmatpush1.msra.mxu0 0.0
    %1003 = vmatprep.subr.mxu0 0.0
    %1004 = vmatpush1.msra.mxu0 0.0
    %1005 = vmatprep.subr.mxu0 0.0
    %1006 = vmatpush1.msra.mxu0 0.0
    %1007 = vmatprep.subr.mxu0 0.0
    %1008 = vmatpush1.msra.mxu0 0.0
    %1009 = vmatprep.subr.mxu0 0.0
    %1010 = vmatpush1.msra.mxu0 0.0
    %1011 = vmatprep.subr.mxu0 0.0
    %1012 = vmatpush1.msra.mxu0 0.0
    %1013 = vmatprep.subr.mxu0 0.0
    %1014 = vmatpush1.msra.mxu0 0.0
    %1015 = vmatprep.subr.mxu0 0.0
    %1016 = vmatpush1.msra.mxu0 0.0
    %1017 = vmatprep.subr.mxu0 0.0
    %1018 = vmatpush1.msra.mxu0 0.0
    %1019 = vmatprep.subr.mxu0 0.0
    %1020 = vmatpush1.msra.mxu0 0.0
    %1021 = vmatprep.subr.mxu0 0.0
    %1022 = vmatpush1.msra.mxu0 0.0
    %1023 = vmatprep.subr.mxu0 0.0
    %1024 = vmatpush1.msra.mxu0 0.0
    %1025 = vmatprep.subr.mxu0 0.0
    %1026 = vmatpush1.msra.mxu0 0.0
    %1027 = vmatprep.subr.mxu0 0.0
    %1028 = vmatpush1.msra.mxu0 0.0
    %1029 = vmatprep.subr.mxu0 0.0
    %1030 = vmatpush1.msra.mxu0 0.0
    %1031 = vmatprep.subr.mxu0 0.0
    %1032 = vmatpush1.msra.mxu0 0.0
    %1033 = vmatprep.subr.mxu0 0.0
    %1034 = vmatpush1.msra.mxu0 0.0
    %1035 = vmatprep.subr.mxu0 0.0
    %1036 = vmatpush1.msra.mxu0 0.0
    %1037 = vmatprep.subr.mxu0 0.0
    %1038 = vmatpush1.msra.mxu0 0.0
    %1039 = vmatprep.subr.mxu0 0.0
    %1040 = vmatpush1.msra.mxu0 0.0
    %1041 = vmatprep.subr.mxu0 0.0
    %1042 = vmatpush1.msra.mxu0 0.0
    %1043 = vmatprep.subr.mxu0 0.0
    %1044 = vmatpush1.msra.mxu0 0.0
    %1045 = vmatprep.subr.mxu0 0.0
    %1046 = vmatpush1.msra.mxu0 0.0
    %1047 = vmatprep.subr.mxu0 0.0
    %1048 = vmatpush1.msra.mxu0 0.0
    %1049 = vmatprep.subr.mxu0 0.0
    %1050 = vmatpush1.msra.mxu0 0.0
    %1051 = vmatprep.subr.mxu0 0.0
    %1052 = vmatpush1.msra.mxu0 0.0
    %1053 = vmatprep.subr.mxu0 0.0
    %1054 = vmatpush1.msra.mxu0 0.0
    %1055 = vmatprep.subr.mxu0 0.0
    %1056 = vmatpush1.msra.mxu0 0.0
    %1057 = vmatprep.mubr.f32.mxu0 0.0
    %v1058 = vand.u32 %v780, 4294901760
    %v1059 = vsub.f32 %v780, %v1058
    %1060 = vmatmul.mubr.f32.gmra.mrb[0].mxu0 %v1059
    %v1061 = vpop.f32.mrb[0].mxu0
    %v1062 = vadd.f32 %v970, %v1061
    %v1063 = vpop.f32.mrb[0].mxu0
    %1064 = vmatprep.mubr.f32.mxu0 0.0
    %v1065 = vand.u32 %v783, 4294901760
    %v1066 = vsub.f32 %v783, %v1065
    %1067 = vmatmul.mubr.f32.gmra.mrb[0].mxu0 %v1066
    %v1068 = vpop.f32.mrb[0].mxu0
    %v1069 = vadd.f32 %v976, %v1068
    %v1070 = vpop.f32.mrb[0].mxu0
    %1071 = vmatprep.mubr.f32.mxu0 0.0
    %v1072 = vand.u32 %v786, 4294901760
    %v1073 = vsub.f32 %v786, %v1072
    %1074 = vmatmul.mubr.f32.gmra.mrb[0].mxu0 %v1073
    %v1075 = vpop.f32.mrb[0].mxu0
    %v1076 = vadd.f32 %v982, %v1075
    %v1077 = vpop.f32.mrb[0].mxu0
    %1078 = vmatprep.mubr.f32.mxu0 0.0
    %v1079 = vand.u32 %v789, 4294901760
    %v1080 = vsub.f32 %v789, %v1079
    %1081 = vmatmul.mubr.f32.gmra.mrb[0].mxu0 %v1080
    %v1082 = vpop.f32.mrb[0].mxu0
    %v1083 = vadd.f32 %v988, %v1082
    %v1084 = vpop.f32.mrb[0].mxu0
    %1085 = vdwg.mxu0
    %1086 = vmatprep.subr.mxu0 0.0
    %v1087 = vand.u32 %v766, 4294901760
    %1088 = vmatpush1.msra.mxu0 %v1087
    %1089 = vmatprep.subr.mxu0 0.0
    %1090 = vmatpush1.msra.mxu0 0.0
    %1091 = vmatprep.subr.mxu0 0.0
    %1092 = vmatpush1.msra.mxu0 0.0
    %1093 = vmatprep.subr.mxu0 0.0
    %1094 = vmatpush1.msra.mxu0 0.0
    %1095 = vmatprep.subr.mxu0 0.0
    %1096 = vmatpush1.msra.mxu0 0.0
    %1097 = vmatprep.subr.mxu0 0.0
    %1098 = vmatpush1.msra.mxu0 0.0
    %1099 = vmatprep.subr.mxu0 0.0
    %1100 = vmatpush1.msra.mxu0 0.0
    %1101 = vmatprep.subr.mxu0 0.0
    %1102 = vmatpush1.msra.mxu0 0.0
    %1103 = vmatprep.subr.mxu0 0.0
    %1104 = vmatpush1.msra.mxu0 0.0
    %1105 = vmatprep.subr.mxu0 0.0
    %1106 = vmatpush1.msra.mxu0 0.0
    %1107 = vmatprep.subr.mxu0 0.0
    %1108 = vmatpush1.msra.mxu0 0.0
    %1109 = vmatprep.subr.mxu0 0.0
    %1110 = vmatpush1.msra.mxu0 0.0
    %1111 = vmatprep.subr.mxu0 0.0
    %1112 = vmatpush1.msra.mxu0 0.0
    %1113 = vmatprep.subr.mxu0 0.0
    %1114 = vmatpush1.msra.mxu0 0.0
    %1115 = vmatprep.subr.mxu0 0.0
    %1116 = vmatpush1.msra.mxu0 0.0
    %1117 = vmatprep.subr.mxu0 0.0
    %1118 = vmatpush1.msra.mxu0 0.0
    %1119 = vmatprep.subr.mxu0 0.0
    %1120 = vmatpush1.msra.mxu0 0.0
    %1121 = vmatprep.subr.mxu0 0.0
    %1122 = vmatpush1.msra.mxu0 0.0
    %1123 = vmatprep.subr.mxu0 0.0
    %1124 = vmatpush1.msra.mxu0 0.0
    %1125 = vmatprep.subr.mxu0 0.0
    %1126 = vmatpush1.msra.mxu0 0.0
    %1127 = vmatprep.subr.mxu0 0.0
    %1128 = vmatpush1.msra.mxu0 0.0
    %1129 = vmatprep.subr.mxu0 0.0
    %1130 = vmatpush1.msra.mxu0 0.0
    %1131 = vmatprep.subr.mxu0 0.0
    %1132 = vmatpush1.msra.mxu0 0.0
    %1133 = vmatprep.subr.mxu0 0.0
    %1134 = vmatpush1.msra.mxu0 0.0
    %1135 = vmatprep.subr.mxu0 0.0
    %1136 = vmatpush1.msra.mxu0 0.0
    %1137 = vmatprep.subr.mxu0 0.0
    %1138 = vmatpush1.msra.mxu0 0.0
    %1139 = vmatprep.subr.mxu0 0.0
    %1140 = vmatpush1.msra.mxu0 0.0
    %1141 = vmatprep.subr.mxu0 0.0
    %1142 = vmatpush1.msra.mxu0 0.0
    %1143 = vmatprep.subr.mxu0 0.0
    %1144 = vmatpush1.msra.mxu0 0.0
    %1145 = vmatprep.subr.mxu0 0.0
    %1146 = vmatpush1.msra.mxu0 0.0
    %1147 = vmatprep.subr.mxu0 0.0
    %1148 = vmatpush1.msra.mxu0 0.0
    %1149 = vmatprep.subr.mxu0 0.0
    %1150 = vmatpush1.msra.mxu0 0.0
    %1151 = vmatprep.mubr.f32.mxu0 0.0
    %v1152 = vand.u32 %v780, 4294901760
    %v1153 = vsub.f32 %v780, %v1152
    %v1154 = vand.u32 %v1153, 4294901760
    %1155 = vmatmul.mubr.f32.gmra.mrb[0].mxu0 %v1154
    %v1156 = vpop.f32.mrb[0].mxu0
    %v1157 = vadd.f32 %v1062, %v1156
    %v1158 = vpop.f32.mrb[0].mxu0
    %1159 = vmatprep.mubr.f32.mxu0 0.0
    %v1160 = vand.u32 %v783, 4294901760
    %v1161 = vsub.f32 %v783, %v1160
    %v1162 = vand.u32 %v1161, 4294901760
    %1163 = vmatmul.mubr.f32.gmra.mrb[0].mxu0 %v1162
    %v1164 = vpop.f32.mrb[0].mxu0
    %v1165 = vadd.f32 %v1069, %v1164
    %v1166 = vpop.f32.mrb[0].mxu0
    %1167 = vmatprep.mubr.f32.mxu0 0.0
    %v1168 = vand.u32 %v786, 4294901760
    %v1169 = vsub.f32 %v786, %v1168
    %v1170 = vand.u32 %v1169, 4294901760
    %1171 = vmatmul.mubr.f32.gmra.mrb[0].mxu0 %v1170
    %v1172 = vpop.f32.mrb[0].mxu0
    %v1173 = vadd.f32 %v1076, %v1172
    %v1174 = vpop.f32.mrb[0].mxu0
    %1175 = vmatprep.mubr.f32.mxu0 0.0
    %v1176 = vand.u32 %v789, 4294901760
    %v1177 = vsub.f32 %v789, %v1176
    %v1178 = vand.u32 %v1177, 4294901760
    %1179 = vmatmul.mubr.f32.gmra.mrb[0].mxu0 %v1178
    %v1180 = vpop.f32.mrb[0].mxu0
    %v1181 = vadd.f32 %v1083, %v1180
    %v1182 = vpop.f32.mrb[0].mxu0
    %1183 = vdwg.mxu0
    %1184 = vmatprep.subr.mxu0 0.0
    %v1185 = vand.u32 %v766, 4294901760
    %v1186 = vsub.f32 %v766, %v1185
    %v1187 = vand.u32 %v1186, 4294901760
    %1188 = vmatpush1.msra.mxu0 %v1187
    %1189 = vmatprep.subr.mxu0 0.0
    %1190 = vmatpush1.msra.mxu0 0.0
    %1191 = vmatprep.subr.mxu0 0.0
    %1192 = vmatpush1.msra.mxu0 0.0
    %1193 = vmatprep.subr.mxu0 0.0
    %1194 = vmatpush1.msra.mxu0 0.0
    %1195 = vmatprep.subr.mxu0 0.0
    %1196 = vmatpush1.msra.mxu0 0.0
    %1197 = vmatprep.subr.mxu0 0.0
    %1198 = vmatpush1.msra.mxu0 0.0
    %1199 = vmatprep.subr.mxu0 0.0
    %1200 = vmatpush1.msra.mxu0 0.0
    %1201 = vmatprep.subr.mxu0 0.0
    %1202 = vmatpush1.msra.mxu0 0.0
    %1203 = vmatprep.subr.mxu0 0.0
    %1204 = vmatpush1.msra.mxu0 0.0
    %1205 = vmatprep.subr.mxu0 0.0
    %1206 = vmatpush1.msra.mxu0 0.0
    %1207 = vmatprep.subr.mxu0 0.0
    %1208 = vmatpush1.msra.mxu0 0.0
    %1209 = vmatprep.subr.mxu0 0.0
    %1210 = vmatpush1.msra.mxu0 0.0
    %1211 = vmatprep.subr.mxu0 0.0
    %1212 = vmatpush1.msra.mxu0 0.0
    %1213 = vmatprep.subr.mxu0 0.0
    %1214 = vmatpush1.msra.mxu0 0.0
    %1215 = vmatprep.subr.mxu0 0.0
    %1216 = vmatpush1.msra.mxu0 0.0
    %1217 = vmatprep.subr.mxu0 0.0
    %1218 = vmatpush1.msra.mxu0 0.0
    %1219 = vmatprep.subr.mxu0 0.0
    %1220 = vmatpush1.msra.mxu0 0.0
    %1221 = vmatprep.subr.mxu0 0.0
    %1222 = vmatpush1.msra.mxu0 0.0
    %1223 = vmatprep.subr.mxu0 0.0
    %1224 = vmatpush1.msra.mxu0 0.0
    %1225 = vmatprep.subr.mxu0 0.0
    %1226 = vmatpush1.msra.mxu0 0.0
    %1227 = vmatprep.subr.mxu0 0.0
    %1228 = vmatpush1.msra.mxu0 0.0
    %1229 = vmatprep.subr.mxu0 0.0
    %1230 = vmatpush1.msra.mxu0 0.0
    %1231 = vmatprep.subr.mxu0 0.0
    %1232 = vmatpush1.msra.mxu0 0.0
    %1233 = vmatprep.subr.mxu0 0.0
    %1234 = vmatpush1.msra.mxu0 0.0
    %1235 = vmatprep.subr.mxu0 0.0
    %1236 = vmatpush1.msra.mxu0 0.0
    %1237 = vmatprep.subr.mxu0 0.0
    %1238 = vmatpush1.msra.mxu0 0.0
    %1239 = vmatprep.subr.mxu0 0.0
    %1240 = vmatpush1.msra.mxu0 0.0
    %1241 = vmatprep.subr.mxu0 0.0
    %1242 = vmatpush1.msra.mxu0 0.0
    %1243 = vmatprep.subr.mxu0 0.0
    %1244 = vmatpush1.msra.mxu0 0.0
    %1245 = vmatprep.subr.mxu0 0.0
    %1246 = vmatpush1.msra.mxu0 0.0
    %1247 = vmatprep.subr.mxu0 0.0
    %1248 = vmatpush1.msra.mxu0 0.0
    %1249 = vmatprep.subr.mxu0 0.0
    %1250 = vmatpush1.msra.mxu0 0.0
    %1251 = vmatprep.mubr.f32.mxu0 0.0
    %v1252 = vand.u32 %v780, 4294901760
    %1253 = vmatmul.mubr.f32.gmra.mrb[0].mxu0 %v1252
    %v1254 = vpop.f32.mrb[0].mxu0
    %v1255 = vadd.f32 %v1157, %v1254
    %v1256 = vpop.f32.mrb[0].mxu0
    %1257 = vmatprep.mubr.f32.mxu0 0.0
    %v1258 = vand.u32 %v783, 4294901760
    %1259 = vmatmul.mubr.f32.gmra.mrb[0].mxu0 %v1258
    %v1260 = vpop.f32.mrb[0].mxu0
    %v1261 = vadd.f32 %v1165, %v1260
    %v1262 = vpop.f32.mrb[0].mxu0
    %1263 = vmatprep.mubr.f32.mxu0 0.0
    %v1264 = vand.u32 %v786, 4294901760
    %1265 = vmatmul.mubr.f32.gmra.mrb[0].mxu0 %v1264
    %v1266 = vpop.f32.mrb[0].mxu0
    %v1267 = vadd.f32 %v1173, %v1266
    %v1268 = vpop.f32.mrb[0].mxu0
    %1269 = vmatprep.mubr.f32.mxu0 0.0
    %v1270 = vand.u32 %v789, 4294901760
    %1271 = vmatmul.mubr.f32.gmra.mrb[0].mxu0 %v1270
    %v1272 = vpop.f32.mrb[0].mxu0
    %v1273 = vadd.f32 %v1181, %v1272
    %v1274 = vpop.f32.mrb[0].mxu0
    %1275 = vdwg.mxu0
    %1276 = vmatprep.subr.mxu0 0.0
    %v1277 = vand.u32 %v766, 4294901760
    %1278 = vmatpush1.msra.mxu0 %v1277
    %1279 = vmatprep.subr.mxu0 0.0
    %1280 = vmatpush1.msra.mxu0 0.0
    %1281 = vmatprep.subr.mxu0 0.0
    %1282 = vmatpush1.msra.mxu0 0.0
    %1283 = vmatprep.subr.mxu0 0.0
    %1284 = vmatpush1.msra.mxu0 0.0
    %1285 = vmatprep.subr.mxu0 0.0
    %1286 = vmatpush1.msra.mxu0 0.0
    %1287 = vmatprep.subr.mxu0 0.0
    %1288 = vmatpush1.msra.mxu0 0.0
    %1289 = vmatprep.subr.mxu0 0.0
    %1290 = vmatpush1.msra.mxu0 0.0
    %1291 = vmatprep.subr.mxu0 0.0
    %1292 = vmatpush1.msra.mxu0 0.0
    %1293 = vmatprep.subr.mxu0 0.0
    %1294 = vmatpush1.msra.mxu0 0.0
    %1295 = vmatprep.subr.mxu0 0.0
    %1296 = vmatpush1.msra.mxu0 0.0
    %1297 = vmatprep.subr.mxu0 0.0
    %1298 = vmatpush1.msra.mxu0 0.0
    %1299 = vmatprep.subr.mxu0 0.0
    %1300 = vmatpush1.msra.mxu0 0.0
    %1301 = vmatprep.subr.mxu0 0.0
    %1302 = vmatpush1.msra.mxu0 0.0
    %1303 = vmatprep.subr.mxu0 0.0
    %1304 = vmatpush1.msra.mxu0 0.0
    %1305 = vmatprep.subr.mxu0 0.0
    %1306 = vmatpush1.msra.mxu0 0.0
    %1307 = vmatprep.subr.mxu0 0.0
    %1308 = vmatpush1.msra.mxu0 0.0
    %1309 = vmatprep.subr.mxu0 0.0
    %1310 = vmatpush1.msra.mxu0 0.0
    %1311 = vmatprep.subr.mxu0 0.0
    %1312 = vmatpush1.msra.mxu0 0.0
    %1313 = vmatprep.subr.mxu0 0.0
    %1314 = vmatpush1.msra.mxu0 0.0
    %1315 = vmatprep.subr.mxu0 0.0
    %1316 = vmatpush1.msra.mxu0 0.0
    %1317 = vmatprep.subr.mxu0 0.0
    %1318 = vmatpush1.msra.mxu0 0.0
    %1319 = vmatprep.subr.mxu0 0.0
    %1320 = vmatpush1.msra.mxu0 0.0
    %1321 = vmatprep.subr.mxu0 0.0
    %1322 = vmatpush1.msra.mxu0 0.0
    %1323 = vmatprep.subr.mxu0 0.0
    %1324 = vmatpush1.msra.mxu0 0.0
    %1325 = vmatprep.subr.mxu0 0.0
    %1326 = vmatpush1.msra.mxu0 0.0
    %1327 = vmatprep.subr.mxu0 0.0
    %1328 = vmatpush1.msra.mxu0 0.0
    %1329 = vmatprep.subr.mxu0 0.0
    %1330 = vmatpush1.msra.mxu0 0.0
    %1331 = vmatprep.subr.mxu0 0.0
    %1332 = vmatpush1.msra.mxu0 0.0
    %1333 = vmatprep.subr.mxu0 0.0
    %1334 = vmatpush1.msra.mxu0 0.0
    %1335 = vmatprep.subr.mxu0 0.0
    %1336 = vmatpush1.msra.mxu0 0.0
    %1337 = vmatprep.subr.mxu0 0.0
    %1338 = vmatpush1.msra.mxu0 0.0
    %1339 = vmatprep.subr.mxu0 0.0
    %1340 = vmatpush1.msra.mxu0 0.0
    %1341 = vmatprep.mubr.f32.mxu0 0.0
    %v1342 = vand.u32 %v780, 4294901760
    %1343 = vmatmul.mubr.f32.gmra.mrb[0].mxu0 %v1342
    %v1344 = vpop.f32.mrb[0].mxu0
    %v1345 = vadd.f32 %v1255, %v1344
    %v1346 = vpop.f32.mrb[0].mxu0
    %1347 = vmatprep.mubr.f32.mxu0 0.0
    %v1348 = vand.u32 %v783, 4294901760
    %1349 = vmatmul.mubr.f32.gmra.mrb[0].mxu0 %v1348
    %v1350 = vpop.f32.mrb[0].mxu0
    %v1351 = vadd.f32 %v1261, %v1350
    %v1352 = vpop.f32.mrb[0].mxu0
    %1353 = vmatprep.mubr.f32.mxu0 0.0
    %v1354 = vand.u32 %v786, 4294901760
    %1355 = vmatmul.mubr.f32.gmra.mrb[0].mxu0 %v1354
    %v1356 = vpop.f32.mrb[0].mxu0
    %v1357 = vadd.f32 %v1267, %v1356
    %v1358 = vpop.f32.mrb[0].mxu0
    %1359 = vmatprep.mubr.f32.mxu0 0.0
    %v1360 = vand.u32 %v789, 4294901760
    %1361 = vmatmul.mubr.f32.gmra.mrb[0].mxu0 %v1360
    %v1362 = vpop.f32.mrb[0].mxu0
    %v1363 = vadd.f32 %v1273, %v1362
    %v1364 = vpop.f32.mrb[0].mxu0
    %1365 = vdwg.mxu0
    %1366 = vst [vmem:[#allocation2] sm:$0xff] %v1345
    %1367 = vst [vmem:[#allocation2 + $0x8] sm:$0xff] %v1351
    %1368 = vst [vmem:[#allocation2 + $0x10] sm:$0xff] %v1357
    %1369 = vst [vmem:[#allocation2 + $0x18] sm:$0xff] %v1363
    %v1370 = vld [vmem:[#allocation2] sm:$0x3]
    %vm1371 = vcmask 261120
    %v1373 = vsel %vm1371, 0, 0
    %1375 = vmatprep.subr.bf16.mxu0 0
    %1376 = vmatpush1.bf16.msra.mxu0 %v771
    %1377 = vmatprep.subr.bf16.mxu0 0
    %1378 = vmatpush1.bf16.msra.mxu0 %v772
    %1379 = vmatprep.subr.bf16.mxu0 0
    %1380 = vmatpush1.bf16.msra.mxu0 0
    %1381 = vmatprep.subr.bf16.mxu0 0
    %1382 = vmatpush1.bf16.msra.mxu0 0
    %1383 = vmatprep.subr.bf16.mxu0 0
    %1384 = vmatpush1.bf16.msra.mxu0 0
    %1385 = vmatprep.subr.bf16.mxu0 0
    %1386 = vmatpush1.bf16.msra.mxu0 0
    %1387 = vmatprep.subr.bf16.mxu0 0
    %1388 = vmatpush1.bf16.msra.mxu0 0
    %1389 = vmatprep.subr.bf16.mxu0 0
    %1390 = vmatpush1.bf16.msra.mxu0 0
    %1391 = vmatprep.subr.bf16.mxu0 0
    %1392 = vmatpush1.bf16.msra.mxu0 0
    %1393 = vmatprep.subr.bf16.mxu0 0
    %1394 = vmatpush1.bf16.msra.mxu0 0
    %1395 = vmatprep.subr.bf16.mxu0 0
    %1396 = vmatpush1.bf16.msra.mxu0 0
    %1397 = vmatprep.subr.bf16.mxu0 0
    %1398 = vmatpush1.bf16.msra.mxu0 0
    %1399 = vmatprep.subr.bf16.mxu0 0
    %1400 = vmatpush1.bf16.msra.mxu0 0
    %1401 = vmatprep.subr.bf16.mxu0 0
    %1402 = vmatpush1.bf16.msra.mxu0 0
    %1403 = vmatprep.subr.bf16.mxu0 0
    %1404 = vmatpush1.bf16.msra.mxu0 0
    %1405 = vmatprep.subr.bf16.mxu0 0
    %1406 = vmatpush1.bf16.msra.mxu0 0
    %1407 = vmatprep.mubr.bf16.mxu0 0
    %1408 = vmatmul.mubr.bf16.gmra.mrb[0].mxu0 %v1373
    %v1409 = vpop.f32.mrb[0].mxu0
    %v1410 = vadd.f32 0.0, %v1409
    %v1411 = vpop.f32.mrb[0].mxu0
    %v1412 = vpop.f32.mrb[0].mxu0
    %v1413 = vpop.f32.mrb[0].mxu0
    %1414 = vdwg.mxu0
    %v1415 = vadd.f32 %v1370, %v1410
    %v1416 = vsub.f32 0.0, %v1415
    %v1417 = vmul.f32 %v1416, 1.442695
    %v1418 = vpow.pop %v1417
    %v1419 = vadd.f32 %v1418, 1.0
    %v1420 = vrcp.pop %v1419
    %v1421 = vtanh.pop %v1415
    %v1422 = vmul.f32 %v1420, 0.0
    %1424 = vrot.lane.b32.xlu0 %v1421, 64
    %v1425 = vpop.permute.xlu0 %1424
    %v1427 = vmul.f32 %v1420, %v1425
    %1429 = vrot.lane.b32.xlu0 %v1427, 32
    %v1430 = vpop.permute.xlu0 %1429
    %v1432 = vadd.f32 %v1422, %v1430
    %v1433 = vtanh.pop %v1432
    %1435 = vrot.lane.b32.xlu0 %v1433, 64
    %v1436 = vpop.permute.xlu0 %1435
    %v1438 = vmul.f32 %v1420, %v1436
    %1440 = vrot.lane.b32.xlu0 %v1438, 32
    %v1441 = vpop.permute.xlu0 %1440
    %vm1443 = vcmask 254976
    %1444 = vst.msk [vmem:[#allocation3] sm:$0x3] %vm1443, %v1441
    %v1445 = vld [vmem:[#allocation2 + $0x2] sm:$0x3]
    %v1446 = vpack.c.bf16 %v1438, %v1438
    %1448 = vrot.lane.b32.xlu0 %v1446, 32
    %v1449 = vpop.permute.xlu0 %1448
    %v1451 = vsel %vm1371, %v1449, 0
    %1453 = vmatprep.subr.bf16.mxu0 0
    %1454 = vmatpush1.bf16.msra.mxu0 %v771
    %1455 = vmatprep.subr.bf16.mxu0 0
    %1456 = vmatpush1.bf16.msra.mxu0 %v772
    %1457 = vmatprep.subr.bf16.mxu0 0
    %1458 = vmatpush1.bf16.msra.mxu0 0
    %1459 = vmatprep.subr.bf16.mxu0 0
    %1460 = vmatpush1.bf16.msra.mxu0 0
    %1461 = vmatprep.subr.bf16.mxu0 0
    %1462 = vmatpush1.bf16.msra.mxu0 0
    %1463 = vmatprep.subr.bf16.mxu0 0
    %1464 = vmatpush1.bf16.msra.mxu0 0
    %1465 = vmatprep.subr.bf16.mxu0 0
    %1466 = vmatpush1.bf16.msra.mxu0 0
    %1467 = vmatprep.subr.bf16.mxu0 0
    %1468 = vmatpush1.bf16.msra.mxu0 0
    %1469 = vmatprep.subr.bf16.mxu0 0
    %1470 = vmatpush1.bf16.msra.mxu0 0
    %1471 = vmatprep.subr.bf16.mxu0 0
    %1472 = vmatpush1.bf16.msra.mxu0 0
    %1473 = vmatprep.subr.bf16.mxu0 0
    %1474 = vmatpush1.bf16.msra.mxu0 0
    %1475 = vmatprep.subr.bf16.mxu0 0
    %1476 = vmatpush1.bf16.msra.mxu0 0
    %1477 = vmatprep.subr.bf16.mxu0 0
    %1478 = vmatpush1.bf16.msra.mxu0 0
    %1479 = vmatprep.subr.bf16.mxu0 0
    %1480 = vmatpush1.bf16.msra.mxu0 0
    %1481 = vmatprep.subr.bf16.mxu0 0
    %1482 = vmatpush1.bf16.msra.mxu0 0
    %1483 = vmatprep.subr.bf16.mxu0 0
    %1484 = vmatpush1.bf16.msra.mxu0 0
    %1485 = vmatprep.mubr.bf16.mxu0 0
    %1486 = vmatmul.mubr.bf16.gmra.mrb[0].mxu0 %v1451
    %v1487 = vpop.f32.mrb[0].mxu0
    %v1488 = vadd.f32 0.0, %v1487
    %v1489 = vpop.f32.mrb[0].mxu0
    %v1490 = vpop.f32.mrb[0].mxu0
    %v1491 = vpop.f32.mrb[0].mxu0
    %1492 = vdwg.mxu0
    %v1493 = vadd.f32 %v1445, %v1488
    %v1494 = vsub.f32 0.0, %v1493
    %v1495 = vmul.f32 %v1494, 1.442695
    %v1496 = vpow.pop %v1495
    %v1497 = vadd.f32 %v1496, 1.0
    %v1498 = vrcp.pop %v1497
    %v1499 = vtanh.pop %v1493
    %v1500 = vmul.f32 %v1498, %v1432
    %1502 = vrot.lane.b32.xlu0 %v1499, 64
    %v1503 = vpop.permute.xlu0 %1502
    %v1505 = vmul.f32 %v1498, %v1503
    %1507 = vrot.lane.b32.xlu0 %v1505, 32
    %v1508 = vpop.permute.xlu0 %1507
    %v1510 = vadd.f32 %v1500, %v1508
    %v1511 = vtanh.pop %v1510
    %1513 = vrot.lane.b32.xlu0 %v1511, 64
    %v1514 = vpop.permute.xlu0 %1513
    %v1516 = vmul.f32 %v1498, %v1514
    %1518 = vrot.lane.b32.xlu0 %v1516, 32
    %v1519 = vpop.permute.xlu0 %1518
    %1521 = vst.msk [vmem:[#allocation3 + $0x2] sm:$0x3] %vm1443, %v1519
    %v1522 = vld [vmem:[#allocation2 + $0x4] sm:$0x3]
    %v1523 = vpack.c.bf16 %v1516, %v1516
    %1525 = vrot.lane.b32.xlu0 %v1523, 32
    %v1526 = vpop.permute.xlu0 %1525
    %v1528 = vsel %vm1371, %v1526, 0
    %1530 = vmatprep.subr.bf16.mxu0 0
    %1531 = vmatpush1.bf16.msra.mxu0 %v771
    %1532 = vmatprep.subr.bf16.mxu0 0
    %1533 = vmatpush1.bf16.msra.mxu0 %v772
    %1534 = vmatprep.subr.bf16.mxu0 0
    %1535 = vmatpush1.bf16.msra.mxu0 0
    %1536 = vmatprep.subr.bf16.mxu0 0
    %1537 = vmatpush1.bf16.msra.mxu0 0
    %1538 = vmatprep.subr.bf16.mxu0 0
    %1539 = vmatpush1.bf16.msra.mxu0 0
    %1540 = vmatprep.subr.bf16.mxu0 0
    %1541 = vmatpush1.bf16.msra.mxu0 0
    %1542 = vmatprep.subr.bf16.mxu0 0
    %1543 = vmatpush1.bf16.msra.mxu0 0
    %1544 = vmatprep.subr.bf16.mxu0 0
    %1545 = vmatpush1.bf16.msra.mxu0 0
    %1546 = vmatprep.subr.bf16.mxu0 0
    %1547 = vmatpush1.bf16.msra.mxu0 0
    %1548 = vmatprep.subr.bf16.mxu0 0
    %1549 = vmatpush1.bf16.msra.mxu0 0
    %1550 = vmatprep.subr.bf16.mxu0 0
    %1551 = vmatpush1.bf16.msra.mxu0 0
    %1552 = vmatprep.subr.bf16.mxu0 0
    %1553 = vmatpush1.bf16.msra.mxu0 0
    %1554 = vmatprep.subr.bf16.mxu0 0
    %1555 = vmatpush1.bf16.msra.mxu0 0
    %1556 = vmatprep.subr.bf16.mxu0 0
    %1557 = vmatpush1.bf16.msra.mxu0 0
    %1558 = vmatprep.subr.bf16.mxu0 0
    %1559 = vmatpush1.bf16.msra.mxu0 0
    %1560 = vmatprep.subr.bf16.mxu0 0
    %1561 = vmatpush1.bf16.msra.mxu0 0
    %1562 = vmatprep.mubr.bf16.mxu0 0
    %1563 = vmatmul.mubr.bf16.gmra.mrb[0].mxu0 %v1528
    %v1564 = vpop.f32.mrb[0].mxu0
    %v1565 = vadd.f32 0.0, %v1564
    %v1566 = vpop.f32.mrb[0].mxu0
    %v1567 = vpop.f32.mrb[0].mxu0
    %v1568 = vpop.f32.mrb[0].mxu0
    %1569 = vdwg.mxu0
    %v1570 = vadd.f32 %v1522, %v1565
    %v1571 = vsub.f32 0.0, %v1570
    %v1572 = vmul.f32 %v1571, 1.442695
    %v1573 = vpow.pop %v1572
    %v1574 = vadd.f32 %v1573, 1.0
    %v1575 = vrcp.pop %v1574
    %v1576 = vtanh.pop %v1570
    %v1577 = vmul.f32 %v1575, %v1510
    %1579 = vrot.lane.b32.xlu0 %v1576, 64
    %v1580 = vpop.permute.xlu0 %1579
    %v1582 = vmul.f32 %v1575, %v1580
    %1584 = vrot.lane.b32.xlu0 %v1582, 32
    %v1585 = vpop.permute.xlu0 %1584
    %v1587 = vadd.f32 %v1577, %v1585
    %v1588 = vtanh.pop %v1587
    %1590 = vrot.lane.b32.xlu0 %v1588, 64
    %v1591 = vpop.permute.xlu0 %1590
    %v1593 = vmul.f32 %v1575, %v1591
    %1595 = vrot.lane.b32.xlu0 %v1593, 32
    %v1596 = vpop.permute.xlu0 %1595
    %1598 = vst.msk [vmem:[#allocation3 + $0x4] sm:$0x3] %vm1443, %v1596
    %v1599 = vld [vmem:[#allocation2 + $0x6] sm:$0x3]
    %v1600 = vpack.c.bf16 %v1593, %v1593
    %1602 = vrot.lane.b32.xlu0 %v1600, 32
    %v1603 = vpop.permute.xlu0 %1602
    %v1605 = vsel %vm1371, %v1603, 0
    %1607 = vmatprep.subr.bf16.mxu0 0
    %1608 = vmatpush1.bf16.msra.mxu0 %v771
    %1609 = vmatprep.subr.bf16.mxu0 0
    %1610 = vmatpush1.bf16.msra.mxu0 %v772
    %1611 = vmatprep.subr.bf16.mxu0 0
    %1612 = vmatpush1.bf16.msra.mxu0 0
    %1613 = vmatprep.subr.bf16.mxu0 0
    %1614 = vmatpush1.bf16.msra.mxu0 0
    %1615 = vmatprep.subr.bf16.mxu0 0
    %1616 = vmatpush1.bf16.msra.mxu0 0
    %1617 = vmatprep.subr.bf16.mxu0 0
    %1618 = vmatpush1.bf16.msra.mxu0 0
    %1619 = vmatprep.subr.bf16.mxu0 0
    %1620 = vmatpush1.bf16.msra.mxu0 0
    %1621 = vmatprep.subr.bf16.mxu0 0
    %1622 = vmatpush1.bf16.msra.mxu0 0
    %1623 = vmatprep.subr.bf16.mxu0 0
    %1624 = vmatpush1.bf16.msra.mxu0 0
    %1625 = vmatprep.subr.bf16.mxu0 0
    %1626 = vmatpush1.bf16.msra.mxu0 0
    %1627 = vmatprep.subr.bf16.mxu0 0
    %1628 = vmatpush1.bf16.msra.mxu0 0
    %1629 = vmatprep.subr.bf16.mxu0 0
    %1630 = vmatpush1.bf16.msra.mxu0 0
    %1631 = vmatprep.subr.bf16.mxu0 0
    %1632 = vmatpush1.bf16.msra.mxu0 0
    %1633 = vmatprep.subr.bf16.mxu0 0
    %1634 = vmatpush1.bf16.msra.mxu0 0
    %1635 = vmatprep.subr.bf16.mxu0 0
    %1636 = vmatpush1.bf16.msra.mxu0 0
    %1637 = vmatprep.subr.bf16.mxu0 0
    %1638 = vmatpush1.bf16.msra.mxu0 0
    %1639 = vmatprep.mubr.bf16.mxu0 0
    %1640 = vmatmul.mubr.bf16.gmra.mrb[0].mxu0 %v1605
    %v1641 = vpop.f32.mrb[0].mxu0
    %v1642 = vadd.f32 0.0, %v1641
    %v1643 = vpop.f32.mrb[0].mxu0
    %v1644 = vpop.f32.mrb[0].mxu0
    %v1645 = vpop.f32.mrb[0].mxu0
    %1646 = vdwg.mxu0
    %v1647 = vadd.f32 %v1599, %v1642
    %v1648 = vsub.f32 0.0, %v1647
    %v1649 = vmul.f32 %v1648, 1.442695
    %v1650 = vpow.pop %v1649
    %v1651 = vadd.f32 %v1650, 1.0
    %v1652 = vrcp.pop %v1651
    %v1653 = vtanh.pop %v1647
    %v1654 = vmul.f32 %v1652, %v1587
    %1656 = vrot.lane.b32.xlu0 %v1653, 64
    %v1657 = vpop.permute.xlu0 %1656
    %v1659 = vmul.f32 %v1652, %v1657
    %1661 = vrot.lane.b32.xlu0 %v1659, 32
    %v1662 = vpop.permute.xlu0 %1661
    %v1664 = vadd.f32 %v1654, %v1662
    %v1665 = vtanh.pop %v1664
    %1667 = vrot.lane.b32.xlu0 %v1665, 64
    %v1668 = vpop.permute.xlu0 %1667
    %v1670 = vmul.f32 %v1652, %v1668
    %1672 = vrot.lane.b32.xlu0 %v1670, 32
    %v1673 = vpop.permute.xlu0 %1672
    %1675 = vst.msk [vmem:[#allocation3 + $0x6] sm:$0x3] %vm1443, %v1673
    %v1676 = vld [vmem:[#allocation2 + $0x8] sm:$0x3]
    %v1677 = vpack.c.bf16 %v1670, %v1670
    %1679 = vrot.lane.b32.xlu0 %v1677, 32
    %v1680 = vpop.permute.xlu0 %1679
    %v1682 = vsel %vm1371, %v1680, 0
    %1684 = vmatprep.subr.bf16.mxu0 0
    %1685 = vmatpush1.bf16.msra.mxu0 %v771
    %1686 = vmatprep.subr.bf16.mxu0 0
    %1687 = vmatpush1.bf16.msra.mxu0 %v772
    %1688 = vmatprep.subr.bf16.mxu0 0
    %1689 = vmatpush1.bf16.msra.mxu0 0
    %1690 = vmatprep.subr.bf16.mxu0 0
    %1691 = vmatpush1.bf16.msra.mxu0 0
    %1692 = vmatprep.subr.bf16.mxu0 0
    %1693 = vmatpush1.bf16.msra.mxu0 0
    %1694 = vmatprep.subr.bf16.mxu0 0
    %1695 = vmatpush1.bf16.msra.mxu0 0
    %1696 = vmatprep.subr.bf16.mxu0 0
    %1697 = vmatpush1.bf16.msra.mxu0 0
    %1698 = vmatprep.subr.bf16.mxu0 0
    %1699 = vmatpush1.bf16.msra.mxu0 0
    %1700 = vmatprep.subr.bf16.mxu0 0
    %1701 = vmatpush1.bf16.msra.mxu0 0
    %1702 = vmatprep.subr.bf16.mxu0 0
    %1703 = vmatpush1.bf16.msra.mxu0 0
    %1704 = vmatprep.subr.bf16.mxu0 0
    %1705 = vmatpush1.bf16.msra.mxu0 0
    %1706 = vmatprep.subr.bf16.mxu0 0
    %1707 = vmatpush1.bf16.msra.mxu0 0
    %1708 = vmatprep.subr.bf16.mxu0 0
    %1709 = vmatpush1.bf16.msra.mxu0 0
    %1710 = vmatprep.subr.bf16.mxu0 0
    %1711 = vmatpush1.bf16.msra.mxu0 0
    %1712 = vmatprep.subr.bf16.mxu0 0
    %1713 = vmatpush1.bf16.msra.mxu0 0
    %1714 = vmatprep.subr.bf16.mxu0 0
    %1715 = vmatpush1.bf16.msra.mxu0 0
    %1716 = vmatprep.mubr.bf16.mxu0 0
    %1717 = vmatmul.mubr.bf16.gmra.mrb[0].mxu0 %v1682
    %v1718 = vpop.f32.mrb[0].mxu0
    %v1719 = vadd.f32 0.0, %v1718
    %v1720 = vpop.f32.mrb[0].mxu0
    %v1721 = vpop.f32.mrb[0].mxu0
    %v1722 = vpop.f32.mrb[0].mxu0
    %1723 = vdwg.mxu0
    %v1724 = vadd.f32 %v1676, %v1719
    %v1725 = vsub.f32 0.0, %v1724
    %v1726 = vmul.f32 %v1725, 1.442695
    %v1727 = vpow.pop %v1726
    %v1728 = vadd.f32 %v1727, 1.0
    %v1729 = vrcp.pop %v1728
    %v1730 = vtanh.pop %v1724
    %v1731 = vmul.f32 %v1729, %v1664
    %1733 = vrot.lane.b32.xlu0 %v1730, 64
    %v1734 = vpop.permute.xlu0 %1733
    %v1736 = vmul.f32 %v1729, %v1734
    %1738 = vrot.lane.b32.xlu0 %v1736, 32
    %v1739 = vpop.permute.xlu0 %1738
    %v1741 = vadd.f32 %v1731, %v1739
    %v1742 = vtanh.pop %v1741
    %1744 = vrot.lane.b32.xlu0 %v1742, 64
    %v1745 = vpop.permute.xlu0 %1744
    %v1747 = vmul.f32 %v1729, %v1745
    %1749 = vrot.lane.b32.xlu0 %v1747, 32
    %v1750 = vpop.permute.xlu0 %1749
    %1752 = vst.msk [vmem:[#allocation3 + $0x8] sm:$0x3] %vm1443, %v1750
    %v1753 = vld [vmem:[#allocation2 + $0xa] sm:$0x3]
    %v1754 = vpack.c.bf16 %v1747, %v1747
    %1756 = vrot.lane.b32.xlu0 %v1754, 32
    %v1757 = vpop.permute.xlu0 %1756
    %v1759 = vsel %vm1371, %v1757, 0
    %1761 = vmatprep.subr.bf16.mxu0 0
    %1762 = vmatpush1.bf16.msra.mxu0 %v771
    %1763 = vmatprep.subr.bf16.mxu0 0
    %1764 = vmatpush1.bf16.msra.mxu0 %v772
    %1765 = vmatprep.subr.bf16.mxu0 0
    %1766 = vmatpush1.bf16.msra.mxu0 0
    %1767 = vmatprep.subr.bf16.mxu0 0
    %1768 = vmatpush1.bf16.msra.mxu0 0
    %1769 = vmatprep.subr.bf16.mxu0 0
    %1770 = vmatpush1.bf16.msra.mxu0 0
    %1771 = vmatprep.subr.bf16.mxu0 0
    %1772 = vmatpush1.bf16.msra.mxu0 0
    %1773 = vmatprep.subr.bf16.mxu0 0
    %1774 = vmatpush1.bf16.msra.mxu0 0
    %1775 = vmatprep.subr.bf16.mxu0 0
    %1776 = vmatpush1.bf16.msra.mxu0 0
    %1777 = vmatprep.subr.bf16.mxu0 0
    %1778 = vmatpush1.bf16.msra.mxu0 0
    %1779 = vmatprep.subr.bf16.mxu0 0
    %1780 = vmatpush1.bf16.msra.mxu0 0
    %1781 = vmatprep.subr.bf16.mxu0 0
    %1782 = vmatpush1.bf16.msra.mxu0 0
    %1783 = vmatprep.subr.bf16.mxu0 0
    %1784 = vmatpush1.bf16.msra.mxu0 0
    %1785 = vmatprep.subr.bf16.mxu0 0
    %1786 = vmatpush1.bf16.msra.mxu0 0
    %1787 = vmatprep.subr.bf16.mxu0 0
    %1788 = vmatpush1.bf16.msra.mxu0 0
    %1789 = vmatprep.subr.bf16.mxu0 0
    %1790 = vmatpush1.bf16.msra.mxu0 0
    %1791 = vmatprep.subr.bf16.mxu0 0
    %1792 = vmatpush1.bf16.msra.mxu0 0
    %1793 = vmatprep.mubr.bf16.mxu0 0
    %1794 = vmatmul.mubr.bf16.gmra.mrb[0].mxu0 %v1759
    %v1795 = vpop.f32.mrb[0].mxu0
    %v1796 = vadd.f32 0.0, %v1795
    %v1797 = vpop.f32.mrb[0].mxu0
    %v1798 = vpop.f32.mrb[0].mxu0
    %v1799 = vpop.f32.mrb[0].mxu0
    %1800 = vdwg.mxu0
    %v1801 = vadd.f32 %v1753, %v1796
    %v1802 = vsub.f32 0.0, %v1801
    %v1803 = vmul.f32 %v1802, 1.442695
    %v1804 = vpow.pop %v1803
    %v1805 = vadd.f32 %v1804, 1.0
    %v1806 = vrcp.pop %v1805
    %v1807 = vtanh.pop %v1801
    %v1808 = vmul.f32 %v1806, %v1741
    %1810 = vrot.lane.b32.xlu0 %v1807, 64
    %v1811 = vpop.permute.xlu0 %1810
    %v1813 = vmul.f32 %v1806, %v1811
    %1815 = vrot.lane.b32.xlu0 %v1813, 32
    %v1816 = vpop.permute.xlu0 %1815
    %v1818 = vadd.f32 %v1808, %v1816
    %v1819 = vtanh.pop %v1818
    %1821 = vrot.lane.b32.xlu0 %v1819, 64
    %v1822 = vpop.permute.xlu0 %1821
    %v1824 = vmul.f32 %v1806, %v1822
    %1826 = vrot.lane.b32.xlu0 %v1824, 32
    %v1827 = vpop.permute.xlu0 %1826
    %1829 = vst.msk [vmem:[#allocation3 + $0xa] sm:$0x3] %vm1443, %v1827
    %v1830 = vld [vmem:[#allocation2 + $0xc] sm:$0x3]
    %v1831 = vpack.c.bf16 %v1824, %v1824
    %1833 = vrot.lane.b32.xlu0 %v1831, 32
    %v1834 = vpop.permute.xlu0 %1833
    %v1836 = vsel %vm1371, %v1834, 0
    %1838 = vmatprep.subr.bf16.mxu0 0
    %1839 = vmatpush1.bf16.msra.mxu0 %v771
    %1840 = vmatprep.subr.bf16.mxu0 0
    %1841 = vmatpush1.bf16.msra.mxu0 %v772
    %1842 = vmatprep.subr.bf16.mxu0 0
    %1843 = vmatpush1.bf16.msra.mxu0 0
    %1844 = vmatprep.subr.bf16.mxu0 0
    %1845 = vmatpush1.bf16.msra.mxu0 0
    %1846 = vmatprep.subr.bf16.mxu0 0
    %1847 = vmatpush1.bf16.msra.mxu0 0
    %1848 = vmatprep.subr.bf16.mxu0 0
    %1849 = vmatpush1.bf16.msra.mxu0 0
    %1850 = vmatprep.subr.bf16.mxu0 0
    %1851 = vmatpush1.bf16.msra.mxu0 0
    %1852 = vmatprep.subr.bf16.mxu0 0
    %1853 = vmatpush1.bf16.msra.mxu0 0
    %1854 = vmatprep.subr.bf16.mxu0 0
    %1855 = vmatpush1.bf16.msra.mxu0 0
    %1856 = vmatprep.subr.bf16.mxu0 0
    %1857 = vmatpush1.bf16.msra.mxu0 0
    %1858 = vmatprep.subr.bf16.mxu0 0
    %1859 = vmatpush1.bf16.msra.mxu0 0
    %1860 = vmatprep.subr.bf16.mxu0 0
    %1861 = vmatpush1.bf16.msra.mxu0 0
    %1862 = vmatprep.subr.bf16.mxu0 0
    %1863 = vmatpush1.bf16.msra.mxu0 0
    %1864 = vmatprep.subr.bf16.mxu0 0
    %1865 = vmatpush1.bf16.msra.mxu0 0
    %1866 = vmatprep.subr.bf16.mxu0 0
    %1867 = vmatpush1.bf16.msra.mxu0 0
    %1868 = vmatprep.subr.bf16.mxu0 0
    %1869 = vmatpush1.bf16.msra.mxu0 0
    %1870 = vmatprep.mubr.bf16.mxu0 0
    %1871 = vmatmul.mubr.bf16.gmra.mrb[0].mxu0 %v1836
    %v1872 = vpop.f32.mrb[0].mxu0
    %v1873 = vadd.f32 0.0, %v1872
    %v1874 = vpop.f32.mrb[0].mxu0
    %v1875 = vpop.f32.mrb[0].mxu0
    %v1876 = vpop.f32.mrb[0].mxu0
    %1877 = vdwg.mxu0
    %v1878 = vadd.f32 %v1830, %v1873
    %v1879 = vsub.f32 0.0, %v1878
    %v1880 = vmul.f32 %v1879, 1.442695
    %v1881 = vpow.pop %v1880
    %v1882 = vadd.f32 %v1881, 1.0
    %v1883 = vrcp.pop %v1882
    %v1884 = vtanh.pop %v1878
    %v1885 = vmul.f32 %v1883, %v1818
    %1887 = vrot.lane.b32.xlu0 %v1884, 64
    %v1888 = vpop.permute.xlu0 %1887
    %v1890 = vmul.f32 %v1883, %v1888
    %1892 = vrot.lane.b32.xlu0 %v1890, 32
    %v1893 = vpop.permute.xlu0 %1892
    %v1895 = vadd.f32 %v1885, %v1893
    %v1896 = vtanh.pop %v1895
    %1898 = vrot.lane.b32.xlu0 %v1896, 64
    %v1899 = vpop.permute.xlu0 %1898
    %v1901 = vmul.f32 %v1883, %v1899
    %1903 = vrot.lane.b32.xlu0 %v1901, 32
    %v1904 = vpop.permute.xlu0 %1903
    %1906 = vst.msk [vmem:[#allocation3 + $0xc] sm:$0x3] %vm1443, %v1904
    %v1907 = vld [vmem:[#allocation2 + $0xe] sm:$0x3]
    %v1908 = vpack.c.bf16 %v1901, %v1901
    %1910 = vrot.lane.b32.xlu0 %v1908, 32
    %v1911 = vpop.permute.xlu0 %1910
    %v1913 = vsel %vm1371, %v1911, 0
    %1915 = vmatprep.subr.bf16.mxu0 0
    %1916 = vmatpush1.bf16.msra.mxu0 %v771
    %1917 = vmatprep.subr.bf16.mxu0 0
    %1918 = vmatpush1.bf16.msra.mxu0 %v772
    %1919 = vmatprep.subr.bf16.mxu0 0
    %1920 = vmatpush1.bf16.msra.mxu0 0
    %1921 = vmatprep.subr.bf16.mxu0 0
    %1922 = vmatpush1.bf16.msra.mxu0 0
    %1923 = vmatprep.subr.bf16.mxu0 0
    %1924 = vmatpush1.bf16.msra.mxu0 0
    %1925 = vmatprep.subr.bf16.mxu0 0
    %1926 = vmatpush1.bf16.msra.mxu0 0
    %1927 = vmatprep.subr.bf16.mxu0 0
    %1928 = vmatpush1.bf16.msra.mxu0 0
    %1929 = vmatprep.subr.bf16.mxu0 0
    %1930 = vmatpush1.bf16.msra.mxu0 0
    %1931 = vmatprep.subr.bf16.mxu0 0
    %1932 = vmatpush1.bf16.msra.mxu0 0
    %1933 = vmatprep.subr.bf16.mxu0 0
    %1934 = vmatpush1.bf16.msra.mxu0 0
    %1935 = vmatprep.subr.bf16.mxu0 0
    %1936 = vmatpush1.bf16.msra.mxu0 0
    %1937 = vmatprep.subr.bf16.mxu0 0
    %1938 = vmatpush1.bf16.msra.mxu0 0
    %1939 = vmatprep.subr.bf16.mxu0 0
    %1940 = vmatpush1.bf16.msra.mxu0 0
    %1941 = vmatprep.subr.bf16.mxu0 0
    %1942 = vmatpush1.bf16.msra.mxu0 0
    %1943 = vmatprep.subr.bf16.mxu0 0
    %1944 = vmatpush1.bf16.msra.mxu0 0
    %1945 = vmatprep.subr.bf16.mxu0 0
    %1946 = vmatpush1.bf16.msra.mxu0 0
    %1947 = vmatprep.mubr.bf16.mxu0 0
    %1948 = vmatmul.mubr.bf16.gmra.mrb[0].mxu0 %v1913
    %v1949 = vpop.f32.mrb[0].mxu0
    %v1950 = vadd.f32 0.0, %v1949
    %v1951 = vpop.f32.mrb[0].mxu0
    %v1952 = vpop.f32.mrb[0].mxu0
    %v1953 = vpop.f32.mrb[0].mxu0
    %1954 = vdwg.mxu0
    %v1955 = vadd.f32 %v1907, %v1950
    %v1956 = vsub.f32 0.0, %v1955
    %v1957 = vmul.f32 %v1956, 1.442695
    %v1958 = vpow.pop %v1957
    %v1959 = vadd.f32 %v1958, 1.0
    %v1960 = vrcp.pop %v1959
    %v1961 = vtanh.pop %v1955
    %v1962 = vmul.f32 %v1960, %v1895
    %1964 = vrot.lane.b32.xlu0 %v1961, 64
    %v1965 = vpop.permute.xlu0 %1964
    %v1967 = vmul.f32 %v1960, %v1965
    %1969 = vrot.lane.b32.xlu0 %v1967, 32
    %v1970 = vpop.permute.xlu0 %1969
    %v1972 = vadd.f32 %v1962, %v1970
    %v1973 = vtanh.pop %v1972
    %1975 = vrot.lane.b32.xlu0 %v1973, 64
    %v1976 = vpop.permute.xlu0 %1975
    %v1978 = vmul.f32 %v1960, %v1976
    %1980 = vrot.lane.b32.xlu0 %v1978, 32
    %v1981 = vpop.permute.xlu0 %1980
    %1983 = vst.msk [vmem:[#allocation3 + $0xe] sm:$0x3] %vm1443, %v1981
    %v1984 = vld [vmem:[#allocation2 + $0x10] sm:$0x3]
    %v1985 = vpack.c.bf16 %v1978, %v1978
    %1987 = vrot.lane.b32.xlu0 %v1985, 32
    %v1988 = vpop.permute.xlu0 %1987
    %v1990 = vsel %vm1371, %v1988, 0
    %1992 = vmatprep.subr.bf16.mxu0 0
    %1993 = vmatpush1.bf16.msra.mxu0 %v771
    %1994 = vmatprep.subr.bf16.mxu0 0
    %1995 = vmatpush1.bf16.msra.mxu0 %v772
    %1996 = vmatprep.subr.bf16.mxu0 0
    %1997 = vmatpush1.bf16.msra.mxu0 0
    %1998 = vmatprep.subr.bf16.mxu0 0
    %1999 = vmatpush1.bf16.msra.mxu0 0
    %2000 = vmatprep.subr.bf16.mxu0 0
    %2001 = vmatpush1.bf16.msra.mxu0 0
    %2002 = vmatprep.subr.bf16.mxu0 0
    %2003 = vmatpush1.bf16.msra.mxu0 0
    %2004 = vmatprep.subr.bf16.mxu0 0
    %2005 = vmatpush1.bf16.msra.mxu0 0
    %2006 = vmatprep.subr.bf16.mxu0 0
    %2007 = vmatpush1.bf16.msra.mxu0 0
    %2008 = vmatprep.subr.bf16.mxu0 0
    %2009 = vmatpush1.bf16.msra.mxu0 0
    %2010 = vmatprep.subr.bf16.mxu0 0
    %2011 = vmatpush1.bf16.msra.mxu0 0
    %2012 = vmatprep.subr.bf16.mxu0 0
    %2013 = vmatpush1.bf16.msra.mxu0 0
    %2014 = vmatprep.subr.bf16.mxu0 0
    %2015 = vmatpush1.bf16.msra.mxu0 0
    %2016 = vmatprep.subr.bf16.mxu0 0
    %2017 = vmatpush1.bf16.msra.mxu0 0
    %2018 = vmatprep.subr.bf16.mxu0 0
    %2019 = vmatpush1.bf16.msra.mxu0 0
    %2020 = vmatprep.subr.bf16.mxu0 0
    %2021 = vmatpush1.bf16.msra.mxu0 0
    %2022 = vmatprep.subr.bf16.mxu0 0
    %2023 = vmatpush1.bf16.msra.mxu0 0
    %2024 = vmatprep.mubr.bf16.mxu0 0
    %2025 = vmatmul.mubr.bf16.gmra.mrb[0].mxu0 %v1990
    %v2026 = vpop.f32.mrb[0].mxu0
    %v2027 = vadd.f32 0.0, %v2026
    %v2028 = vpop.f32.mrb[0].mxu0
    %v2029 = vpop.f32.mrb[0].mxu0
    %v2030 = vpop.f32.mrb[0].mxu0
    %2031 = vdwg.mxu0
    %v2032 = vadd.f32 %v1984, %v2027
    %v2033 = vsub.f32 0.0, %v2032
    %v2034 = vmul.f32 %v2033, 1.442695
    %v2035 = vpow.pop %v2034
    %v2036 = vadd.f32 %v2035, 1.0
    %v2037 = vrcp.pop %v2036
    %v2038 = vtanh.pop %v2032
    %v2039 = vmul.f32 %v2037, %v1972
    %2041 = vrot.lane.b32.xlu0 %v2038, 64
    %v2042 = vpop.permute.xlu0 %2041
    %v2044 = vmul.f32 %v2037, %v2042
    %2046 = vrot.lane.b32.xlu0 %v2044, 32
    %v2047 = vpop.permute.xlu0 %2046
    %v2049 = vadd.f32 %v2039, %v2047
    %v2050 = vtanh.pop %v2049
    %2052 = vrot.lane.b32.xlu0 %v2050, 64
    %v2053 = vpop.permute.xlu0 %2052
    %v2055 = vmul.f32 %v2037, %v2053
    %2057 = vrot.lane.b32.xlu0 %v2055, 32
    %v2058 = vpop.permute.xlu0 %2057
    %2060 = vst.msk [vmem:[#allocation3 + $0x10] sm:$0x3] %vm1443, %v2058
    %v2061 = vld [vmem:[#allocation2 + $0x12] sm:$0x3]
    %v2062 = vpack.c.bf16 %v2055, %v2055
    %2064 = vrot.lane.b32.xlu0 %v2062, 32
    %v2065 = vpop.permute.xlu0 %2064
    %v2067 = vsel %vm1371, %v2065, 0
    %2069 = vmatprep.subr.bf16.mxu0 0
    %2070 = vmatpush1.bf16.msra.mxu0 %v771
    %2071 = vmatprep.subr.bf16.mxu0 0
    %2072 = vmatpush1.bf16.msra.mxu0 %v772
    %2073 = vmatprep.subr.bf16.mxu0 0
    %2074 = vmatpush1.bf16.msra.mxu0 0
    %2075 = vmatprep.subr.bf16.mxu0 0
    %2076 = vmatpush1.bf16.msra.mxu0 0
    %2077 = vmatprep.subr.bf16.mxu0 0
    %2078 = vmatpush1.bf16.msra.mxu0 0
    %2079 = vmatprep.subr.bf16.mxu0 0
    %2080 = vmatpush1.bf16.msra.mxu0 0
    %2081 = vmatprep.subr.bf16.mxu0 0
    %2082 = vmatpush1.bf16.msra.mxu0 0
    %2083 = vmatprep.subr.bf16.mxu0 0
    %2084 = vmatpush1.bf16.msra.mxu0 0
    %2085 = vmatprep.subr.bf16.mxu0 0
    %2086 = vmatpush1.bf16.msra.mxu0 0
    %2087 = vmatprep.subr.bf16.mxu0 0
    %2088 = vmatpush1.bf16.msra.mxu0 0
    %2089 = vmatprep.subr.bf16.mxu0 0
    %2090 = vmatpush1.bf16.msra.mxu0 0
    %2091 = vmatprep.subr.bf16.mxu0 0
    %2092 = vmatpush1.bf16.msra.mxu0 0
    %2093 = vmatprep.subr.bf16.mxu0 0
    %2094 = vmatpush1.bf16.msra.mxu0 0
    %2095 = vmatprep.subr.bf16.mxu0 0
    %2096 = vmatpush1.bf16.msra.mxu0 0
    %2097 = vmatprep.subr.bf16.mxu0 0
    %2098 = vmatpush1.bf16.msra.mxu0 0
    %2099 = vmatprep.subr.bf16.mxu0 0
    %2100 = vmatpush1.bf16.msra.mxu0 0
    %2101 = vmatprep.mubr.bf16.mxu0 0
    %2102 = vmatmul.mubr.bf16.gmra.mrb[0].mxu0 %v2067
    %v2103 = vpop.f32.mrb[0].mxu0
    %v2104 = vadd.f32 0.0, %v2103
    %v2105 = vpop.f32.mrb[0].mxu0
    %v2106 = vpop.f32.mrb[0].mxu0
    %v2107 = vpop.f32.mrb[0].mxu0
    %2108 = vdwg.mxu0
    %v2109 = vadd.f32 %v2061, %v2104
    %v2110 = vsub.f32 0.0, %v2109
    %v2111 = vmul.f32 %v2110, 1.442695
    %v2112 = vpow.pop %v2111
    %v2113 = vadd.f32 %v2112, 1.0
    %v2114 = vrcp.pop %v2113
    %v2115 = vtanh.pop %v2109
    %v2116 = vmul.f32 %v2114, %v2049
    %2118 = vrot.lane.b32.xlu0 %v2115, 64
    %v2119 = vpop.permute.xlu0 %2118
    %v2121 = vmul.f32 %v2114, %v2119
    %2123 = vrot.lane.b32.xlu0 %v2121, 32
    %v2124 = vpop.permute.xlu0 %2123
    %v2126 = vadd.f32 %v2116, %v2124
    %v2127 = vtanh.pop %v2126
    %2129 = vrot.lane.b32.xlu0 %v2127, 64
    %v2130 = vpop.permute.xlu0 %2129
    %v2132 = vmul.f32 %v2114, %v2130
    %2134 = vrot.lane.b32.xlu0 %v2132, 32
    %v2135 = vpop.permute.xlu0 %2134
    %2137 = vst.msk [vmem:[#allocation3 + $0x12] sm:$0x3] %vm1443, %v2135
    %v2138 = vld [vmem:[#allocation2 + $0x14] sm:$0x3]
    %v2139 = vpack.c.bf16 %v2132, %v2132
    %2141 = vrot.lane.b32.xlu0 %v2139, 32
    %v2142 = vpop.permute.xlu0 %2141
    %v2144 = vsel %vm1371, %v2142, 0
    %2146 = vmatprep.subr.bf16.mxu0 0
    %2147 = vmatpush1.bf16.msra.mxu0 %v771
    %2148 = vmatprep.subr.bf16.mxu0 0
    %2149 = vmatpush1.bf16.msra.mxu0 %v772
    %2150 = vmatprep.subr.bf16.mxu0 0
    %2151 = vmatpush1.bf16.msra.mxu0 0
    %2152 = vmatprep.subr.bf16.mxu0 0
    %2153 = vmatpush1.bf16.msra.mxu0 0
    %2154 = vmatprep.subr.bf16.mxu0 0
    %2155 = vmatpush1.bf16.msra.mxu0 0
    %2156 = vmatprep.subr.bf16.mxu0 0
    %2157 = vmatpush1.bf16.msra.mxu0 0
    %2158 = vmatprep.subr.bf16.mxu0 0
    %2159 = vmatpush1.bf16.msra.mxu0 0
    %2160 = vmatprep.subr.bf16.mxu0 0
    %2161 = vmatpush1.bf16.msra.mxu0 0
    %2162 = vmatprep.subr.bf16.mxu0 0
    %2163 = vmatpush1.bf16.msra.mxu0 0
    %2164 = vmatprep.subr.bf16.mxu0 0
    %2165 = vmatpush1.bf16.msra.mxu0 0
    %2166 = vmatprep.subr.bf16.mxu0 0
    %2167 = vmatpush1.bf16.msra.mxu0 0
    %2168 = vmatprep.subr.bf16.mxu0 0
    %2169 = vmatpush1.bf16.msra.mxu0 0
    %2170 = vmatprep.subr.bf16.mxu0 0
    %2171 = vmatpush1.bf16.msra.mxu0 0
    %2172 = vmatprep.subr.bf16.mxu0 0
    %2173 = vmatpush1.bf16.msra.mxu0 0
    %2174 = vmatprep.subr.bf16.mxu0 0
    %2175 = vmatpush1.bf16.msra.mxu0 0
    %2176 = vmatprep.subr.bf16.mxu0 0
    %2177 = vmatpush1.bf16.msra.mxu0 0
    %2178 = vmatprep.mubr.bf16.mxu0 0
    %2179 = vmatmul.mubr.bf16.gmra.mrb[0].mxu0 %v2144
    %v2180 = vpop.f32.mrb[0].mxu0
    %v2181 = vadd.f32 0.0, %v2180
    %v2182 = vpop.f32.mrb[0].mxu0
    %v2183 = vpop.f32.mrb[0].mxu0
    %v2184 = vpop.f32.mrb[0].mxu0
    %2185 = vdwg.mxu0
    %v2186 = vadd.f32 %v2138, %v2181
    %v2187 = vsub.f32 0.0, %v2186
    %v2188 = vmul.f32 %v2187, 1.442695
    %v2189 = vpow.pop %v2188
    %v2190 = vadd.f32 %v2189, 1.0
    %v2191 = vrcp.pop %v2190
    %v2192 = vtanh.pop %v2186
    %v2193 = vmul.f32 %v2191, %v2126
    %2195 = vrot.lane.b32.xlu0 %v2192, 64
    %v2196 = vpop.permute.xlu0 %2195
    %v2198 = vmul.f32 %v2191, %v2196
    %2200 = vrot.lane.b32.xlu0 %v2198, 32
    %v2201 = vpop.permute.xlu0 %2200
    %v2203 = vadd.f32 %v2193, %v2201
    %v2204 = vtanh.pop %v2203
    %2206 = vrot.lane.b32.xlu0 %v2204, 64
    %v2207 = vpop.permute.xlu0 %2206
    %v2209 = vmul.f32 %v2191, %v2207
    %2211 = vrot.lane.b32.xlu0 %v2209, 32
    %v2212 = vpop.permute.xlu0 %2211
    %2214 = vst.msk [vmem:[#allocation3 + $0x14] sm:$0x3] %vm1443, %v2212
    %v2215 = vld [vmem:[#allocation2 + $0x16] sm:$0x3]
    %v2216 = vpack.c.bf16 %v2209, %v2209
    %2218 = vrot.lane.b32.xlu0 %v2216, 32
    %v2219 = vpop.permute.xlu0 %2218
    %v2221 = vsel %vm1371, %v2219, 0
    %2223 = vmatprep.subr.bf16.mxu0 0
    %2224 = vmatpush1.bf16.msra.mxu0 %v771
    %2225 = vmatprep.subr.bf16.mxu0 0
    %2226 = vmatpush1.bf16.msra.mxu0 %v772
    %2227 = vmatprep.subr.bf16.mxu0 0
    %2228 = vmatpush1.bf16.msra.mxu0 0
    %2229 = vmatprep.subr.bf16.mxu0 0
    %2230 = vmatpush1.bf16.msra.mxu0 0
    %2231 = vmatprep.subr.bf16.mxu0 0
    %2232 = vmatpush1.bf16.msra.mxu0 0
    %2233 = vmatprep.subr.bf16.mxu0 0
    %2234 = vmatpush1.bf16.msra.mxu0 0
    %2235 = vmatprep.subr.bf16.mxu0 0
    %2236 = vmatpush1.bf16.msra.mxu0 0
    %2237 = vmatprep.subr.bf16.mxu0 0
    %2238 = vmatpush1.bf16.msra.mxu0 0
    %2239 = vmatprep.subr.bf16.mxu0 0
    %2240 = vmatpush1.bf16.msra.mxu0 0
    %2241 = vmatprep.subr.bf16.mxu0 0
    %2242 = vmatpush1.bf16.msra.mxu0 0
    %2243 = vmatprep.subr.bf16.mxu0 0
    %2244 = vmatpush1.bf16.msra.mxu0 0
    %2245 = vmatprep.subr.bf16.mxu0 0
    %2246 = vmatpush1.bf16.msra.mxu0 0
    %2247 = vmatprep.subr.bf16.mxu0 0
    %2248 = vmatpush1.bf16.msra.mxu0 0
    %2249 = vmatprep.subr.bf16.mxu0 0
    %2250 = vmatpush1.bf16.msra.mxu0 0
    %2251 = vmatprep.subr.bf16.mxu0 0
    %2252 = vmatpush1.bf16.msra.mxu0 0
    %2253 = vmatprep.subr.bf16.mxu0 0
    %2254 = vmatpush1.bf16.msra.mxu0 0
    %2255 = vmatprep.mubr.bf16.mxu0 0
    %2256 = vmatmul.mubr.bf16.gmra.mrb[0].mxu0 %v2221
    %v2257 = vpop.f32.mrb[0].mxu0
    %v2258 = vadd.f32 0.0, %v2257
    %v2259 = vpop.f32.mrb[0].mxu0
    %v2260 = vpop.f32.mrb[0].mxu0
    %v2261 = vpop.f32.mrb[0].mxu0
    %2262 = vdwg.mxu0
    %v2263 = vadd.f32 %v2215, %v2258
    %v2264 = vsub.f32 0.0, %v2263
    %v2265 = vmul.f32 %v2264, 1.442695
    %v2266 = vpow.pop %v2265
    %v2267 = vadd.f32 %v2266, 1.0
    %v2268 = vrcp.pop %v2267
    %v2269 = vtanh.pop %v2263
    %v2270 = vmul.f32 %v2268, %v2203
    %2272 = vrot.lane.b32.xlu0 %v2269, 64
    %v2273 = vpop.permute.xlu0 %2272
    %v2275 = vmul.f32 %v2268, %v2273
    %2277 = vrot.lane.b32.xlu0 %v2275, 32
    %v2278 = vpop.permute.xlu0 %2277
    %v2280 = vadd.f32 %v2270, %v2278
    %v2281 = vtanh.pop %v2280
    %2283 = vrot.lane.b32.xlu0 %v2281, 64
    %v2284 = vpop.permute.xlu0 %2283
    %v2286 = vmul.f32 %v2268, %v2284
    %2288 = vrot.lane.b32.xlu0 %v2286, 32
    %v2289 = vpop.permute.xlu0 %2288
    %2291 = vst.msk [vmem:[#allocation3 + $0x16] sm:$0x3] %vm1443, %v2289
    %v2292 = vld [vmem:[#allocation2 + $0x18] sm:$0x3]
    %v2293 = vpack.c.bf16 %v2286, %v2286
    %2295 = vrot.lane.b32.xlu0 %v2293, 32
    %v2296 = vpop.permute.xlu0 %2295
    %v2298 = vsel %vm1371, %v2296, 0
    %2300 = vmatprep.subr.bf16.mxu0 0
    %2301 = vmatpush1.bf16.msra.mxu0 %v771
    %2302 = vmatprep.subr.bf16.mxu0 0
    %2303 = vmatpush1.bf16.msra.mxu0 %v772
    %2304 = vmatprep.subr.bf16.mxu0 0
    %2305 = vmatpush1.bf16.msra.mxu0 0
    %2306 = vmatprep.subr.bf16.mxu0 0
    %2307 = vmatpush1.bf16.msra.mxu0 0
    %2308 = vmatprep.subr.bf16.mxu0 0
    %2309 = vmatpush1.bf16.msra.mxu0 0
    %2310 = vmatprep.subr.bf16.mxu0 0
    %2311 = vmatpush1.bf16.msra.mxu0 0
    %2312 = vmatprep.subr.bf16.mxu0 0
    %2313 = vmatpush1.bf16.msra.mxu0 0
    %2314 = vmatprep.subr.bf16.mxu0 0
    %2315 = vmatpush1.bf16.msra.mxu0 0
    %2316 = vmatprep.subr.bf16.mxu0 0
    %2317 = vmatpush1.bf16.msra.mxu0 0
    %2318 = vmatprep.subr.bf16.mxu0 0
    %2319 = vmatpush1.bf16.msra.mxu0 0
    %2320 = vmatprep.subr.bf16.mxu0 0
    %2321 = vmatpush1.bf16.msra.mxu0 0
    %2322 = vmatprep.subr.bf16.mxu0 0
    %2323 = vmatpush1.bf16.msra.mxu0 0
    %2324 = vmatprep.subr.bf16.mxu0 0
    %2325 = vmatpush1.bf16.msra.mxu0 0
    %2326 = vmatprep.subr.bf16.mxu0 0
    %2327 = vmatpush1.bf16.msra.mxu0 0
    %2328 = vmatprep.subr.bf16.mxu0 0
    %2329 = vmatpush1.bf16.msra.mxu0 0
    %2330 = vmatprep.subr.bf16.mxu0 0
    %2331 = vmatpush1.bf16.msra.mxu0 0
    %2332 = vmatprep.mubr.bf16.mxu0 0
    %2333 = vmatmul.mubr.bf16.gmra.mrb[0].mxu0 %v2298
    %v2334 = vpop.f32.mrb[0].mxu0
    %v2335 = vadd.f32 0.0, %v2334
    %v2336 = vpop.f32.mrb[0].mxu0
    %v2337 = vpop.f32.mrb[0].mxu0
    %v2338 = vpop.f32.mrb[0].mxu0
    %2339 = vdwg.mxu0
    %v2340 = vadd.f32 %v2292, %v2335
    %v2341 = vsub.f32 0.0, %v2340
    %v2342 = vmul.f32 %v2341, 1.442695
    %v2343 = vpow.pop %v2342
    %v2344 = vadd.f32 %v2343, 1.0
    %v2345 = vrcp.pop %v2344
    %v2346 = vtanh.pop %v2340
    %v2347 = vmul.f32 %v2345, %v2280
    %2349 = vrot.lane.b32.xlu0 %v2346, 64
    %v2350 = vpop.permute.xlu0 %2349
    %v2352 = vmul.f32 %v2345, %v2350
    %2354 = vrot.lane.b32.xlu0 %v2352, 32
    %v2355 = vpop.permute.xlu0 %2354
    %v2357 = vadd.f32 %v2347, %v2355
    %v2358 = vtanh.pop %v2357
    %2360 = vrot.lane.b32.xlu0 %v2358, 64
    %v2361 = vpop.permute.xlu0 %2360
    %v2363 = vmul.f32 %v2345, %v2361
    %2365 = vrot.lane.b32.xlu0 %v2363, 32
    %v2366 = vpop.permute.xlu0 %2365
    %2368 = vst.msk [vmem:[#allocation3 + $0x18] sm:$0x3] %vm1443, %v2366
    %v2369 = vld [vmem:[#allocation2 + $0x1a] sm:$0x3]
    %v2370 = vpack.c.bf16 %v2363, %v2363
    %2372 = vrot.lane.b32.xlu0 %v2370, 32
    %v2373 = vpop.permute.xlu0 %2372
    %v2375 = vsel %vm1371, %v2373, 0
    %2377 = vmatprep.subr.bf16.mxu0 0
    %2378 = vmatpush1.bf16.msra.mxu0 %v771
    %2379 = vmatprep.subr.bf16.mxu0 0
    %2380 = vmatpush1.bf16.msra.mxu0 %v772
    %2381 = vmatprep.subr.bf16.mxu0 0
    %2382 = vmatpush1.bf16.msra.mxu0 0
    %2383 = vmatprep.subr.bf16.mxu0 0
    %2384 = vmatpush1.bf16.msra.mxu0 0
    %2385 = vmatprep.subr.bf16.mxu0 0
    %2386 = vmatpush1.bf16.msra.mxu0 0
    %2387 = vmatprep.subr.bf16.mxu0 0
    %2388 = vmatpush1.bf16.msra.mxu0 0
    %2389 = vmatprep.subr.bf16.mxu0 0
    %2390 = vmatpush1.bf16.msra.mxu0 0
    %2391 = vmatprep.subr.bf16.mxu0 0
    %2392 = vmatpush1.bf16.msra.mxu0 0
    %2393 = vmatprep.subr.bf16.mxu0 0
    %2394 = vmatpush1.bf16.msra.mxu0 0
    %2395 = vmatprep.subr.bf16.mxu0 0
    %2396 = vmatpush1.bf16.msra.mxu0 0
    %2397 = vmatprep.subr.bf16.mxu0 0
    %2398 = vmatpush1.bf16.msra.mxu0 0
    %2399 = vmatprep.subr.bf16.mxu0 0
    %2400 = vmatpush1.bf16.msra.mxu0 0
    %2401 = vmatprep.subr.bf16.mxu0 0
    %2402 = vmatpush1.bf16.msra.mxu0 0
    %2403 = vmatprep.subr.bf16.mxu0 0
    %2404 = vmatpush1.bf16.msra.mxu0 0
    %2405 = vmatprep.subr.bf16.mxu0 0
    %2406 = vmatpush1.bf16.msra.mxu0 0
    %2407 = vmatprep.subr.bf16.mxu0 0
    %2408 = vmatpush1.bf16.msra.mxu0 0
    %2409 = vmatprep.mubr.bf16.mxu0 0
    %2410 = vmatmul.mubr.bf16.gmra.mrb[0].mxu0 %v2375
    %v2411 = vpop.f32.mrb[0].mxu0
    %v2412 = vadd.f32 0.0, %v2411
    %v2413 = vpop.f32.mrb[0].mxu0
    %v2414 = vpop.f32.mrb[0].mxu0
    %v2415 = vpop.f32.mrb[0].mxu0
    %2416 = vdwg.mxu0
    %v2417 = vadd.f32 %v2369, %v2412
    %v2418 = vsub.f32 0.0, %v2417
    %v2419 = vmul.f32 %v2418, 1.442695
    %v2420 = vpow.pop %v2419
    %v2421 = vadd.f32 %v2420, 1.0
    %v2422 = vrcp.pop %v2421
    %v2423 = vtanh.pop %v2417
    %v2424 = vmul.f32 %v2422, %v2357
    %2426 = vrot.lane.b32.xlu0 %v2423, 64
    %v2427 = vpop.permute.xlu0 %2426
    %v2429 = vmul.f32 %v2422, %v2427
    %2431 = vrot.lane.b32.xlu0 %v2429, 32
    %v2432 = vpop.permute.xlu0 %2431
    %v2434 = vadd.f32 %v2424, %v2432
    %v2435 = vtanh.pop %v2434
    %2437 = vrot.lane.b32.xlu0 %v2435, 64
    %v2438 = vpop.permute.xlu0 %2437
    %v2440 = vmul.f32 %v2422, %v2438
    %2442 = vrot.lane.b32.xlu0 %v2440, 32
    %v2443 = vpop.permute.xlu0 %2442
    %2445 = vst.msk [vmem:[#allocation3 + $0x1a] sm:$0x3] %vm1443, %v2443
    %v2446 = vld [vmem:[#allocation2 + $0x1c] sm:$0x3]
    %v2447 = vpack.c.bf16 %v2440, %v2440
    %2449 = vrot.lane.b32.xlu0 %v2447, 32
    %v2450 = vpop.permute.xlu0 %2449
    %v2452 = vsel %vm1371, %v2450, 0
    %2454 = vmatprep.subr.bf16.mxu0 0
    %2455 = vmatpush1.bf16.msra.mxu0 %v771
    %2456 = vmatprep.subr.bf16.mxu0 0
    %2457 = vmatpush1.bf16.msra.mxu0 %v772
    %2458 = vmatprep.subr.bf16.mxu0 0
    %2459 = vmatpush1.bf16.msra.mxu0 0
    %2460 = vmatprep.subr.bf16.mxu0 0
    %2461 = vmatpush1.bf16.msra.mxu0 0
    %2462 = vmatprep.subr.bf16.mxu0 0
    %2463 = vmatpush1.bf16.msra.mxu0 0
    %2464 = vmatprep.subr.bf16.mxu0 0
    %2465 = vmatpush1.bf16.msra.mxu0 0
    %2466 = vmatprep.subr.bf16.mxu0 0
    %2467 = vmatpush1.bf16.msra.mxu0 0
    %2468 = vmatprep.subr.bf16.mxu0 0
    %2469 = vmatpush1.bf16.msra.mxu0 0
    %2470 = vmatprep.subr.bf16.mxu0 0
    %2471 = vmatpush1.bf16.msra.mxu0 0
    %2472 = vmatprep.subr.bf16.mxu0 0
    %2473 = vmatpush1.bf16.msra.mxu0 0
    %2474 = vmatprep.subr.bf16.mxu0 0
    %2475 = vmatpush1.bf16.msra.mxu0 0
    %2476 = vmatprep.subr.bf16.mxu0 0
    %2477 = vmatpush1.bf16.msra.mxu0 0
    %2478 = vmatprep.subr.bf16.mxu0 0
    %2479 = vmatpush1.bf16.msra.mxu0 0
    %2480 = vmatprep.subr.bf16.mxu0 0
    %2481 = vmatpush1.bf16.msra.mxu0 0
    %2482 = vmatprep.subr.bf16.mxu0 0
    %2483 = vmatpush1.bf16.msra.mxu0 0
    %2484 = vmatprep.subr.bf16.mxu0 0
    %2485 = vmatpush1.bf16.msra.mxu0 0
    %2486 = vmatprep.mubr.bf16.mxu0 0
    %2487 = vmatmul.mubr.bf16.gmra.mrb[0].mxu0 %v2452
    %v2488 = vpop.f32.mrb[0].mxu0
    %v2489 = vadd.f32 0.0, %v2488
    %v2490 = vpop.f32.mrb[0].mxu0
    %v2491 = vpop.f32.mrb[0].mxu0
    %v2492 = vpop.f32.mrb[0].mxu0
    %2493 = vdwg.mxu0
    %v2494 = vadd.f32 %v2446, %v2489
    %v2495 = vsub.f32 0.0, %v2494
    %v2496 = vmul.f32 %v2495, 1.442695
    %v2497 = vpow.pop %v2496
    %v2498 = vadd.f32 %v2497, 1.0
    %v2499 = vrcp.pop %v2498
    %v2500 = vtanh.pop %v2494
    %v2501 = vmul.f32 %v2499, %v2434
    %2503 = vrot.lane.b32.xlu0 %v2500, 64
    %v2504 = vpop.permute.xlu0 %2503
    %v2506 = vmul.f32 %v2499, %v2504
    %2508 = vrot.lane.b32.xlu0 %v2506, 32
    %v2509 = vpop.permute.xlu0 %2508
    %v2511 = vadd.f32 %v2501, %v2509
    %v2512 = vtanh.pop %v2511
    %2514 = vrot.lane.b32.xlu0 %v2512, 64
    %v2515 = vpop.permute.xlu0 %2514
    %v2517 = vmul.f32 %v2499, %v2515
    %2519 = vrot.lane.b32.xlu0 %v2517, 32
    %v2520 = vpop.permute.xlu0 %2519
    %2522 = vst.msk [vmem:[#allocation3 + $0x1c] sm:$0x3] %vm1443, %v2520
    %v2523 = vld [vmem:[#allocation2 + $0x1e] sm:$0x3]
    %v2524 = vpack.c.bf16 %v2517, %v2517
    %2526 = vrot.lane.b32.xlu0 %v2524, 32
    %v2527 = vpop.permute.xlu0 %2526
    %v2529 = vsel %vm1371, %v2527, 0
    %2531 = vmatprep.subr.bf16.mxu0 0
    %2532 = vmatpush1.bf16.msra.mxu0 %v771
    %2533 = vmatprep.subr.bf16.mxu0 0
    %2534 = vmatpush1.bf16.msra.mxu0 %v772
    %2535 = vmatprep.subr.bf16.mxu0 0
    %2536 = vmatpush1.bf16.msra.mxu0 0
    %2537 = vmatprep.subr.bf16.mxu0 0
    %2538 = vmatpush1.bf16.msra.mxu0 0
    %2539 = vmatprep.subr.bf16.mxu0 0
    %2540 = vmatpush1.bf16.msra.mxu0 0
    %2541 = vmatprep.subr.bf16.mxu0 0
    %2542 = vmatpush1.bf16.msra.mxu0 0
    %2543 = vmatprep.subr.bf16.mxu0 0
    %2544 = vmatpush1.bf16.msra.mxu0 0
    %2545 = vmatprep.subr.bf16.mxu0 0
    %2546 = vmatpush1.bf16.msra.mxu0 0
    %2547 = vmatprep.subr.bf16.mxu0 0
    %2548 = vmatpush1.bf16.msra.mxu0 0
    %2549 = vmatprep.subr.bf16.mxu0 0
    %2550 = vmatpush1.bf16.msra.mxu0 0
    %2551 = vmatprep.subr.bf16.mxu0 0
    %2552 = vmatpush1.bf16.msra.mxu0 0
    %2553 = vmatprep.subr.bf16.mxu0 0
    %2554 = vmatpush1.bf16.msra.mxu0 0
    %2555 = vmatprep.subr.bf16.mxu0 0
    %2556 = vmatpush1.bf16.msra.mxu0 0
    %2557 = vmatprep.subr.bf16.mxu0 0
    %2558 = vmatpush1.bf16.msra.mxu0 0
    %2559 = vmatprep.subr.bf16.mxu0 0
    %2560 = vmatpush1.bf16.msra.mxu0 0
    %2561 = vmatprep.subr.bf16.mxu0 0
    %2562 = vmatpush1.bf16.msra.mxu0 0
    %2563 = vmatprep.mubr.bf16.mxu0 0
    %2564 = vmatmul.mubr.bf16.gmra.mrb[0].mxu0 %v2529
    %v2565 = vpop.f32.mrb[0].mxu0
    %v2566 = vadd.f32 0.0, %v2565
    %v2567 = vpop.f32.mrb[0].mxu0
    %v2568 = vpop.f32.mrb[0].mxu0
    %v2569 = vpop.f32.mrb[0].mxu0
    %2570 = vdwg.mxu0
    %v2571 = vadd.f32 %v2523, %v2566
    %v2572 = vsub.f32 0.0, %v2571
    %v2573 = vmul.f32 %v2572, 1.442695
    %v2574 = vpow.pop %v2573
    %v2575 = vadd.f32 %v2574, 1.0
    %v2576 = vrcp.pop %v2575
    %v2577 = vtanh.pop %v2571
    %v2578 = vmul.f32 %v2576, %v2511
    %2580 = vrot.lane.b32.xlu0 %v2577, 64
    %v2581 = vpop.permute.xlu0 %2580
    %v2583 = vmul.f32 %v2576, %v2581
    %2585 = vrot.lane.b32.xlu0 %v2583, 32
    %v2586 = vpop.permute.xlu0 %2585
    %v2588 = vadd.f32 %v2578, %v2586
    %v2589 = vtanh.pop %v2588
    %2591 = vrot.lane.b32.xlu0 %v2589, 64
    %v2592 = vpop.permute.xlu0 %2591
    %v2594 = vmul.f32 %v2576, %v2592
    %2596 = vrot.lane.b32.xlu0 %v2594, 32
    %v2597 = vpop.permute.xlu0 %2596
    %2599 = vst.msk [vmem:[#allocation3 + $0x1e] sm:$0x3] %vm1443, %v2597
    %v2600 = vld [vmem:[#allocation3] sm:$0xff]
    %v2601 = vld [vmem:[#allocation3 + $0x8] sm:$0xff]
    %v2602 = vld [vmem:[#allocation3 + $0x10] sm:$0xff]
    %v2603 = vld [vmem:[#allocation3 + $0x18] sm:$0xff]
    %v2604 = vld [vmem:[%s3] sm:$0xff]
    %v2605 = vld [vmem:[%s3 + $0x8] sm:$0xff]
    %v2606 = vld [vmem:[%s3 + $0x10] sm:$0xff]
    %v2607 = vld [vmem:[%s3 + $0x18] sm:$0xff]
    %v2608 = vld [vmem:[%s3 + $0x20] sm:$0xff]
    %v2609 = vld [vmem:[%s3 + $0x28] sm:$0xff]
    %v2610 = vld [vmem:[%s3 + $0x30] sm:$0xff]
    %v2611 = vld [vmem:[%s3 + $0x38] sm:$0xff]
    %v2612 = vpack.c.bf16 %v2609, %v2608
    %v2613 = vpack.c.bf16 %v2611, %v2610
    %v2614 = vld [vmem:[%s3 + $0x40] sm:$0x1]
    %v2615 = vlaneseq
    %v2616 = vshrl.u32 %v2615, 7
    %v2617 = vsub.s32 0, %v2616
    %v2618 = vrot.slane %v2614, %v2617
    %v2620 = vsel %vm1371, %v2600, 0
    %v2623 = vsel %vm1371, %v2601, 0
    %v2626 = vsel %vm1371, %v2602, 0
    %v2629 = vsel %vm1371, %v2603, 0
    %2631 = vmatprep.subr.mxu0 0.0
    %v2632 = vand.u32 %v2604, 4294901760
    %2633 = vmatpush1.msra.mxu0 %v2632
    %2634 = vmatprep.subr.mxu0 0.0
    %v2635 = vand.u32 %v2605, 4294901760
    %2636 = vmatpush1.msra.mxu0 %v2635
    %2637 = vmatprep.subr.mxu0 0.0
    %v2638 = vand.u32 %v2606, 4294901760
    %2639 = vmatpush1.msra.mxu0 %v2638
    %2640 = vmatprep.subr.mxu0 0.0
    %v2641 = vand.u32 %v2607, 4294901760
    %2642 = vmatpush1.msra.mxu0 %v2641
    %2643 = vmatprep.subr.mxu0 0.0
    %2644 = vmatpush1.msra.mxu0 0.0
    %2645 = vmatprep.subr.mxu0 0.0
    %2646 = vmatpush1.msra.mxu0 0.0
    %2647 = vmatprep.subr.mxu0 0.0
    %2648 = vmatpush1.msra.mxu0 0.0
    %2649 = vmatprep.subr.mxu0 0.0
    %2650 = vmatpush1.msra.mxu0 0.0
    %2651 = vmatprep.subr.mxu0 0.0
    %2652 = vmatpush1.msra.mxu0 0.0
    %2653 = vmatprep.subr.mxu0 0.0
    %2654 = vmatpush1.msra.mxu0 0.0
    %2655 = vmatprep.subr.mxu0 0.0
    %2656 = vmatpush1.msra.mxu0 0.0
    %2657 = vmatprep.subr.mxu0 0.0
    %2658 = vmatpush1.msra.mxu0 0.0
    %2659 = vmatprep.subr.mxu0 0.0
    %2660 = vmatpush1.msra.mxu0 0.0
    %2661 = vmatprep.subr.mxu0 0.0
    %2662 = vmatpush1.msra.mxu0 0.0
    %2663 = vmatprep.subr.mxu0 0.0
    %2664 = vmatpush1.msra.mxu0 0.0
    %2665 = vmatprep.subr.mxu0 0.0
    %2666 = vmatpush1.msra.mxu0 0.0
    %2667 = vmatprep.subr.mxu0 0.0
    %2668 = vmatpush1.msra.mxu0 0.0
    %2669 = vmatprep.subr.mxu0 0.0
    %2670 = vmatpush1.msra.mxu0 0.0
    %2671 = vmatprep.subr.mxu0 0.0
    %2672 = vmatpush1.msra.mxu0 0.0
    %2673 = vmatprep.subr.mxu0 0.0
    %2674 = vmatpush1.msra.mxu0 0.0
    %2675 = vmatprep.subr.mxu0 0.0
    %2676 = vmatpush1.msra.mxu0 0.0
    %2677 = vmatprep.subr.mxu0 0.0
    %2678 = vmatpush1.msra.mxu0 0.0
    %2679 = vmatprep.subr.mxu0 0.0
    %2680 = vmatpush1.msra.mxu0 0.0
    %2681 = vmatprep.subr.mxu0 0.0
    %2682 = vmatpush1.msra.mxu0 0.0
    %2683 = vmatprep.subr.mxu0 0.0
    %2684 = vmatpush1.msra.mxu0 0.0
    %2685 = vmatprep.subr.mxu0 0.0
    %2686 = vmatpush1.msra.mxu0 0.0
    %2687 = vmatprep.subr.mxu0 0.0
    %2688 = vmatpush1.msra.mxu0 0.0
    %2689 = vmatprep.subr.mxu0 0.0
    %2690 = vmatpush1.msra.mxu0 0.0
    %2691 = vmatprep.subr.mxu0 0.0
    %2692 = vmatpush1.msra.mxu0 0.0
    %2693 = vmatprep.subr.mxu0 0.0
    %2694 = vmatpush1.msra.mxu0 0.0
    %2695 = vmatprep.subr.mxu0 0.0
    %2696 = vmatpush1.msra.mxu0 0.0
    %2697 = vmatprep.subr.mxu0 0.0
    %2698 = vmatpush1.msra.mxu0 0.0
    %2699 = vmatprep.mubr.f32.mxu0 0.0
    %v2700 = vand.u32 %v2620, 4294901760
    %v2701 = vsub.f32 %v2620, %v2700
    %v2702 = vand.u32 %v2701, 4294901760
    %v2703 = vsub.f32 %v2701, %v2702
    %v2704 = vand.u32 %v2703, 4294901760
    %2705 = vmatmul.mubr.f32.gmra.mrb[0].mxu0 %v2704
    %v2706 = vpop.f32.mrb[0].mxu0
    %v2707 = vadd.f32 %v2618, %v2706
    %v2708 = vpop.f32.mrb[0].mxu0
    %2709 = vmatprep.mubr.f32.mxu0 0.0
    %v2710 = vand.u32 %v2623, 4294901760
    %v2711 = vsub.f32 %v2623, %v2710
    %v2712 = vand.u32 %v2711, 4294901760
    %v2713 = vsub.f32 %v2711, %v2712
    %v2714 = vand.u32 %v2713, 4294901760
    %2715 = vmatmul.mubr.f32.gmra.mrb[0].mxu0 %v2714
    %v2716 = vpop.f32.mrb[0].mxu0
    %v2717 = vadd.f32 %v2618, %v2716
    %v2718 = vpop.f32.mrb[0].mxu0
    %2719 = vmatprep.mubr.f32.mxu0 0.0
    %v2720 = vand.u32 %v2626, 4294901760
    %v2721 = vsub.f32 %v2626, %v2720
    %v2722 = vand.u32 %v2721, 4294901760
    %v2723 = vsub.f32 %v2721, %v2722
    %v2724 = vand.u32 %v2723, 4294901760
    %2725 = vmatmul.mubr.f32.gmra.mrb[0].mxu0 %v2724
    %v2726 = vpop.f32.mrb[0].mxu0
    %v2727 = vadd.f32 %v2618, %v2726
    %v2728 = vpop.f32.mrb[0].mxu0
    %2729 = vmatprep.mubr.f32.mxu0 0.0
    %v2730 = vand.u32 %v2629, 4294901760
    %v2731 = vsub.f32 %v2629, %v2730
    %v2732 = vand.u32 %v2731, 4294901760
    %v2733 = vsub.f32 %v2731, %v2732
    %v2734 = vand.u32 %v2733, 4294901760
    %2735 = vmatmul.mubr.f32.gmra.mrb[0].mxu0 %v2734
    %v2736 = vpop.f32.mrb[0].mxu0
    %v2737 = vadd.f32 %v2618, %v2736
    %v2738 = vpop.f32.mrb[0].mxu0
    %2739 = vdwg.mxu0
    %2740 = vmatprep.subr.mxu0 0.0
    %v2741 = vand.u32 %v2604, 4294901760
    %v2742 = vsub.f32 %v2604, %v2741
    %v2743 = vand.u32 %v2742, 4294901760
    %v2744 = vsub.f32 %v2742, %v2743
    %v2745 = vand.u32 %v2744, 4294901760
    %2746 = vmatpush1.msra.mxu0 %v2745
    %2747 = vmatprep.subr.mxu0 0.0
    %v2748 = vand.u32 %v2605, 4294901760
    %v2749 = vsub.f32 %v2605, %v2748
    %v2750 = vand.u32 %v2749, 4294901760
    %v2751 = vsub.f32 %v2749, %v2750
    %v2752 = vand.u32 %v2751, 4294901760
    %2753 = vmatpush1.msra.mxu0 %v2752
    %2754 = vmatprep.subr.mxu0 0.0
    %v2755 = vand.u32 %v2606, 4294901760
    %v2756 = vsub.f32 %v2606, %v2755
    %v2757 = vand.u32 %v2756, 4294901760
    %v2758 = vsub.f32 %v2756, %v2757
    %v2759 = vand.u32 %v2758, 4294901760
    %2760 = vmatpush1.msra.mxu0 %v2759
    %2761 = vmatprep.subr.mxu0 0.0
    %v2762 = vand.u32 %v2607, 4294901760
    %v2763 = vsub.f32 %v2607, %v2762
    %v2764 = vand.u32 %v2763, 4294901760
    %v2765 = vsub.f32 %v2763, %v2764
    %v2766 = vand.u32 %v2765, 4294901760
    %2767 = vmatpush1.msra.mxu0 %v2766
    %2768 = vmatprep.subr.mxu0 0.0
    %2769 = vmatpush1.msra.mxu0 0.0
    %2770 = vmatprep.subr.mxu0 0.0
    %2771 = vmatpush1.msra.mxu0 0.0
    %2772 = vmatprep.subr.mxu0 0.0
    %2773 = vmatpush1.msra.mxu0 0.0
    %2774 = vmatprep.subr.mxu0 0.0
    %2775 = vmatpush1.msra.mxu0 0.0
    %2776 = vmatprep.subr.mxu0 0.0
    %2777 = vmatpush1.msra.mxu0 0.0
    %2778 = vmatprep.subr.mxu0 0.0
    %2779 = vmatpush1.msra.mxu0 0.0
    %2780 = vmatprep.subr.mxu0 0.0
    %2781 = vmatpush1.msra.mxu0 0.0
    %2782 = vmatprep.subr.mxu0 0.0
    %2783 = vmatpush1.msra.mxu0 0.0
    %2784 = vmatprep.subr.mxu0 0.0
    %2785 = vmatpush1.msra.mxu0 0.0
    %2786 = vmatprep.subr.mxu0 0.0
    %2787 = vmatpush1.msra.mxu0 0.0
    %2788 = vmatprep.subr.mxu0 0.0
    %2789 = vmatpush1.msra.mxu0 0.0
    %2790 = vmatprep.subr.mxu0 0.0
    %2791 = vmatpush1.msra.mxu0 0.0
    %2792 = vmatprep.subr.mxu0 0.0
    %2793 = vmatpush1.msra.mxu0 0.0
    %2794 = vmatprep.subr.mxu0 0.0
    %2795 = vmatpush1.msra.mxu0 0.0
    %2796 = vmatprep.subr.mxu0 0.0
    %2797 = vmatpush1.msra.mxu0 0.0
    %2798 = vmatprep.subr.mxu0 0.0
    %2799 = vmatpush1.msra.mxu0 0.0
    %2800 = vmatprep.subr.mxu0 0.0
    %2801 = vmatpush1.msra.mxu0 0.0
    %2802 = vmatprep.subr.mxu0 0.0
    %2803 = vmatpush1.msra.mxu0 0.0
    %2804 = vmatprep.subr.mxu0 0.0
    %2805 = vmatpush1.msra.mxu0 0.0
    %2806 = vmatprep.subr.mxu0 0.0
    %2807 = vmatpush1.msra.mxu0 0.0
    %2808 = vmatprep.subr.mxu0 0.0
    %2809 = vmatpush1.msra.mxu0 0.0
    %2810 = vmatprep.subr.mxu0 0.0
    %2811 = vmatpush1.msra.mxu0 0.0
    %2812 = vmatprep.subr.mxu0 0.0
    %2813 = vmatpush1.msra.mxu0 0.0
    %2814 = vmatprep.subr.mxu0 0.0
    %2815 = vmatpush1.msra.mxu0 0.0
    %2816 = vmatprep.subr.mxu0 0.0
    %2817 = vmatpush1.msra.mxu0 0.0
    %2818 = vmatprep.subr.mxu0 0.0
    %2819 = vmatpush1.msra.mxu0 0.0
    %2820 = vmatprep.subr.mxu0 0.0
    %2821 = vmatpush1.msra.mxu0 0.0
    %2822 = vmatprep.subr.mxu0 0.0
    %2823 = vmatpush1.msra.mxu0 0.0
    %2824 = vmatprep.mubr.f32.mxu0 0.0
    %v2825 = vand.u32 %v2620, 4294901760
    %2826 = vmatmul.mubr.f32.gmra.mrb[0].mxu0 %v2825
    %v2827 = vpop.f32.mrb[0].mxu0
    %v2828 = vadd.f32 %v2707, %v2827
    %v2829 = vpop.f32.mrb[0].mxu0
    %2830 = vmatprep.mubr.f32.mxu0 0.0
    %v2831 = vand.u32 %v2623, 4294901760
    %2832 = vmatmul.mubr.f32.gmra.mrb[0].mxu0 %v2831
    %v2833 = vpop.f32.mrb[0].mxu0
    %v2834 = vadd.f32 %v2717, %v2833
    %v2835 = vpop.f32.mrb[0].mxu0
    %2836 = vmatprep.mubr.f32.mxu0 0.0
    %v2837 = vand.u32 %v2626, 4294901760
    %2838 = vmatmul.mubr.f32.gmra.mrb[0].mxu0 %v2837
    %v2839 = vpop.f32.mrb[0].mxu0
    %v2840 = vadd.f32 %v2727, %v2839
    %v2841 = vpop.f32.mrb[0].mxu0
    %2842 = vmatprep.mubr.f32.mxu0 0.0
    %v2843 = vand.u32 %v2629, 4294901760
    %2844 = vmatmul.mubr.f32.gmra.mrb[0].mxu0 %v2843
    %v2845 = vpop.f32.mrb[0].mxu0
    %v2846 = vadd.f32 %v2737, %v2845
    %v2847 = vpop.f32.mrb[0].mxu0
    %2848 = vdwg.mxu0
    %2849 = vmatprep.subr.mxu0 0.0
    %v2850 = vand.u32 %v2604, 4294901760
    %v2851 = vsub.f32 %v2604, %v2850
    %2852 = vmatpush1.msra.mxu0 %v2851
    %2853 = vmatprep.subr.mxu0 0.0
    %v2854 = vand.u32 %v2605, 4294901760
    %v2855 = vsub.f32 %v2605, %v2854
    %2856 = vmatpush1.msra.mxu0 %v2855
    %2857 = vmatprep.subr.mxu0 0.0
    %v2858 = vand.u32 %v2606, 4294901760
    %v2859 = vsub.f32 %v2606, %v2858
    %2860 = vmatpush1.msra.mxu0 %v2859
    %2861 = vmatprep.subr.mxu0 0.0
    %v2862 = vand.u32 %v2607, 4294901760
    %v2863 = vsub.f32 %v2607, %v2862
    %2864 = vmatpush1.msra.mxu0 %v2863
    %2865 = vmatprep.subr.mxu0 0.0
    %2866 = vmatpush1.msra.mxu0 0.0
    %2867 = vmatprep.subr.mxu0 0.0
    %2868 = vmatpush1.msra.mxu0 0.0
    %2869 = vmatprep.subr.mxu0 0.0
    %2870 = vmatpush1.msra.mxu0 0.0
    %2871 = vmatprep.subr.mxu0 0.0
    %2872 = vmatpush1.msra.mxu0 0.0
    %2873 = vmatprep.subr.mxu0 0.0
    %2874 = vmatpush1.msra.mxu0 0.0
    %2875 = vmatprep.subr.mxu0 0.0
    %2876 = vmatpush1.msra.mxu0 0.0
    %2877 = vmatprep.subr.mxu0 0.0
    %2878 = vmatpush1.msra.mxu0 0.0
    %2879 = vmatprep.subr.mxu0 0.0
    %2880 = vmatpush1.msra.mxu0 0.0
    %2881 = vmatprep.subr.mxu0 0.0
    %2882 = vmatpush1.msra.mxu0 0.0
    %2883 = vmatprep.subr.mxu0 0.0
    %2884 = vmatpush1.msra.mxu0 0.0
    %2885 = vmatprep.subr.mxu0 0.0
    %2886 = vmatpush1.msra.mxu0 0.0
    %2887 = vmatprep.subr.mxu0 0.0
    %2888 = vmatpush1.msra.mxu0 0.0
    %2889 = vmatprep.subr.mxu0 0.0
    %2890 = vmatpush1.msra.mxu0 0.0
    %2891 = vmatprep.subr.mxu0 0.0
    %2892 = vmatpush1.msra.mxu0 0.0
    %2893 = vmatprep.subr.mxu0 0.0
    %2894 = vmatpush1.msra.mxu0 0.0
    %2895 = vmatprep.subr.mxu0 0.0
    %2896 = vmatpush1.msra.mxu0 0.0
    %2897 = vmatprep.subr.mxu0 0.0
    %2898 = vmatpush1.msra.mxu0 0.0
    %2899 = vmatprep.subr.mxu0 0.0
    %2900 = vmatpush1.msra.mxu0 0.0
    %2901 = vmatprep.subr.mxu0 0.0
    %2902 = vmatpush1.msra.mxu0 0.0
    %2903 = vmatprep.subr.mxu0 0.0
    %2904 = vmatpush1.msra.mxu0 0.0
    %2905 = vmatprep.subr.mxu0 0.0
    %2906 = vmatpush1.msra.mxu0 0.0
    %2907 = vmatprep.subr.mxu0 0.0
    %2908 = vmatpush1.msra.mxu0 0.0
    %2909 = vmatprep.subr.mxu0 0.0
    %2910 = vmatpush1.msra.mxu0 0.0
    %2911 = vmatprep.subr.mxu0 0.0
    %2912 = vmatpush1.msra.mxu0 0.0
    %2913 = vmatprep.subr.mxu0 0.0
    %2914 = vmatpush1.msra.mxu0 0.0
    %2915 = vmatprep.subr.mxu0 0.0
    %2916 = vmatpush1.msra.mxu0 0.0
    %2917 = vmatprep.subr.mxu0 0.0
    %2918 = vmatpush1.msra.mxu0 0.0
    %2919 = vmatprep.subr.mxu0 0.0
    %2920 = vmatpush1.msra.mxu0 0.0
    %2921 = vmatprep.mubr.f32.mxu0 0.0
    %v2922 = vand.u32 %v2620, 4294901760
    %v2923 = vsub.f32 %v2620, %v2922
    %2924 = vmatmul.mubr.f32.gmra.mrb[0].mxu0 %v2923
    %v2925 = vpop.f32.mrb[0].mxu0
    %v2926 = vadd.f32 %v2828, %v2925
    %v2927 = vpop.f32.mrb[0].mxu0
    %2928 = vmatprep.mubr.f32.mxu0 0.0
    %v2929 = vand.u32 %v2623, 4294901760
    %v2930 = vsub.f32 %v2623, %v2929
    %2931 = vmatmul.mubr.f32.gmra.mrb[0].mxu0 %v2930
    %v2932 = vpop.f32.mrb[0].mxu0
    %v2933 = vadd.f32 %v2834, %v2932
    %v2934 = vpop.f32.mrb[0].mxu0
    %2935 = vmatprep.mubr.f32.mxu0 0.0
    %v2936 = vand.u32 %v2626, 4294901760
    %v2937 = vsub.f32 %v2626, %v2936
    %2938 = vmatmul.mubr.f32.gmra.mrb[0].mxu0 %v2937
    %v2939 = vpop.f32.mrb[0].mxu0
    %v2940 = vadd.f32 %v2840, %v2939
    %v2941 = vpop.f32.mrb[0].mxu0
    %2942 = vmatprep.mubr.f32.mxu0 0.0
    %v2943 = vand.u32 %v2629, 4294901760
    %v2944 = vsub.f32 %v2629, %v2943
    %2945 = vmatmul.mubr.f32.gmra.mrb[0].mxu0 %v2944
    %v2946 = vpop.f32.mrb[0].mxu0
    %v2947 = vadd.f32 %v2846, %v2946
    %v2948 = vpop.f32.mrb[0].mxu0
    %2949 = vdwg.mxu0
    %2950 = vmatprep.subr.mxu0 0.0
    %v2951 = vand.u32 %v2604, 4294901760
    %2952 = vmatpush1.msra.mxu0 %v2951
    %2953 = vmatprep.subr.mxu0 0.0
    %v2954 = vand.u32 %v2605, 4294901760
    %2955 = vmatpush1.msra.mxu0 %v2954
    %2956 = vmatprep.subr.mxu0 0.0
    %v2957 = vand.u32 %v2606, 4294901760
    %2958 = vmatpush1.msra.mxu0 %v2957
    %2959 = vmatprep.subr.mxu0 0.0
    %v2960 = vand.u32 %v2607, 4294901760
    %2961 = vmatpush1.msra.mxu0 %v2960
    %2962 = vmatprep.subr.mxu0 0.0
    %2963 = vmatpush1.msra.mxu0 0.0
    %2964 = vmatprep.subr.mxu0 0.0
    %2965 = vmatpush1.msra.mxu0 0.0
    %2966 = vmatprep.subr.mxu0 0.0
    %2967 = vmatpush1.msra.mxu0 0.0
    %2968 = vmatprep.subr.mxu0 0.0
    %2969 = vmatpush1.msra.mxu0 0.0
    %2970 = vmatprep.subr.mxu0 0.0
    %2971 = vmatpush1.msra.mxu0 0.0
    %2972 = vmatprep.subr.mxu0 0.0
    %2973 = vmatpush1.msra.mxu0 0.0
    %2974 = vmatprep.subr.mxu0 0.0
    %2975 = vmatpush1.msra.mxu0 0.0
    %2976 = vmatprep.subr.mxu0 0.0
    %2977 = vmatpush1.msra.mxu0 0.0
    %2978 = vmatprep.subr.mxu0 0.0
    %2979 = vmatpush1.msra.mxu0 0.0
    %2980 = vmatprep.subr.mxu0 0.0
    %2981 = vmatpush1.msra.mxu0 0.0
    %2982 = vmatprep.subr.mxu0 0.0
    %2983 = vmatpush1.msra.mxu0 0.0
    %2984 = vmatprep.subr.mxu0 0.0
    %2985 = vmatpush1.msra.mxu0 0.0
    %2986 = vmatprep.subr.mxu0 0.0
    %2987 = vmatpush1.msra.mxu0 0.0
    %2988 = vmatprep.subr.mxu0 0.0
    %2989 = vmatpush1.msra.mxu0 0.0
    %2990 = vmatprep.subr.mxu0 0.0
    %2991 = vmatpush1.msra.mxu0 0.0
    %2992 = vmatprep.subr.mxu0 0.0
    %2993 = vmatpush1.msra.mxu0 0.0
    %2994 = vmatprep.subr.mxu0 0.0
    %2995 = vmatpush1.msra.mxu0 0.0
    %2996 = vmatprep.subr.mxu0 0.0
    %2997 = vmatpush1.msra.mxu0 0.0
    %2998 = vmatprep.subr.mxu0 0.0
    %2999 = vmatpush1.msra.mxu0 0.0
    %3000 = vmatprep.subr.mxu0 0.0
    %3001 = vmatpush1.msra.mxu0 0.0
    %3002 = vmatprep.subr.mxu0 0.0
    %3003 = vmatpush1.msra.mxu0 0.0
    %3004 = vmatprep.subr.mxu0 0.0
    %3005 = vmatpush1.msra.mxu0 0.0
    %3006 = vmatprep.subr.mxu0 0.0
    %3007 = vmatpush1.msra.mxu0 0.0
    %3008 = vmatprep.subr.mxu0 0.0
    %3009 = vmatpush1.msra.mxu0 0.0
    %3010 = vmatprep.subr.mxu0 0.0
    %3011 = vmatpush1.msra.mxu0 0.0
    %3012 = vmatprep.subr.mxu0 0.0
    %3013 = vmatpush1.msra.mxu0 0.0
    %3014 = vmatprep.subr.mxu0 0.0
    %3015 = vmatpush1.msra.mxu0 0.0
    %3016 = vmatprep.subr.mxu0 0.0
    %3017 = vmatpush1.msra.mxu0 0.0
    %3018 = vmatprep.mubr.f32.mxu0 0.0
    %v3019 = vand.u32 %v2620, 4294901760
    %v3020 = vsub.f32 %v2620, %v3019
    %v3021 = vand.u32 %v3020, 4294901760
    %3022 = vmatmul.mubr.f32.gmra.mrb[0].mxu0 %v3021
    %v3023 = vpop.f32.mrb[0].mxu0
    %v3024 = vadd.f32 %v2926, %v3023
    %v3025 = vpop.f32.mrb[0].mxu0
    %3026 = vmatprep.mubr.f32.mxu0 0.0
    %v3027 = vand.u32 %v2623, 4294901760
    %v3028 = vsub.f32 %v2623, %v3027
    %v3029 = vand.u32 %v3028, 4294901760
    %3030 = vmatmul.mubr.f32.gmra.mrb[0].mxu0 %v3029
    %v3031 = vpop.f32.mrb[0].mxu0
    %v3032 = vadd.f32 %v2933, %v3031
    %v3033 = vpop.f32.mrb[0].mxu0
    %3034 = vmatprep.mubr.f32.mxu0 0.0
    %v3035 = vand.u32 %v2626, 4294901760
    %v3036 = vsub.f32 %v2626, %v3035
    %v3037 = vand.u32 %v3036, 4294901760
    %3038 = vmatmul.mubr.f32.gmra.mrb[0].mxu0 %v3037
    %v3039 = vpop.f32.mrb[0].mxu0
    %v3040 = vadd.f32 %v2940, %v3039
    %v3041 = vpop.f32.mrb[0].mxu0
    %3042 = vmatprep.mubr.f32.mxu0 0.0
    %v3043 = vand.u32 %v2629, 4294901760
    %v3044 = vsub.f32 %v2629, %v3043
    %v3045 = vand.u32 %v3044, 4294901760
    %3046 = vmatmul.mubr.f32.gmra.mrb[0].mxu0 %v3045
    %v3047 = vpop.f32.mrb[0].mxu0
    %v3048 = vadd.f32 %v2947, %v3047
    %v3049 = vpop.f32.mrb[0].mxu0
    %3050 = vdwg.mxu0
    %3051 = vmatprep.subr.mxu0 0.0
    %v3052 = vand.u32 %v2604, 4294901760
    %v3053 = vsub.f32 %v2604, %v3052
    %v3054 = vand.u32 %v3053, 4294901760
    %3055 = vmatpush1.msra.mxu0 %v3054
    %3056 = vmatprep.subr.mxu0 0.0
    %v3057 = vand.u32 %v2605, 4294901760
    %v3058 = vsub.f32 %v2605, %v3057
    %v3059 = vand.u32 %v3058, 4294901760
    %3060 = vmatpush1.msra.mxu0 %v3059
    %3061 = vmatprep.subr.mxu0 0.0
    %v3062 = vand.u32 %v2606, 4294901760
    %v3063 = vsub.f32 %v2606, %v3062
    %v3064 = vand.u32 %v3063, 4294901760
    %3065 = vmatpush1.msra.mxu0 %v3064
    %3066 = vmatprep.subr.mxu0 0.0
    %v3067 = vand.u32 %v2607, 4294901760
    %v3068 = vsub.f32 %v2607, %v3067
    %v3069 = vand.u32 %v3068, 4294901760
    %3070 = vmatpush1.msra.mxu0 %v3069
    %3071 = vmatprep.subr.mxu0 0.0
    %3072 = vmatpush1.msra.mxu0 0.0
    %3073 = vmatprep.subr.mxu0 0.0
    %3074 = vmatpush1.msra.mxu0 0.0
    %3075 = vmatprep.subr.mxu0 0.0
    %3076 = vmatpush1.msra.mxu0 0.0
    %3077 = vmatprep.subr.mxu0 0.0
    %3078 = vmatpush1.msra.mxu0 0.0
    %3079 = vmatprep.subr.mxu0 0.0
    %3080 = vmatpush1.msra.mxu0 0.0
    %3081 = vmatprep.subr.mxu0 0.0
    %3082 = vmatpush1.msra.mxu0 0.0
    %3083 = vmatprep.subr.mxu0 0.0
    %3084 = vmatpush1.msra.mxu0 0.0
    %3085 = vmatprep.subr.mxu0 0.0
    %3086 = vmatpush1.msra.mxu0 0.0
    %3087 = vmatprep.subr.mxu0 0.0
    %3088 = vmatpush1.msra.mxu0 0.0
    %3089 = vmatprep.subr.mxu0 0.0
    %3090 = vmatpush1.msra.mxu0 0.0
    %3091 = vmatprep.subr.mxu0 0.0
    %3092 = vmatpush1.msra.mxu0 0.0
    %3093 = vmatprep.subr.mxu0 0.0
    %3094 = vmatpush1.msra.mxu0 0.0
    %3095 = vmatprep.subr.mxu0 0.0
    %3096 = vmatpush1.msra.mxu0 0.0
    %3097 = vmatprep.subr.mxu0 0.0
    %3098 = vmatpush1.msra.mxu0 0.0
    %3099 = vmatprep.subr.mxu0 0.0
    %3100 = vmatpush1.msra.mxu0 0.0
    %3101 = vmatprep.subr.mxu0 0.0
    %3102 = vmatpush1.msra.mxu0 0.0
    %3103 = vmatprep.subr.mxu0 0.0
    %3104 = vmatpush1.msra.mxu0 0.0
    %3105 = vmatprep.subr.mxu0 0.0
    %3106 = vmatpush1.msra.mxu0 0.0
    %3107 = vmatprep.subr.mxu0 0.0
    %3108 = vmatpush1.msra.mxu0 0.0
    %3109 = vmatprep.subr.mxu0 0.0
    %3110 = vmatpush1.msra.mxu0 0.0
    %3111 = vmatprep.subr.mxu0 0.0
    %3112 = vmatpush1.msra.mxu0 0.0
    %3113 = vmatprep.subr.mxu0 0.0
    %3114 = vmatpush1.msra.mxu0 0.0
    %3115 = vmatprep.subr.mxu0 0.0
    %3116 = vmatpush1.msra.mxu0 0.0
    %3117 = vmatprep.subr.mxu0 0.0
    %3118 = vmatpush1.msra.mxu0 0.0
    %3119 = vmatprep.subr.mxu0 0.0
    %3120 = vmatpush1.msra.mxu0 0.0
    %3121 = vmatprep.subr.mxu0 0.0
    %3122 = vmatpush1.msra.mxu0 0.0
    %3123 = vmatprep.subr.mxu0 0.0
    %3124 = vmatpush1.msra.mxu0 0.0
    %3125 = vmatprep.subr.mxu0 0.0
    %3126 = vmatpush1.msra.mxu0 0.0
    %3127 = vmatprep.mubr.f32.mxu0 0.0
    %v3128 = vand.u32 %v2620, 4294901760
    %3129 = vmatmul.mubr.f32.gmra.mrb[0].mxu0 %v3128
    %v3130 = vpop.f32.mrb[0].mxu0
    %v3131 = vadd.f32 %v3024, %v3130
    %v3132 = vpop.f32.mrb[0].mxu0
    %3133 = vmatprep.mubr.f32.mxu0 0.0
    %v3134 = vand.u32 %v2623, 4294901760
    %3135 = vmatmul.mubr.f32.gmra.mrb[0].mxu0 %v3134
    %v3136 = vpop.f32.mrb[0].mxu0
    %v3137 = vadd.f32 %v3032, %v3136
    %v3138 = vpop.f32.mrb[0].mxu0
    %3139 = vmatprep.mubr.f32.mxu0 0.0
    %v3140 = vand.u32 %v2626, 4294901760
    %3141 = vmatmul.mubr.f32.gmra.mrb[0].mxu0 %v3140
    %v3142 = vpop.f32.mrb[0].mxu0
    %v3143 = vadd.f32 %v3040, %v3142
    %v3144 = vpop.f32.mrb[0].mxu0
    %3145 = vmatprep.mubr.f32.mxu0 0.0
    %v3146 = vand.u32 %v2629, 4294901760
    %3147 = vmatmul.mubr.f32.gmra.mrb[0].mxu0 %v3146
    %v3148 = vpop.f32.mrb[0].mxu0
    %v3149 = vadd.f32 %v3048, %v3148
    %v3150 = vpop.f32.mrb[0].mxu0
    %3151 = vdwg.mxu0
    %3152 = vmatprep.subr.mxu0 0.0
    %v3153 = vand.u32 %v2604, 4294901760
    %3154 = vmatpush1.msra.mxu0 %v3153
    %3155 = vmatprep.subr.mxu0 0.0
    %v3156 = vand.u32 %v2605, 4294901760
    %3157 = vmatpush1.msra.mxu0 %v3156
    %3158 = vmatprep.subr.mxu0 0.0
    %v3159 = vand.u32 %v2606, 4294901760
    %3160 = vmatpush1.msra.mxu0 %v3159
    %3161 = vmatprep.subr.mxu0 0.0
    %v3162 = vand.u32 %v2607, 4294901760
    %3163 = vmatpush1.msra.mxu0 %v3162
    %3164 = vmatprep.subr.mxu0 0.0
    %3165 = vmatpush1.msra.mxu0 0.0
    %3166 = vmatprep.subr.mxu0 0.0
    %3167 = vmatpush1.msra.mxu0 0.0
    %3168 = vmatprep.subr.mxu0 0.0
    %3169 = vmatpush1.msra.mxu0 0.0
    %3170 = vmatprep.subr.mxu0 0.0
    %3171 = vmatpush1.msra.mxu0 0.0
    %3172 = vmatprep.subr.mxu0 0.0
    %3173 = vmatpush1.msra.mxu0 0.0
    %3174 = vmatprep.subr.mxu0 0.0
    %3175 = vmatpush1.msra.mxu0 0.0
    %3176 = vmatprep.subr.mxu0 0.0
    %3177 = vmatpush1.msra.mxu0 0.0
    %3178 = vmatprep.subr.mxu0 0.0
    %3179 = vmatpush1.msra.mxu0 0.0
    %3180 = vmatprep.subr.mxu0 0.0
    %3181 = vmatpush1.msra.mxu0 0.0
    %3182 = vmatprep.subr.mxu0 0.0
    %3183 = vmatpush1.msra.mxu0 0.0
    %3184 = vmatprep.subr.mxu0 0.0
    %3185 = vmatpush1.msra.mxu0 0.0
    %3186 = vmatprep.subr.mxu0 0.0
    %3187 = vmatpush1.msra.mxu0 0.0
    %3188 = vmatprep.subr.mxu0 0.0
    %3189 = vmatpush1.msra.mxu0 0.0
    %3190 = vmatprep.subr.mxu0 0.0
    %3191 = vmatpush1.msra.mxu0 0.0
    %3192 = vmatprep.subr.mxu0 0.0
    %3193 = vmatpush1.msra.mxu0 0.0
    %3194 = vmatprep.subr.mxu0 0.0
    %3195 = vmatpush1.msra.mxu0 0.0
    %3196 = vmatprep.subr.mxu0 0.0
    %3197 = vmatpush1.msra.mxu0 0.0
    %3198 = vmatprep.subr.mxu0 0.0
    %3199 = vmatpush1.msra.mxu0 0.0
    %3200 = vmatprep.subr.mxu0 0.0
    %3201 = vmatpush1.msra.mxu0 0.0
    %3202 = vmatprep.subr.mxu0 0.0
    %3203 = vmatpush1.msra.mxu0 0.0
    %3204 = vmatprep.subr.mxu0 0.0
    %3205 = vmatpush1.msra.mxu0 0.0
    %3206 = vmatprep.subr.mxu0 0.0
    %3207 = vmatpush1.msra.mxu0 0.0
    %3208 = vmatprep.subr.mxu0 0.0
    %3209 = vmatpush1.msra.mxu0 0.0
    %3210 = vmatprep.subr.mxu0 0.0
    %3211 = vmatpush1.msra.mxu0 0.0
    %3212 = vmatprep.subr.mxu0 0.0
    %3213 = vmatpush1.msra.mxu0 0.0
    %3214 = vmatprep.subr.mxu0 0.0
    %3215 = vmatpush1.msra.mxu0 0.0
    %3216 = vmatprep.subr.mxu0 0.0
    %3217 = vmatpush1.msra.mxu0 0.0
    %3218 = vmatprep.subr.mxu0 0.0
    %3219 = vmatpush1.msra.mxu0 0.0
    %3220 = vmatprep.mubr.f32.mxu0 0.0
    %v3221 = vand.u32 %v2620, 4294901760
    %3222 = vmatmul.mubr.f32.gmra.mrb[0].mxu0 %v3221
    %v3223 = vpop.f32.mrb[0].mxu0
    %v3224 = vadd.f32 %v3131, %v3223
    %v3225 = vpop.f32.mrb[0].mxu0
    %3226 = vmatprep.mubr.f32.mxu0 0.0
    %v3227 = vand.u32 %v2623, 4294901760
    %3228 = vmatmul.mubr.f32.gmra.mrb[0].mxu0 %v3227
    %v3229 = vpop.f32.mrb[0].mxu0
    %v3230 = vadd.f32 %v3137, %v3229
    %v3231 = vpop.f32.mrb[0].mxu0
    %3232 = vmatprep.mubr.f32.mxu0 0.0
    %v3233 = vand.u32 %v2626, 4294901760
    %3234 = vmatmul.mubr.f32.gmra.mrb[0].mxu0 %v3233
    %v3235 = vpop.f32.mrb[0].mxu0
    %v3236 = vadd.f32 %v3143, %v3235
    %v3237 = vpop.f32.mrb[0].mxu0
    %3238 = vmatprep.mubr.f32.mxu0 0.0
    %v3239 = vand.u32 %v2629, 4294901760
    %3240 = vmatmul.mubr.f32.gmra.mrb[0].mxu0 %v3239
    %v3241 = vpop.f32.mrb[0].mxu0
    %v3242 = vadd.f32 %v3149, %v3241
    %v3243 = vpop.f32.mrb[0].mxu0
    %3244 = vdwg.mxu0
    %3245 = vst [vmem:[#allocation2] sm:$0xff] %v3224
    %3246 = vst [vmem:[#allocation2 + $0x8] sm:$0xff] %v3230
    %3247 = vst [vmem:[#allocation2 + $0x10] sm:$0xff] %v3236
    %3248 = vst [vmem:[#allocation2 + $0x18] sm:$0xff] %v3242
    %v3249 = vld [vmem:[#allocation2] sm:$0x3]
    %3250 = vmatprep.subr.bf16.mxu0 0
    %3251 = vmatpush1.bf16.msra.mxu0 %v2612
    %3252 = vmatprep.subr.bf16.mxu0 0
    %3253 = vmatpush1.bf16.msra.mxu0 %v2613
    %3254 = vmatprep.subr.bf16.mxu0 0
    %3255 = vmatpush1.bf16.msra.mxu0 0
    %3256 = vmatprep.subr.bf16.mxu0 0
    %3257 = vmatpush1.bf16.msra.mxu0 0
    %3258 = vmatprep.subr.bf16.mxu0 0
    %3259 = vmatpush1.bf16.msra.mxu0 0
    %3260 = vmatprep.subr.bf16.mxu0 0
    %3261 = vmatpush1.bf16.msra.mxu0 0
    %3262 = vmatprep.subr.bf16.mxu0 0
    %3263 = vmatpush1.bf16.msra.mxu0 0
    %3264 = vmatprep.subr.bf16.mxu0 0
    %3265 = vmatpush1.bf16.msra.mxu0 0
    %3266 = vmatprep.subr.bf16.mxu0 0
    %3267 = vmatpush1.bf16.msra.mxu0 0
    %3268 = vmatprep.subr.bf16.mxu0 0
    %3269 = vmatpush1.bf16.msra.mxu0 0
    %3270 = vmatprep.subr.bf16.mxu0 0
    %3271 = vmatpush1.bf16.msra.mxu0 0
    %3272 = vmatprep.subr.bf16.mxu0 0
    %3273 = vmatpush1.bf16.msra.mxu0 0
    %3274 = vmatprep.subr.bf16.mxu0 0
    %3275 = vmatpush1.bf16.msra.mxu0 0
    %3276 = vmatprep.subr.bf16.mxu0 0
    %3277 = vmatpush1.bf16.msra.mxu0 0
    %3278 = vmatprep.subr.bf16.mxu0 0
    %3279 = vmatpush1.bf16.msra.mxu0 0
    %3280 = vmatprep.subr.bf16.mxu0 0
    %3281 = vmatpush1.bf16.msra.mxu0 0
    %3282 = vmatprep.mubr.bf16.mxu0 0
    %3283 = vmatmul.mubr.bf16.gmra.mrb[0].mxu0 %v1373
    %v3284 = vpop.f32.mrb[0].mxu0
    %v3285 = vadd.f32 0.0, %v3284
    %v3286 = vpop.f32.mrb[0].mxu0
    %v3287 = vpop.f32.mrb[0].mxu0
    %v3288 = vpop.f32.mrb[0].mxu0
    %3289 = vdwg.mxu0
    %v3290 = vadd.f32 %v3249, %v3285
    %v3291 = vsub.f32 0.0, %v3290
    %v3292 = vmul.f32 %v3291, 1.442695
    %v3293 = vpow.pop %v3292
    %v3294 = vadd.f32 %v3293, 1.0
    %v3295 = vrcp.pop %v3294
    %v3296 = vtanh.pop %v3290
    %v3297 = vmul.f32 %v3295, 0.0
    %3299 = vrot.lane.b32.xlu0 %v3296, 64
    %v3300 = vpop.permute.xlu0 %3299
    %v3302 = vmul.f32 %v3295, %v3300
    %3304 = vrot.lane.b32.xlu0 %v3302, 32
    %v3305 = vpop.permute.xlu0 %3304
    %v3307 = vadd.f32 %v3297, %v3305
    %v3308 = vtanh.pop %v3307
    %3310 = vrot.lane.b32.xlu0 %v3308, 64
    %v3311 = vpop.permute.xlu0 %3310
    %v3313 = vmul.f32 %v3295, %v3311
    %v3315 = vlaneseq
    %v3316 = vshrl.u32 %v3315, 7
    %v3317 = vsub.s32 0, %v3316
    %v3318 = vrot.slane %v765, %v3317
    %3319 = vrot.lane.b32.xlu0 %v3318, 96
    %v3320 = vpop.permute.xlu0 %3319
    %v3322 = vmul.f32 %v3313, %v3320
    %3324 = vrot.lane.b32.xlu0 %v3322, 32
    %v3325 = vpop.permute.xlu0 %3324
    %v3327 = vsel %vm1443, %v3325, 0.0
    %3328 = vadd.xlane.f32.xlu0 %v3327
    %v3329 = vpop.xlane.xlu0 %3328
    %v3331 = vadd.f32 %v3329, %v3318
    %3333 = vrot.lane.b32.xlu0 %v3331, 96
    %v3334 = vpop.permute.xlu0 %3333
    %vm3336 = vcmask 1024
    %3337 = vst.msk [vmem:[%s5] sm:$0x3] %vm3336, %v3334
    %v3338 = vld [vmem:[#allocation2 + $0x2] sm:$0x3]
    %v3339 = vpack.c.bf16 %v3313, %v3313
    %3341 = vrot.lane.b32.xlu0 %v3339, 32
    %v3342 = vpop.permute.xlu0 %3341
    %v3344 = vsel %vm1371, %v3342, 0
    %3346 = vmatprep.subr.bf16.mxu0 0
    %3347 = vmatpush1.bf16.msra.mxu0 %v2612
    %3348 = vmatprep.subr.bf16.mxu0 0
    %3349 = vmatpush1.bf16.msra.mxu0 %v2613
    %3350 = vmatprep.subr.bf16.mxu0 0
    %3351 = vmatpush1.bf16.msra.mxu0 0
    %3352 = vmatprep.subr.bf16.mxu0 0
    %3353 = vmatpush1.bf16.msra.mxu0 0
    %3354 = vmatprep.subr.bf16.mxu0 0
    %3355 = vmatpush1.bf16.msra.mxu0 0
    %3356 = vmatprep.subr.bf16.mxu0 0
    %3357 = vmatpush1.bf16.msra.mxu0 0
    %3358 = vmatprep.subr.bf16.mxu0 0
    %3359 = vmatpush1.bf16.msra.mxu0 0
    %3360 = vmatprep.subr.bf16.mxu0 0
    %3361 = vmatpush1.bf16.msra.mxu0 0
    %3362 = vmatprep.subr.bf16.mxu0 0
    %3363 = vmatpush1.bf16.msra.mxu0 0
    %3364 = vmatprep.subr.bf16.mxu0 0
    %3365 = vmatpush1.bf16.msra.mxu0 0
    %3366 = vmatprep.subr.bf16.mxu0 0
    %3367 = vmatpush1.bf16.msra.mxu0 0
    %3368 = vmatprep.subr.bf16.mxu0 0
    %3369 = vmatpush1.bf16.msra.mxu0 0
    %3370 = vmatprep.subr.bf16.mxu0 0
    %3371 = vmatpush1.bf16.msra.mxu0 0
    %3372 = vmatprep.subr.bf16.mxu0 0
    %3373 = vmatpush1.bf16.msra.mxu0 0
    %3374 = vmatprep.subr.bf16.mxu0 0
    %3375 = vmatpush1.bf16.msra.mxu0 0
    %3376 = vmatprep.subr.bf16.mxu0 0
    %3377 = vmatpush1.bf16.msra.mxu0 0
    %3378 = vmatprep.mubr.bf16.mxu0 0
    %3379 = vmatmul.mubr.bf16.gmra.mrb[0].mxu0 %v3344
    %v3380 = vpop.f32.mrb[0].mxu0
    %v3381 = vadd.f32 0.0, %v3380
    %v3382 = vpop.f32.mrb[0].mxu0
    %v3383 = vpop.f32.mrb[0].mxu0
    %v3384 = vpop.f32.mrb[0].mxu0
    %3385 = vdwg.mxu0
    %v3386 = vadd.f32 %v3338, %v3381
    %v3387 = vsub.f32 0.0, %v3386
    %v3388 = vmul.f32 %v3387, 1.442695
    %v3389 = vpow.pop %v3388
    %v3390 = vadd.f32 %v3389, 1.0
    %v3391 = vrcp.pop %v3390
    %v3392 = vtanh.pop %v3386
    %v3393 = vmul.f32 %v3391, %v3307
    %3395 = vrot.lane.b32.xlu0 %v3392, 64
    %v3396 = vpop.permute.xlu0 %3395
    %v3398 = vmul.f32 %v3391, %v3396
    %3400 = vrot.lane.b32.xlu0 %v3398, 32
    %v3401 = vpop.permute.xlu0 %3400
    %v3403 = vadd.f32 %v3393, %v3401
    %v3404 = vtanh.pop %v3403
    %3406 = vrot.lane.b32.xlu0 %v3404, 64
    %v3407 = vpop.permute.xlu0 %3406
    %v3409 = vmul.f32 %v3391, %v3407
    %v3410 = vmul.f32 %v3409, %v3320
    %3412 = vrot.lane.b32.xlu0 %v3410, 32
    %v3413 = vpop.permute.xlu0 %3412
    %v3415 = vsel %vm1443, %v3413, 0.0
    %3416 = vadd.xlane.f32.xlu0 %v3415
    %v3417 = vpop.xlane.xlu0 %3416
    %v3418 = vadd.f32 %v3417, %v3318
    %3420 = vrot.lane.b32.xlu0 %v3418, 96
    %v3421 = vpop.permute.xlu0 %3420
    %3423 = vst.msk [vmem:[%s5 + $0x2] sm:$0x3] %vm3336, %v3421
    %v3424 = vld [vmem:[#allocation2 + $0x4] sm:$0x3]
    %v3425 = vpack.c.bf16 %v3409, %v3409
    %3427 = vrot.lane.b32.xlu0 %v3425, 32
    %v3428 = vpop.permute.xlu0 %3427
    %v3430 = vsel %vm1371, %v3428, 0
    %3432 = vmatprep.subr.bf16.mxu0 0
    %3433 = vmatpush1.bf16.msra.mxu0 %v2612
    %3434 = vmatprep.subr.bf16.mxu0 0
    %3435 = vmatpush1.bf16.msra.mxu0 %v2613
    %3436 = vmatprep.subr.bf16.mxu0 0
    %3437 = vmatpush1.bf16.msra.mxu0 0
    %3438 = vmatprep.subr.bf16.mxu0 0
    %3439 = vmatpush1.bf16.msra.mxu0 0
    %3440 = vmatprep.subr.bf16.mxu0 0
    %3441 = vmatpush1.bf16.msra.mxu0 0
    %3442 = vmatprep.subr.bf16.mxu0 0
    %3443 = vmatpush1.bf16.msra.mxu0 0
    %3444 = vmatprep.subr.bf16.mxu0 0
    %3445 = vmatpush1.bf16.msra.mxu0 0
    %3446 = vmatprep.subr.bf16.mxu0 0
    %3447 = vmatpush1.bf16.msra.mxu0 0
    %3448 = vmatprep.subr.bf16.mxu0 0
    %3449 = vmatpush1.bf16.msra.mxu0 0
    %3450 = vmatprep.subr.bf16.mxu0 0
    %3451 = vmatpush1.bf16.msra.mxu0 0
    %3452 = vmatprep.subr.bf16.mxu0 0
    %3453 = vmatpush1.bf16.msra.mxu0 0
    %3454 = vmatprep.subr.bf16.mxu0 0
    %3455 = vmatpush1.bf16.msra.mxu0 0
    %3456 = vmatprep.subr.bf16.mxu0 0
    %3457 = vmatpush1.bf16.msra.mxu0 0
    %3458 = vmatprep.subr.bf16.mxu0 0
    %3459 = vmatpush1.bf16.msra.mxu0 0
    %3460 = vmatprep.subr.bf16.mxu0 0
    %3461 = vmatpush1.bf16.msra.mxu0 0
    %3462 = vmatprep.subr.bf16.mxu0 0
    %3463 = vmatpush1.bf16.msra.mxu0 0
    %3464 = vmatprep.mubr.bf16.mxu0 0
    %3465 = vmatmul.mubr.bf16.gmra.mrb[0].mxu0 %v3430
    %v3466 = vpop.f32.mrb[0].mxu0
    %v3467 = vadd.f32 0.0, %v3466
    %v3468 = vpop.f32.mrb[0].mxu0
    %v3469 = vpop.f32.mrb[0].mxu0
    %v3470 = vpop.f32.mrb[0].mxu0
    %3471 = vdwg.mxu0
    %v3472 = vadd.f32 %v3424, %v3467
    %v3473 = vsub.f32 0.0, %v3472
    %v3474 = vmul.f32 %v3473, 1.442695
    %v3475 = vpow.pop %v3474
    %v3476 = vadd.f32 %v3475, 1.0
    %v3477 = vrcp.pop %v3476
    %v3478 = vtanh.pop %v3472
    %v3479 = vmul.f32 %v3477, %v3403
    %3481 = vrot.lane.b32.xlu0 %v3478, 64
    %v3482 = vpop.permute.xlu0 %3481
    %v3484 = vmul.f32 %v3477, %v3482
    %3486 = vrot.lane.b32.xlu0 %v3484, 32
    %v3487 = vpop.permute.xlu0 %3486
    %v3489 = vadd.f32 %v3479, %v3487
    %v3490 = vtanh.pop %v3489
    %3492 = vrot.lane.b32.xlu0 %v3490, 64
    %v3493 = vpop.permute.xlu0 %3492
    %v3495 = vmul.f32 %v3477, %v3493
    %v3496 = vmul.f32 %v3495, %v3320
    %3498 = vrot.lane.b32.xlu0 %v3496, 32
    %v3499 = vpop.permute.xlu0 %3498
    %v3501 = vsel %vm1443, %v3499, 0.0
    %3502 = vadd.xlane.f32.xlu0 %v3501
    %v3503 = vpop.xlane.xlu0 %3502
    %v3504 = vadd.f32 %v3503, %v3318
    %3506 = vrot.lane.b32.xlu0 %v3504, 96
    %v3507 = vpop.permute.xlu0 %3506
    %3509 = vst.msk [vmem:[%s5 + $0x4] sm:$0x3] %vm3336, %v3507
    %v3510 = vld [vmem:[#allocation2 + $0x6] sm:$0x3]
    %v3511 = vpack.c.bf16 %v3495, %v3495
    %3513 = vrot.lane.b32.xlu0 %v3511, 32
    %v3514 = vpop.permute.xlu0 %3513
    %v3516 = vsel %vm1371, %v3514, 0
    %3518 = vmatprep.subr.bf16.mxu0 0
    %3519 = vmatpush1.bf16.msra.mxu0 %v2612
    %3520 = vmatprep.subr.bf16.mxu0 0
    %3521 = vmatpush1.bf16.msra.mxu0 %v2613
    %3522 = vmatprep.subr.bf16.mxu0 0
    %3523 = vmatpush1.bf16.msra.mxu0 0
    %3524 = vmatprep.subr.bf16.mxu0 0
    %3525 = vmatpush1.bf16.msra.mxu0 0
    %3526 = vmatprep.subr.bf16.mxu0 0
    %3527 = vmatpush1.bf16.msra.mxu0 0
    %3528 = vmatprep.subr.bf16.mxu0 0
    %3529 = vmatpush1.bf16.msra.mxu0 0
    %3530 = vmatprep.subr.bf16.mxu0 0
    %3531 = vmatpush1.bf16.msra.mxu0 0
    %3532 = vmatprep.subr.bf16.mxu0 0
    %3533 = vmatpush1.bf16.msra.mxu0 0
    %3534 = vmatprep.subr.bf16.mxu0 0
    %3535 = vmatpush1.bf16.msra.mxu0 0
    %3536 = vmatprep.subr.bf16.mxu0 0
    %3537 = vmatpush1.bf16.msra.mxu0 0
    %3538 = vmatprep.subr.bf16.mxu0 0
    %3539 = vmatpush1.bf16.msra.mxu0 0
    %3540 = vmatprep.subr.bf16.mxu0 0
    %3541 = vmatpush1.bf16.msra.mxu0 0
    %3542 = vmatprep.subr.bf16.mxu0 0
    %3543 = vmatpush1.bf16.msra.mxu0 0
    %3544 = vmatprep.subr.bf16.mxu0 0
    %3545 = vmatpush1.bf16.msra.mxu0 0
    %3546 = vmatprep.subr.bf16.mxu0 0
    %3547 = vmatpush1.bf16.msra.mxu0 0
    %3548 = vmatprep.subr.bf16.mxu0 0
    %3549 = vmatpush1.bf16.msra.mxu0 0
    %3550 = vmatprep.mubr.bf16.mxu0 0
    %3551 = vmatmul.mubr.bf16.gmra.mrb[0].mxu0 %v3516
    %v3552 = vpop.f32.mrb[0].mxu0
    %v3553 = vadd.f32 0.0, %v3552
    %v3554 = vpop.f32.mrb[0].mxu0
    %v3555 = vpop.f32.mrb[0].mxu0
    %v3556 = vpop.f32.mrb[0].mxu0
    %3557 = vdwg.mxu0
    %v3558 = vadd.f32 %v3510, %v3553
    %v3559 = vsub.f32 0.0, %v3558
    %v3560 = vmul.f32 %v3559, 1.442695
    %v3561 = vpow.pop %v3560
    %v3562 = vadd.f32 %v3561, 1.0
    %v3563 = vrcp.pop %v3562
    %v3564 = vtanh.pop %v3558
    %v3565 = vmul.f32 %v3563, %v3489
    %3567 = vrot.lane.b32.xlu0 %v3564, 64
    %v3568 = vpop.permute.xlu0 %3567
    %v3570 = vmul.f32 %v3563, %v3568
    %3572 = vrot.lane.b32.xlu0 %v3570, 32
    %v3573 = vpop.permute.xlu0 %3572
    %v3575 = vadd.f32 %v3565, %v3573
    %v3576 = vtanh.pop %v3575
    %3578 = vrot.lane.b32.xlu0 %v3576, 64
    %v3579 = vpop.permute.xlu0 %3578
    %v3581 = vmul.f32 %v3563, %v3579
    %v3582 = vmul.f32 %v3581, %v3320
    %3584 = vrot.lane.b32.xlu0 %v3582, 32
    %v3585 = vpop.permute.xlu0 %3584
    %v3587 = vsel %vm1443, %v3585, 0.0
    %3588 = vadd.xlane.f32.xlu0 %v3587
    %v3589 = vpop.xlane.xlu0 %3588
    %v3590 = vadd.f32 %v3589, %v3318
    %3592 = vrot.lane.b32.xlu0 %v3590, 96
    %v3593 = vpop.permute.xlu0 %3592
    %3595 = vst.msk [vmem:[%s5 + $0x6] sm:$0x3] %vm3336, %v3593
    %v3596 = vld [vmem:[#allocation2 + $0x8] sm:$0x3]
    %v3597 = vpack.c.bf16 %v3581, %v3581
    %3599 = vrot.lane.b32.xlu0 %v3597, 32
    %v3600 = vpop.permute.xlu0 %3599
    %v3602 = vsel %vm1371, %v3600, 0
    %3604 = vmatprep.subr.bf16.mxu0 0
    %3605 = vmatpush1.bf16.msra.mxu0 %v2612
    %3606 = vmatprep.subr.bf16.mxu0 0
    %3607 = vmatpush1.bf16.msra.mxu0 %v2613
    %3608 = vmatprep.subr.bf16.mxu0 0
    %3609 = vmatpush1.bf16.msra.mxu0 0
    %3610 = vmatprep.subr.bf16.mxu0 0
    %3611 = vmatpush1.bf16.msra.mxu0 0
    %3612 = vmatprep.subr.bf16.mxu0 0
    %3613 = vmatpush1.bf16.msra.mxu0 0
    %3614 = vmatprep.subr.bf16.mxu0 0
    %3615 = vmatpush1.bf16.msra.mxu0 0
    %3616 = vmatprep.subr.bf16.mxu0 0
    %3617 = vmatpush1.bf16.msra.mxu0 0
    %3618 = vmatprep.subr.bf16.mxu0 0
    %3619 = vmatpush1.bf16.msra.mxu0 0
    %3620 = vmatprep.subr.bf16.mxu0 0
    %3621 = vmatpush1.bf16.msra.mxu0 0
    %3622 = vmatprep.subr.bf16.mxu0 0
    %3623 = vmatpush1.bf16.msra.mxu0 0
    %3624 = vmatprep.subr.bf16.mxu0 0
    %3625 = vmatpush1.bf16.msra.mxu0 0
    %3626 = vmatprep.subr.bf16.mxu0 0
    %3627 = vmatpush1.bf16.msra.mxu0 0
    %3628 = vmatprep.subr.bf16.mxu0 0
    %3629 = vmatpush1.bf16.msra.mxu0 0
    %3630 = vmatprep.subr.bf16.mxu0 0
    %3631 = vmatpush1.bf16.msra.mxu0 0
    %3632 = vmatprep.subr.bf16.mxu0 0
    %3633 = vmatpush1.bf16.msra.mxu0 0
    %3634 = vmatprep.subr.bf16.mxu0 0
    %3635 = vmatpush1.bf16.msra.mxu0 0
    %3636 = vmatprep.mubr.bf16.mxu0 0
    %3637 = vmatmul.mubr.bf16.gmra.mrb[0].mxu0 %v3602
    %v3638 = vpop.f32.mrb[0].mxu0
    %v3639 = vadd.f32 0.0, %v3638
    %v3640 = vpop.f32.mrb[0].mxu0
    %v3641 = vpop.f32.mrb[0].mxu0
    %v3642 = vpop.f32.mrb[0].mxu0
    %3643 = vdwg.mxu0
    %v3644 = vadd.f32 %v3596, %v3639
    %v3645 = vsub.f32 0.0, %v3644
    %v3646 = vmul.f32 %v3645, 1.442695
    %v3647 = vpow.pop %v3646
    %v3648 = vadd.f32 %v3647, 1.0
    %v3649 = vrcp.pop %v3648
    %v3650 = vtanh.pop %v3644
    %v3651 = vmul.f32 %v3649, %v3575
    %3653 = vrot.lane.b32.xlu0 %v3650, 64
    %v3654 = vpop.permute.xlu0 %3653
    %v3656 = vmul.f32 %v3649, %v3654
    %3658 = vrot.lane.b32.xlu0 %v3656, 32
    %v3659 = vpop.permute.xlu0 %3658
    %v3661 = vadd.f32 %v3651, %v3659
    %v3662 = vtanh.pop %v3661
    %3664 = vrot.lane.b32.xlu0 %v3662, 64
    %v3665 = vpop.permute.xlu0 %3664
    %v3667 = vmul.f32 %v3649, %v3665
    %v3668 = vmul.f32 %v3667, %v3320
    %3670 = vrot.lane.b32.xlu0 %v3668, 32
    %v3671 = vpop.permute.xlu0 %3670
    %v3673 = vsel %vm1443, %v3671, 0.0
    %3674 = vadd.xlane.f32.xlu0 %v3673
    %v3675 = vpop.xlane.xlu0 %3674
    %v3676 = vadd.f32 %v3675, %v3318
    %3678 = vrot.lane.b32.xlu0 %v3676, 96
    %v3679 = vpop.permute.xlu0 %3678
    %3681 = vst.msk [vmem:[%s5 + $0x8] sm:$0x3] %vm3336, %v3679
    %v3682 = vld [vmem:[#allocation2 + $0xa] sm:$0x3]
    %v3683 = vpack.c.bf16 %v3667, %v3667
    %3685 = vrot.lane.b32.xlu0 %v3683, 32
    %v3686 = vpop.permute.xlu0 %3685
    %v3688 = vsel %vm1371, %v3686, 0
    %3690 = vmatprep.subr.bf16.mxu0 0
    %3691 = vmatpush1.bf16.msra.mxu0 %v2612
    %3692 = vmatprep.subr.bf16.mxu0 0
    %3693 = vmatpush1.bf16.msra.mxu0 %v2613
    %3694 = vmatprep.subr.bf16.mxu0 0
    %3695 = vmatpush1.bf16.msra.mxu0 0
    %3696 = vmatprep.subr.bf16.mxu0 0
    %3697 = vmatpush1.bf16.msra.mxu0 0
    %3698 = vmatprep.subr.bf16.mxu0 0
    %3699 = vmatpush1.bf16.msra.mxu0 0
    %3700 = vmatprep.subr.bf16.mxu0 0
    %3701 = vmatpush1.bf16.msra.mxu0 0
    %3702 = vmatprep.subr.bf16.mxu0 0
    %3703 = vmatpush1.bf16.msra.mxu0 0
    %3704 = vmatprep.subr.bf16.mxu0 0
    %3705 = vmatpush1.bf16.msra.mxu0 0
    %3706 = vmatprep.subr.bf16.mxu0 0
    %3707 = vmatpush1.bf16.msra.mxu0 0
    %3708 = vmatprep.subr.bf16.mxu0 0
    %3709 = vmatpush1.bf16.msra.mxu0 0
    %3710 = vmatprep.subr.bf16.mxu0 0
    %3711 = vmatpush1.bf16.msra.mxu0 0
    %3712 = vmatprep.subr.bf16.mxu0 0
    %3713 = vmatpush1.bf16.msra.mxu0 0
    %3714 = vmatprep.subr.bf16.mxu0 0
    %3715 = vmatpush1.bf16.msra.mxu0 0
    %3716 = vmatprep.subr.bf16.mxu0 0
    %3717 = vmatpush1.bf16.msra.mxu0 0
    %3718 = vmatprep.subr.bf16.mxu0 0
    %3719 = vmatpush1.bf16.msra.mxu0 0
    %3720 = vmatprep.subr.bf16.mxu0 0
    %3721 = vmatpush1.bf16.msra.mxu0 0
    %3722 = vmatprep.mubr.bf16.mxu0 0
    %3723 = vmatmul.mubr.bf16.gmra.mrb[0].mxu0 %v3688
    %v3724 = vpop.f32.mrb[0].mxu0
    %v3725 = vadd.f32 0.0, %v3724
    %v3726 = vpop.f32.mrb[0].mxu0
    %v3727 = vpop.f32.mrb[0].mxu0
    %v3728 = vpop.f32.mrb[0].mxu0
    %3729 = vdwg.mxu0
    %v3730 = vadd.f32 %v3682, %v3725
    %v3731 = vsub.f32 0.0, %v3730
    %v3732 = vmul.f32 %v3731, 1.442695
    %v3733 = vpow.pop %v3732
    %v3734 = vadd.f32 %v3733, 1.0
    %v3735 = vrcp.pop %v3734
    %v3736 = vtanh.pop %v3730
    %v3737 = vmul.f32 %v3735, %v3661
    %3739 = vrot.lane.b32.xlu0 %v3736, 64
    %v3740 = vpop.permute.xlu0 %3739
    %v3742 = vmul.f32 %v3735, %v3740
    %3744 = vrot.lane.b32.xlu0 %v3742, 32
    %v3745 = vpop.permute.xlu0 %3744
    %v3747 = vadd.f32 %v3737, %v3745
    %v3748 = vtanh.pop %v3747
    %3750 = vrot.lane.b32.xlu0 %v3748, 64
    %v3751 = vpop.permute.xlu0 %3750
    %v3753 = vmul.f32 %v3735, %v3751
    %v3754 = vmul.f32 %v3753, %v3320
    %3756 = vrot.lane.b32.xlu0 %v3754, 32
    %v3757 = vpop.permute.xlu0 %3756
    %v3759 = vsel %vm1443, %v3757, 0.0
    %3760 = vadd.xlane.f32.xlu0 %v3759
    %v3761 = vpop.xlane.xlu0 %3760
    %v3762 = vadd.f32 %v3761, %v3318
    %3764 = vrot.lane.b32.xlu0 %v3762, 96
    %v3765 = vpop.permute.xlu0 %3764
    %3767 = vst.msk [vmem:[%s5 + $0xa] sm:$0x3] %vm3336, %v3765
    %v3768 = vld [vmem:[#allocation2 + $0xc] sm:$0x3]
    %v3769 = vpack.c.bf16 %v3753, %v3753
    %3771 = vrot.lane.b32.xlu0 %v3769, 32
    %v3772 = vpop.permute.xlu0 %3771
    %v3774 = vsel %vm1371, %v3772, 0
    %3776 = vmatprep.subr.bf16.mxu0 0
    %3777 = vmatpush1.bf16.msra.mxu0 %v2612
    %3778 = vmatprep.subr.bf16.mxu0 0
    %3779 = vmatpush1.bf16.msra.mxu0 %v2613
    %3780 = vmatprep.subr.bf16.mxu0 0
    %3781 = vmatpush1.bf16.msra.mxu0 0
    %3782 = vmatprep.subr.bf16.mxu0 0
    %3783 = vmatpush1.bf16.msra.mxu0 0
    %3784 = vmatprep.subr.bf16.mxu0 0
    %3785 = vmatpush1.bf16.msra.mxu0 0
    %3786 = vmatprep.subr.bf16.mxu0 0
    %3787 = vmatpush1.bf16.msra.mxu0 0
    %3788 = vmatprep.subr.bf16.mxu0 0
    %3789 = vmatpush1.bf16.msra.mxu0 0
    %3790 = vmatprep.subr.bf16.mxu0 0
    %3791 = vmatpush1.bf16.msra.mxu0 0
    %3792 = vmatprep.subr.bf16.mxu0 0
    %3793 = vmatpush1.bf16.msra.mxu0 0
    %3794 = vmatprep.subr.bf16.mxu0 0
    %3795 = vmatpush1.bf16.msra.mxu0 0
    %3796 = vmatprep.subr.bf16.mxu0 0
    %3797 = vmatpush1.bf16.msra.mxu0 0
    %3798 = vmatprep.subr.bf16.mxu0 0
    %3799 = vmatpush1.bf16.msra.mxu0 0
    %3800 = vmatprep.subr.bf16.mxu0 0
    %3801 = vmatpush1.bf16.msra.mxu0 0
    %3802 = vmatprep.subr.bf16.mxu0 0
    %3803 = vmatpush1.bf16.msra.mxu0 0
    %3804 = vmatprep.subr.bf16.mxu0 0
    %3805 = vmatpush1.bf16.msra.mxu0 0
    %3806 = vmatprep.subr.bf16.mxu0 0
    %3807 = vmatpush1.bf16.msra.mxu0 0
    %3808 = vmatprep.mubr.bf16.mxu0 0
    %3809 = vmatmul.mubr.bf16.gmra.mrb[0].mxu0 %v3774
    %v3810 = vpop.f32.mrb[0].mxu0
    %v3811 = vadd.f32 0.0, %v3810
    %v3812 = vpop.f32.mrb[0].mxu0
    %v3813 = vpop.f32.mrb[0].mxu0
    %v3814 = vpop.f32.mrb[0].mxu0
    %3815 = vdwg.mxu0
    %v3816 = vadd.f32 %v3768, %v3811
    %v3817 = vsub.f32 0.0, %v3816
    %v3818 = vmul.f32 %v3817, 1.442695
    %v3819 = vpow.pop %v3818
    %v3820 = vadd.f32 %v3819, 1.0
    %v3821 = vrcp.pop %v3820
    %v3822 = vtanh.pop %v3816
    %v3823 = vmul.f32 %v3821, %v3747
    %3825 = vrot.lane.b32.xlu0 %v3822, 64
    %v3826 = vpop.permute.xlu0 %3825
    %v3828 = vmul.f32 %v3821, %v3826
    %3830 = vrot.lane.b32.xlu0 %v3828, 32
    %v3831 = vpop.permute.xlu0 %3830
    %v3833 = vadd.f32 %v3823, %v3831
    %v3834 = vtanh.pop %v3833
    %3836 = vrot.lane.b32.xlu0 %v3834, 64
    %v3837 = vpop.permute.xlu0 %3836
    %v3839 = vmul.f32 %v3821, %v3837
    %v3840 = vmul.f32 %v3839, %v3320
    %3842 = vrot.lane.b32.xlu0 %v3840, 32
    %v3843 = vpop.permute.xlu0 %3842
    %v3845 = vsel %vm1443, %v3843, 0.0
    %3846 = vadd.xlane.f32.xlu0 %v3845
    %v3847 = vpop.xlane.xlu0 %3846
    %v3848 = vadd.f32 %v3847, %v3318
    %3850 = vrot.lane.b32.xlu0 %v3848, 96
    %v3851 = vpop.permute.xlu0 %3850
    %3853 = vst.msk [vmem:[%s5 + $0xc] sm:$0x3] %vm3336, %v3851
    %v3854 = vld [vmem:[#allocation2 + $0xe] sm:$0x3]
    %v3855 = vpack.c.bf16 %v3839, %v3839
    %3857 = vrot.lane.b32.xlu0 %v3855, 32
    %v3858 = vpop.permute.xlu0 %3857
    %v3860 = vsel %vm1371, %v3858, 0
    %3862 = vmatprep.subr.bf16.mxu0 0
    %3863 = vmatpush1.bf16.msra.mxu0 %v2612
    %3864 = vmatprep.subr.bf16.mxu0 0
    %3865 = vmatpush1.bf16.msra.mxu0 %v2613
    %3866 = vmatprep.subr.bf16.mxu0 0
    %3867 = vmatpush1.bf16.msra.mxu0 0
    %3868 = vmatprep.subr.bf16.mxu0 0
    %3869 = vmatpush1.bf16.msra.mxu0 0
    %3870 = vmatprep.subr.bf16.mxu0 0
    %3871 = vmatpush1.bf16.msra.mxu0 0
    %3872 = vmatprep.subr.bf16.mxu0 0
    %3873 = vmatpush1.bf16.msra.mxu0 0
    %3874 = vmatprep.subr.bf16.mxu0 0
    %3875 = vmatpush1.bf16.msra.mxu0 0
    %3876 = vmatprep.subr.bf16.mxu0 0
    %3877 = vmatpush1.bf16.msra.mxu0 0
    %3878 = vmatprep.subr.bf16.mxu0 0
    %3879 = vmatpush1.bf16.msra.mxu0 0
    %3880 = vmatprep.subr.bf16.mxu0 0
    %3881 = vmatpush1.bf16.msra.mxu0 0
    %3882 = vmatprep.subr.bf16.mxu0 0
    %3883 = vmatpush1.bf16.msra.mxu0 0
    %3884 = vmatprep.subr.bf16.mxu0 0
    %3885 = vmatpush1.bf16.msra.mxu0 0
    %3886 = vmatprep.subr.bf16.mxu0 0
    %3887 = vmatpush1.bf16.msra.mxu0 0
    %3888 = vmatprep.subr.bf16.mxu0 0
    %3889 = vmatpush1.bf16.msra.mxu0 0
    %3890 = vmatprep.subr.bf16.mxu0 0
    %3891 = vmatpush1.bf16.msra.mxu0 0
    %3892 = vmatprep.subr.bf16.mxu0 0
    %3893 = vmatpush1.bf16.msra.mxu0 0
    %3894 = vmatprep.mubr.bf16.mxu0 0
    %3895 = vmatmul.mubr.bf16.gmra.mrb[0].mxu0 %v3860
    %v3896 = vpop.f32.mrb[0].mxu0
    %v3897 = vadd.f32 0.0, %v3896
    %v3898 = vpop.f32.mrb[0].mxu0
    %v3899 = vpop.f32.mrb[0].mxu0
    %v3900 = vpop.f32.mrb[0].mxu0
    %3901 = vdwg.mxu0
    %v3902 = vadd.f32 %v3854, %v3897
    %v3903 = vsub.f32 0.0, %v3902
    %v3904 = vmul.f32 %v3903, 1.442695
    %v3905 = vpow.pop %v3904
    %v3906 = vadd.f32 %v3905, 1.0
    %v3907 = vrcp.pop %v3906
    %v3908 = vtanh.pop %v3902
    %v3909 = vmul.f32 %v3907, %v3833
    %3911 = vrot.lane.b32.xlu0 %v3908, 64
    %v3912 = vpop.permute.xlu0 %3911
    %v3914 = vmul.f32 %v3907, %v3912
    %3916 = vrot.lane.b32.xlu0 %v3914, 32
    %v3917 = vpop.permute.xlu0 %3916
    %v3919 = vadd.f32 %v3909, %v3917
    %v3920 = vtanh.pop %v3919
    %3922 = vrot.lane.b32.xlu0 %v3920, 64
    %v3923 = vpop.permute.xlu0 %3922
    %v3925 = vmul.f32 %v3907, %v3923
    %v3926 = vmul.f32 %v3925, %v3320
    %3928 = vrot.lane.b32.xlu0 %v3926, 32
    %v3929 = vpop.permute.xlu0 %3928
    %v3931 = vsel %vm1443, %v3929, 0.0
    %3932 = vadd.xlane.f32.xlu0 %v3931
    %v3933 = vpop.xlane.xlu0 %3932
    %v3934 = vadd.f32 %v3933, %v3318
    %3936 = vrot.lane.b32.xlu0 %v3934, 96
    %v3937 = vpop.permute.xlu0 %3936
    %3939 = vst.msk [vmem:[%s5 + $0xe] sm:$0x3] %vm3336, %v3937
    %v3940 = vld [vmem:[#allocation2 + $0x10] sm:$0x3]
    %v3941 = vpack.c.bf16 %v3925, %v3925
    %3943 = vrot.lane.b32.xlu0 %v3941, 32
    %v3944 = vpop.permute.xlu0 %3943
    %v3946 = vsel %vm1371, %v3944, 0
    %3948 = vmatprep.subr.bf16.mxu0 0
    %3949 = vmatpush1.bf16.msra.mxu0 %v2612
    %3950 = vmatprep.subr.bf16.mxu0 0
    %3951 = vmatpush1.bf16.msra.mxu0 %v2613
    %3952 = vmatprep.subr.bf16.mxu0 0
    %3953 = vmatpush1.bf16.msra.mxu0 0
    %3954 = vmatprep.subr.bf16.mxu0 0
    %3955 = vmatpush1.bf16.msra.mxu0 0
    %3956 = vmatprep.subr.bf16.mxu0 0
    %3957 = vmatpush1.bf16.msra.mxu0 0
    %3958 = vmatprep.subr.bf16.mxu0 0
    %3959 = vmatpush1.bf16.msra.mxu0 0
    %3960 = vmatprep.subr.bf16.mxu0 0
    %3961 = vmatpush1.bf16.msra.mxu0 0
    %3962 = vmatprep.subr.bf16.mxu0 0
    %3963 = vmatpush1.bf16.msra.mxu0 0
    %3964 = vmatprep.subr.bf16.mxu0 0
    %3965 = vmatpush1.bf16.msra.mxu0 0
    %3966 = vmatprep.subr.bf16.mxu0 0
    %3967 = vmatpush1.bf16.msra.mxu0 0
    %3968 = vmatprep.subr.bf16.mxu0 0
    %3969 = vmatpush1.bf16.msra.mxu0 0
    %3970 = vmatprep.subr.bf16.mxu0 0
    %3971 = vmatpush1.bf16.msra.mxu0 0
    %3972 = vmatprep.subr.bf16.mxu0 0
    %3973 = vmatpush1.bf16.msra.mxu0 0
    %3974 = vmatprep.subr.bf16.mxu0 0
    %3975 = vmatpush1.bf16.msra.mxu0 0
    %3976 = vmatprep.subr.bf16.mxu0 0
    %3977 = vmatpush1.bf16.msra.mxu0 0
    %3978 = vmatprep.subr.bf16.mxu0 0
    %3979 = vmatpush1.bf16.msra.mxu0 0
    %3980 = vmatprep.mubr.bf16.mxu0 0
    %3981 = vmatmul.mubr.bf16.gmra.mrb[0].mxu0 %v3946
    %v3982 = vpop.f32.mrb[0].mxu0
    %v3983 = vadd.f32 0.0, %v3982
    %v3984 = vpop.f32.mrb[0].mxu0
    %v3985 = vpop.f32.mrb[0].mxu0
    %v3986 = vpop.f32.mrb[0].mxu0
    %3987 = vdwg.mxu0
    %v3988 = vadd.f32 %v3940, %v3983
    %v3989 = vsub.f32 0.0, %v3988
    %v3990 = vmul.f32 %v3989, 1.442695
    %v3991 = vpow.pop %v3990
    %v3992 = vadd.f32 %v3991, 1.0
    %v3993 = vrcp.pop %v3992
    %v3994 = vtanh.pop %v3988
    %v3995 = vmul.f32 %v3993, %v3919
    %3997 = vrot.lane.b32.xlu0 %v3994, 64
    %v3998 = vpop.permute.xlu0 %3997
    %v4000 = vmul.f32 %v3993, %v3998
    %4002 = vrot.lane.b32.xlu0 %v4000, 32
    %v4003 = vpop.permute.xlu0 %4002
    %v4005 = vadd.f32 %v3995, %v4003
    %v4006 = vtanh.pop %v4005
    %4008 = vrot.lane.b32.xlu0 %v4006, 64
    %v4009 = vpop.permute.xlu0 %4008
    %v4011 = vmul.f32 %v3993, %v4009
    %v4012 = vmul.f32 %v4011, %v3320
    %4014 = vrot.lane.b32.xlu0 %v4012, 32
    %v4015 = vpop.permute.xlu0 %4014
    %v4017 = vsel %vm1443, %v4015, 0.0
    %4018 = vadd.xlane.f32.xlu0 %v4017
    %v4019 = vpop.xlane.xlu0 %4018
    %v4020 = vadd.f32 %v4019, %v3318
    %4022 = vrot.lane.b32.xlu0 %v4020, 96
    %v4023 = vpop.permute.xlu0 %4022
    %4025 = vst.msk [vmem:[%s5 + $0x10] sm:$0x3] %vm3336, %v4023
    %v4026 = vld [vmem:[#allocation2 + $0x12] sm:$0x3]
    %v4027 = vpack.c.bf16 %v4011, %v4011
    %4029 = vrot.lane.b32.xlu0 %v4027, 32
    %v4030 = vpop.permute.xlu0 %4029
    %v4032 = vsel %vm1371, %v4030, 0
    %4034 = vmatprep.subr.bf16.mxu0 0
    %4035 = vmatpush1.bf16.msra.mxu0 %v2612
    %4036 = vmatprep.subr.bf16.mxu0 0
    %4037 = vmatpush1.bf16.msra.mxu0 %v2613
    %4038 = vmatprep.subr.bf16.mxu0 0
    %4039 = vmatpush1.bf16.msra.mxu0 0
    %4040 = vmatprep.subr.bf16.mxu0 0
    %4041 = vmatpush1.bf16.msra.mxu0 0
    %4042 = vmatprep.subr.bf16.mxu0 0
    %4043 = vmatpush1.bf16.msra.mxu0 0
    %4044 = vmatprep.subr.bf16.mxu0 0
    %4045 = vmatpush1.bf16.msra.mxu0 0
    %4046 = vmatprep.subr.bf16.mxu0 0
    %4047 = vmatpush1.bf16.msra.mxu0 0
    %4048 = vmatprep.subr.bf16.mxu0 0
    %4049 = vmatpush1.bf16.msra.mxu0 0
    %4050 = vmatprep.subr.bf16.mxu0 0
    %4051 = vmatpush1.bf16.msra.mxu0 0
    %4052 = vmatprep.subr.bf16.mxu0 0
    %4053 = vmatpush1.bf16.msra.mxu0 0
    %4054 = vmatprep.subr.bf16.mxu0 0
    %4055 = vmatpush1.bf16.msra.mxu0 0
    %4056 = vmatprep.subr.bf16.mxu0 0
    %4057 = vmatpush1.bf16.msra.mxu0 0
    %4058 = vmatprep.subr.bf16.mxu0 0
    %4059 = vmatpush1.bf16.msra.mxu0 0
    %4060 = vmatprep.subr.bf16.mxu0 0
    %4061 = vmatpush1.bf16.msra.mxu0 0
    %4062 = vmatprep.subr.bf16.mxu0 0
    %4063 = vmatpush1.bf16.msra.mxu0 0
    %4064 = vmatprep.subr.bf16.mxu0 0
    %4065 = vmatpush1.bf16.msra.mxu0 0
    %4066 = vmatprep.mubr.bf16.mxu0 0
    %4067 = vmatmul.mubr.bf16.gmra.mrb[0].mxu0 %v4032
    %v4068 = vpop.f32.mrb[0].mxu0
    %v4069 = vadd.f32 0.0, %v4068
    %v4070 = vpop.f32.mrb[0].mxu0
    %v4071 = vpop.f32.mrb[0].mxu0
    %v4072 = vpop.f32.mrb[0].mxu0
    %4073 = vdwg.mxu0
    %v4074 = vadd.f32 %v4026, %v4069
    %v4075 = vsub.f32 0.0, %v4074
    %v4076 = vmul.f32 %v4075, 1.442695
    %v4077 = vpow.pop %v4076
    %v4078 = vadd.f32 %v4077, 1.0
    %v4079 = vrcp.pop %v4078
    %v4080 = vtanh.pop %v4074
    %v4081 = vmul.f32 %v4079, %v4005
    %4083 = vrot.lane.b32.xlu0 %v4080, 64
    %v4084 = vpop.permute.xlu0 %4083
    %v4086 = vmul.f32 %v4079, %v4084
    %4088 = vrot.lane.b32.xlu0 %v4086, 32
    %v4089 = vpop.permute.xlu0 %4088
    %v4091 = vadd.f32 %v4081, %v4089
    %v4092 = vtanh.pop %v4091
    %4094 = vrot.lane.b32.xlu0 %v4092, 64
    %v4095 = vpop.permute.xlu0 %4094
    %v4097 = vmul.f32 %v4079, %v4095
    %v4098 = vmul.f32 %v4097, %v3320
    %4100 = vrot.lane.b32.xlu0 %v4098, 32
    %v4101 = vpop.permute.xlu0 %4100
    %v4103 = vsel %vm1443, %v4101, 0.0
    %4104 = vadd.xlane.f32.xlu0 %v4103
    %v4105 = vpop.xlane.xlu0 %4104
    %v4106 = vadd.f32 %v4105, %v3318
    %4108 = vrot.lane.b32.xlu0 %v4106, 96
    %v4109 = vpop.permute.xlu0 %4108
    %4111 = vst.msk [vmem:[%s5 + $0x12] sm:$0x3] %vm3336, %v4109
    %v4112 = vld [vmem:[#allocation2 + $0x14] sm:$0x3]
    %v4113 = vpack.c.bf16 %v4097, %v4097
    %4115 = vrot.lane.b32.xlu0 %v4113, 32
    %v4116 = vpop.permute.xlu0 %4115
    %v4118 = vsel %vm1371, %v4116, 0
    %4120 = vmatprep.subr.bf16.mxu0 0
    %4121 = vmatpush1.bf16.msra.mxu0 %v2612
    %4122 = vmatprep.subr.bf16.mxu0 0
    %4123 = vmatpush1.bf16.msra.mxu0 %v2613
    %4124 = vmatprep.subr.bf16.mxu0 0
    %4125 = vmatpush1.bf16.msra.mxu0 0
    %4126 = vmatprep.subr.bf16.mxu0 0
    %4127 = vmatpush1.bf16.msra.mxu0 0
    %4128 = vmatprep.subr.bf16.mxu0 0
    %4129 = vmatpush1.bf16.msra.mxu0 0
    %4130 = vmatprep.subr.bf16.mxu0 0
    %4131 = vmatpush1.bf16.msra.mxu0 0
    %4132 = vmatprep.subr.bf16.mxu0 0
    %4133 = vmatpush1.bf16.msra.mxu0 0
    %4134 = vmatprep.subr.bf16.mxu0 0
    %4135 = vmatpush1.bf16.msra.mxu0 0
    %4136 = vmatprep.subr.bf16.mxu0 0
    %4137 = vmatpush1.bf16.msra.mxu0 0
    %4138 = vmatprep.subr.bf16.mxu0 0
    %4139 = vmatpush1.bf16.msra.mxu0 0
    %4140 = vmatprep.subr.bf16.mxu0 0
    %4141 = vmatpush1.bf16.msra.mxu0 0
    %4142 = vmatprep.subr.bf16.mxu0 0
    %4143 = vmatpush1.bf16.msra.mxu0 0
    %4144 = vmatprep.subr.bf16.mxu0 0
    %4145 = vmatpush1.bf16.msra.mxu0 0
    %4146 = vmatprep.subr.bf16.mxu0 0
    %4147 = vmatpush1.bf16.msra.mxu0 0
    %4148 = vmatprep.subr.bf16.mxu0 0
    %4149 = vmatpush1.bf16.msra.mxu0 0
    %4150 = vmatprep.subr.bf16.mxu0 0
    %4151 = vmatpush1.bf16.msra.mxu0 0
    %4152 = vmatprep.mubr.bf16.mxu0 0
    %4153 = vmatmul.mubr.bf16.gmra.mrb[0].mxu0 %v4118
    %v4154 = vpop.f32.mrb[0].mxu0
    %v4155 = vadd.f32 0.0, %v4154
    %v4156 = vpop.f32.mrb[0].mxu0
    %v4157 = vpop.f32.mrb[0].mxu0
    %v4158 = vpop.f32.mrb[0].mxu0
    %4159 = vdwg.mxu0
    %v4160 = vadd.f32 %v4112, %v4155
    %v4161 = vsub.f32 0.0, %v4160
    %v4162 = vmul.f32 %v4161, 1.442695
    %v4163 = vpow.pop %v4162
    %v4164 = vadd.f32 %v4163, 1.0
    %v4165 = vrcp.pop %v4164
    %v4166 = vtanh.pop %v4160
    %v4167 = vmul.f32 %v4165, %v4091
    %4169 = vrot.lane.b32.xlu0 %v4166, 64
    %v4170 = vpop.permute.xlu0 %4169
    %v4172 = vmul.f32 %v4165, %v4170
    %4174 = vrot.lane.b32.xlu0 %v4172, 32
    %v4175 = vpop.permute.xlu0 %4174
    %v4177 = vadd.f32 %v4167, %v4175
    %v4178 = vtanh.pop %v4177
    %4180 = vrot.lane.b32.xlu0 %v4178, 64
    %v4181 = vpop.permute.xlu0 %4180
    %v4183 = vmul.f32 %v4165, %v4181
    %v4184 = vmul.f32 %v4183, %v3320
    %4186 = vrot.lane.b32.xlu0 %v4184, 32
    %v4187 = vpop.permute.xlu0 %4186
    %v4189 = vsel %vm1443, %v4187, 0.0
    %4190 = vadd.xlane.f32.xlu0 %v4189
    %v4191 = vpop.xlane.xlu0 %4190
    %v4192 = vadd.f32 %v4191, %v3318
    %4194 = vrot.lane.b32.xlu0 %v4192, 96
    %v4195 = vpop.permute.xlu0 %4194
    %4197 = vst.msk [vmem:[%s5 + $0x14] sm:$0x3] %vm3336, %v4195
    %v4198 = vld [vmem:[#allocation2 + $0x16] sm:$0x3]
    %v4199 = vpack.c.bf16 %v4183, %v4183
    %4201 = vrot.lane.b32.xlu0 %v4199, 32
    %v4202 = vpop.permute.xlu0 %4201
    %v4204 = vsel %vm1371, %v4202, 0
    %4206 = vmatprep.subr.bf16.mxu0 0
    %4207 = vmatpush1.bf16.msra.mxu0 %v2612
    %4208 = vmatprep.subr.bf16.mxu0 0
    %4209 = vmatpush1.bf16.msra.mxu0 %v2613
    %4210 = vmatprep.subr.bf16.mxu0 0
    %4211 = vmatpush1.bf16.msra.mxu0 0
    %4212 = vmatprep.subr.bf16.mxu0 0
    %4213 = vmatpush1.bf16.msra.mxu0 0
    %4214 = vmatprep.subr.bf16.mxu0 0
    %4215 = vmatpush1.bf16.msra.mxu0 0
    %4216 = vmatprep.subr.bf16.mxu0 0
    %4217 = vmatpush1.bf16.msra.mxu0 0
    %4218 = vmatprep.subr.bf16.mxu0 0
    %4219 = vmatpush1.bf16.msra.mxu0 0
    %4220 = vmatprep.subr.bf16.mxu0 0
    %4221 = vmatpush1.bf16.msra.mxu0 0
    %4222 = vmatprep.subr.bf16.mxu0 0
    %4223 = vmatpush1.bf16.msra.mxu0 0
    %4224 = vmatprep.subr.bf16.mxu0 0
    %4225 = vmatpush1.bf16.msra.mxu0 0
    %4226 = vmatprep.subr.bf16.mxu0 0
    %4227 = vmatpush1.bf16.msra.mxu0 0
    %4228 = vmatprep.subr.bf16.mxu0 0
    %4229 = vmatpush1.bf16.msra.mxu0 0
    %4230 = vmatprep.subr.bf16.mxu0 0
    %4231 = vmatpush1.bf16.msra.mxu0 0
    %4232 = vmatprep.subr.bf16.mxu0 0
    %4233 = vmatpush1.bf16.msra.mxu0 0
    %4234 = vmatprep.subr.bf16.mxu0 0
    %4235 = vmatpush1.bf16.msra.mxu0 0
    %4236 = vmatprep.subr.bf16.mxu0 0
    %4237 = vmatpush1.bf16.msra.mxu0 0
    %4238 = vmatprep.mubr.bf16.mxu0 0
    %4239 = vmatmul.mubr.bf16.gmra.mrb[0].mxu0 %v4204
    %v4240 = vpop.f32.mrb[0].mxu0
    %v4241 = vadd.f32 0.0, %v4240
    %v4242 = vpop.f32.mrb[0].mxu0
    %v4243 = vpop.f32.mrb[0].mxu0
    %v4244 = vpop.f32.mrb[0].mxu0
    %4245 = vdwg.mxu0
    %v4246 = vadd.f32 %v4198, %v4241
    %v4247 = vsub.f32 0.0, %v4246
    %v4248 = vmul.f32 %v4247, 1.442695
    %v4249 = vpow.pop %v4248
    %v4250 = vadd.f32 %v4249, 1.0
    %v4251 = vrcp.pop %v4250
    %v4252 = vtanh.pop %v4246
    %v4253 = vmul.f32 %v4251, %v4177
    %4255 = vrot.lane.b32.xlu0 %v4252, 64
    %v4256 = vpop.permute.xlu0 %4255
    %v4258 = vmul.f32 %v4251, %v4256
    %4260 = vrot.lane.b32.xlu0 %v4258, 32
    %v4261 = vpop.permute.xlu0 %4260
    %v4263 = vadd.f32 %v4253, %v4261
    %v4264 = vtanh.pop %v4263
    %4266 = vrot.lane.b32.xlu0 %v4264, 64
    %v4267 = vpop.permute.xlu0 %4266
    %v4269 = vmul.f32 %v4251, %v4267
    %v4270 = vmul.f32 %v4269, %v3320
    %4272 = vrot.lane.b32.xlu0 %v4270, 32
    %v4273 = vpop.permute.xlu0 %4272
    %v4275 = vsel %vm1443, %v4273, 0.0
    %4276 = vadd.xlane.f32.xlu0 %v4275
    %v4277 = vpop.xlane.xlu0 %4276
    %v4278 = vadd.f32 %v4277, %v3318
    %4280 = vrot.lane.b32.xlu0 %v4278, 96
    %v4281 = vpop.permute.xlu0 %4280
    %4283 = vst.msk [vmem:[%s5 + $0x16] sm:$0x3] %vm3336, %v4281
    %v4284 = vld [vmem:[#allocation2 + $0x18] sm:$0x3]
    %v4285 = vpack.c.bf16 %v4269, %v4269
    %4287 = vrot.lane.b32.xlu0 %v4285, 32
    %v4288 = vpop.permute.xlu0 %4287
    %v4290 = vsel %vm1371, %v4288, 0
    %4292 = vmatprep.subr.bf16.mxu0 0
    %4293 = vmatpush1.bf16.msra.mxu0 %v2612
    %4294 = vmatprep.subr.bf16.mxu0 0
    %4295 = vmatpush1.bf16.msra.mxu0 %v2613
    %4296 = vmatprep.subr.bf16.mxu0 0
    %4297 = vmatpush1.bf16.msra.mxu0 0
    %4298 = vmatprep.subr.bf16.mxu0 0
    %4299 = vmatpush1.bf16.msra.mxu0 0
    %4300 = vmatprep.subr.bf16.mxu0 0
    %4301 = vmatpush1.bf16.msra.mxu0 0
    %4302 = vmatprep.subr.bf16.mxu0 0
    %4303 = vmatpush1.bf16.msra.mxu0 0
    %4304 = vmatprep.subr.bf16.mxu0 0
    %4305 = vmatpush1.bf16.msra.mxu0 0
    %4306 = vmatprep.subr.bf16.mxu0 0
    %4307 = vmatpush1.bf16.msra.mxu0 0
    %4308 = vmatprep.subr.bf16.mxu0 0
    %4309 = vmatpush1.bf16.msra.mxu0 0
    %4310 = vmatprep.subr.bf16.mxu0 0
    %4311 = vmatpush1.bf16.msra.mxu0 0
    %4312 = vmatprep.subr.bf16.mxu0 0
    %4313 = vmatpush1.bf16.msra.mxu0 0
    %4314 = vmatprep.subr.bf16.mxu0 0
    %4315 = vmatpush1.bf16.msra.mxu0 0
    %4316 = vmatprep.subr.bf16.mxu0 0
    %4317 = vmatpush1.bf16.msra.mxu0 0
    %4318 = vmatprep.subr.bf16.mxu0 0
    %4319 = vmatpush1.bf16.msra.mxu0 0
    %4320 = vmatprep.subr.bf16.mxu0 0
    %4321 = vmatpush1.bf16.msra.mxu0 0
    %4322 = vmatprep.subr.bf16.mxu0 0
    %4323 = vmatpush1.bf16.msra.mxu0 0
    %4324 = vmatprep.mubr.bf16.mxu0 0
    %4325 = vmatmul.mubr.bf16.gmra.mrb[0].mxu0 %v4290
    %v4326 = vpop.f32.mrb[0].mxu0
    %v4327 = vadd.f32 0.0, %v4326
    %v4328 = vpop.f32.mrb[0].mxu0
    %v4329 = vpop.f32.mrb[0].mxu0
    %v4330 = vpop.f32.mrb[0].mxu0
    %4331 = vdwg.mxu0
    %v4332 = vadd.f32 %v4284, %v4327
    %v4333 = vsub.f32 0.0, %v4332
    %v4334 = vmul.f32 %v4333, 1.442695
    %v4335 = vpow.pop %v4334
    %v4336 = vadd.f32 %v4335, 1.0
    %v4337 = vrcp.pop %v4336
    %v4338 = vtanh.pop %v4332
    %v4339 = vmul.f32 %v4337, %v4263
    %4341 = vrot.lane.b32.xlu0 %v4338, 64
    %v4342 = vpop.permute.xlu0 %4341
    %v4344 = vmul.f32 %v4337, %v4342
    %4346 = vrot.lane.b32.xlu0 %v4344, 32
    %v4347 = vpop.permute.xlu0 %4346
    %v4349 = vadd.f32 %v4339, %v4347
    %v4350 = vtanh.pop %v4349
    %4352 = vrot.lane.b32.xlu0 %v4350, 64
    %v4353 = vpop.permute.xlu0 %4352
    %v4355 = vmul.f32 %v4337, %v4353
    %v4356 = vmul.f32 %v4355, %v3320
    %4358 = vrot.lane.b32.xlu0 %v4356, 32
    %v4359 = vpop.permute.xlu0 %4358
    %v4361 = vsel %vm1443, %v4359, 0.0
    %4362 = vadd.xlane.f32.xlu0 %v4361
    %v4363 = vpop.xlane.xlu0 %4362
    %v4364 = vadd.f32 %v4363, %v3318
    %4366 = vrot.lane.b32.xlu0 %v4364, 96
    %v4367 = vpop.permute.xlu0 %4366
    %4369 = vst.msk [vmem:[%s5 + $0x18] sm:$0x3] %vm3336, %v4367
    %v4370 = vld [vmem:[#allocation2 + $0x1a] sm:$0x3]
    %v4371 = vpack.c.bf16 %v4355, %v4355
    %4373 = vrot.lane.b32.xlu0 %v4371, 32
    %v4374 = vpop.permute.xlu0 %4373
    %v4376 = vsel %vm1371, %v4374, 0
    %4378 = vmatprep.subr.bf16.mxu0 0
    %4379 = vmatpush1.bf16.msra.mxu0 %v2612
    %4380 = vmatprep.subr.bf16.mxu0 0
    %4381 = vmatpush1.bf16.msra.mxu0 %v2613
    %4382 = vmatprep.subr.bf16.mxu0 0
    %4383 = vmatpush1.bf16.msra.mxu0 0
    %4384 = vmatprep.subr.bf16.mxu0 0
    %4385 = vmatpush1.bf16.msra.mxu0 0
    %4386 = vmatprep.subr.bf16.mxu0 0
    %4387 = vmatpush1.bf16.msra.mxu0 0
    %4388 = vmatprep.subr.bf16.mxu0 0
    %4389 = vmatpush1.bf16.msra.mxu0 0
    %4390 = vmatprep.subr.bf16.mxu0 0
    %4391 = vmatpush1.bf16.msra.mxu0 0
    %4392 = vmatprep.subr.bf16.mxu0 0
    %4393 = vmatpush1.bf16.msra.mxu0 0
    %4394 = vmatprep.subr.bf16.mxu0 0
    %4395 = vmatpush1.bf16.msra.mxu0 0
    %4396 = vmatprep.subr.bf16.mxu0 0
    %4397 = vmatpush1.bf16.msra.mxu0 0
    %4398 = vmatprep.subr.bf16.mxu0 0
    %4399 = vmatpush1.bf16.msra.mxu0 0
    %4400 = vmatprep.subr.bf16.mxu0 0
    %4401 = vmatpush1.bf16.msra.mxu0 0
    %4402 = vmatprep.subr.bf16.mxu0 0
    %4403 = vmatpush1.bf16.msra.mxu0 0
    %4404 = vmatprep.subr.bf16.mxu0 0
    %4405 = vmatpush1.bf16.msra.mxu0 0
    %4406 = vmatprep.subr.bf16.mxu0 0
    %4407 = vmatpush1.bf16.msra.mxu0 0
    %4408 = vmatprep.subr.bf16.mxu0 0
    %4409 = vmatpush1.bf16.msra.mxu0 0
    %4410 = vmatprep.mubr.bf16.mxu0 0
    %4411 = vmatmul.mubr.bf16.gmra.mrb[0].mxu0 %v4376
    %v4412 = vpop.f32.mrb[0].mxu0
    %v4413 = vadd.f32 0.0, %v4412
    %v4414 = vpop.f32.mrb[0].mxu0
    %v4415 = vpop.f32.mrb[0].mxu0
    %v4416 = vpop.f32.mrb[0].mxu0
    %4417 = vdwg.mxu0
    %v4418 = vadd.f32 %v4370, %v4413
    %v4419 = vsub.f32 0.0, %v4418
    %v4420 = vmul.f32 %v4419, 1.442695
    %v4421 = vpow.pop %v4420
    %v4422 = vadd.f32 %v4421, 1.0
    %v4423 = vrcp.pop %v4422
    %v4424 = vtanh.pop %v4418
    %v4425 = vmul.f32 %v4423, %v4349
    %4427 = vrot.lane.b32.xlu0 %v4424, 64
    %v4428 = vpop.permute.xlu0 %4427
    %v4430 = vmul.f32 %v4423, %v4428
    %4432 = vrot.lane.b32.xlu0 %v4430, 32
    %v4433 = vpop.permute.xlu0 %4432
    %v4435 = vadd.f32 %v4425, %v4433
    %v4436 = vtanh.pop %v4435
    %4438 = vrot.lane.b32.xlu0 %v4436, 64
    %v4439 = vpop.permute.xlu0 %4438
    %v4441 = vmul.f32 %v4423, %v4439
    %v4442 = vmul.f32 %v4441, %v3320
    %4444 = vrot.lane.b32.xlu0 %v4442, 32
    %v4445 = vpop.permute.xlu0 %4444
    %v4447 = vsel %vm1443, %v4445, 0.0
    %4448 = vadd.xlane.f32.xlu0 %v4447
    %v4449 = vpop.xlane.xlu0 %4448
    %v4450 = vadd.f32 %v4449, %v3318
    %4452 = vrot.lane.b32.xlu0 %v4450, 96
    %v4453 = vpop.permute.xlu0 %4452
    %4455 = vst.msk [vmem:[%s5 + $0x1a] sm:$0x3] %vm3336, %v4453
    %v4456 = vld [vmem:[#allocation2 + $0x1c] sm:$0x3]
    %v4457 = vpack.c.bf16 %v4441, %v4441
    %4459 = vrot.lane.b32.xlu0 %v4457, 32
    %v4460 = vpop.permute.xlu0 %4459
    %v4462 = vsel %vm1371, %v4460, 0
    %4464 = vmatprep.subr.bf16.mxu0 0
    %4465 = vmatpush1.bf16.msra.mxu0 %v2612
    %4466 = vmatprep.subr.bf16.mxu0 0
    %4467 = vmatpush1.bf16.msra.mxu0 %v2613
    %4468 = vmatprep.subr.bf16.mxu0 0
    %4469 = vmatpush1.bf16.msra.mxu0 0
    %4470 = vmatprep.subr.bf16.mxu0 0
    %4471 = vmatpush1.bf16.msra.mxu0 0
    %4472 = vmatprep.subr.bf16.mxu0 0
    %4473 = vmatpush1.bf16.msra.mxu0 0
    %4474 = vmatprep.subr.bf16.mxu0 0
    %4475 = vmatpush1.bf16.msra.mxu0 0
    %4476 = vmatprep.subr.bf16.mxu0 0
    %4477 = vmatpush1.bf16.msra.mxu0 0
    %4478 = vmatprep.subr.bf16.mxu0 0
    %4479 = vmatpush1.bf16.msra.mxu0 0
    %4480 = vmatprep.subr.bf16.mxu0 0
    %4481 = vmatpush1.bf16.msra.mxu0 0
    %4482 = vmatprep.subr.bf16.mxu0 0
    %4483 = vmatpush1.bf16.msra.mxu0 0
    %4484 = vmatprep.subr.bf16.mxu0 0
    %4485 = vmatpush1.bf16.msra.mxu0 0
    %4486 = vmatprep.subr.bf16.mxu0 0
    %4487 = vmatpush1.bf16.msra.mxu0 0
    %4488 = vmatprep.subr.bf16.mxu0 0
    %4489 = vmatpush1.bf16.msra.mxu0 0
    %4490 = vmatprep.subr.bf16.mxu0 0
    %4491 = vmatpush1.bf16.msra.mxu0 0
    %4492 = vmatprep.subr.bf16.mxu0 0
    %4493 = vmatpush1.bf16.msra.mxu0 0
    %4494 = vmatprep.subr.bf16.mxu0 0
    %4495 = vmatpush1.bf16.msra.mxu0 0
    %4496 = vmatprep.mubr.bf16.mxu0 0
    %4497 = vmatmul.mubr.bf16.gmra.mrb[0].mxu0 %v4462
    %v4498 = vpop.f32.mrb[0].mxu0
    %v4499 = vadd.f32 0.0, %v4498
    %v4500 = vpop.f32.mrb[0].mxu0
    %v4501 = vpop.f32.mrb[0].mxu0
    %v4502 = vpop.f32.mrb[0].mxu0
    %4503 = vdwg.mxu0
    %v4504 = vadd.f32 %v4456, %v4499
    %v4505 = vsub.f32 0.0, %v4504
    %v4506 = vmul.f32 %v4505, 1.442695
    %v4507 = vpow.pop %v4506
    %v4508 = vadd.f32 %v4507, 1.0
    %v4509 = vrcp.pop %v4508
    %v4510 = vtanh.pop %v4504
    %v4511 = vmul.f32 %v4509, %v4435
    %4513 = vrot.lane.b32.xlu0 %v4510, 64
    %v4514 = vpop.permute.xlu0 %4513
    %v4516 = vmul.f32 %v4509, %v4514
    %4518 = vrot.lane.b32.xlu0 %v4516, 32
    %v4519 = vpop.permute.xlu0 %4518
    %v4521 = vadd.f32 %v4511, %v4519
    %v4522 = vtanh.pop %v4521
    %4524 = vrot.lane.b32.xlu0 %v4522, 64
    %v4525 = vpop.permute.xlu0 %4524
    %v4527 = vmul.f32 %v4509, %v4525
    %v4528 = vmul.f32 %v4527, %v3320
    %4530 = vrot.lane.b32.xlu0 %v4528, 32
    %v4531 = vpop.permute.xlu0 %4530
    %v4533 = vsel %vm1443, %v4531, 0.0
    %4534 = vadd.xlane.f32.xlu0 %v4533
    %v4535 = vpop.xlane.xlu0 %4534
    %v4536 = vadd.f32 %v4535, %v3318
    %4538 = vrot.lane.b32.xlu0 %v4536, 96
    %v4539 = vpop.permute.xlu0 %4538
    %4541 = vst.msk [vmem:[%s5 + $0x1c] sm:$0x3] %vm3336, %v4539
    %v4542 = vld [vmem:[#allocation2 + $0x1e] sm:$0x3]
    %v4543 = vpack.c.bf16 %v4527, %v4527
    %4545 = vrot.lane.b32.xlu0 %v4543, 32
    %v4546 = vpop.permute.xlu0 %4545
    %v4548 = vsel %vm1371, %v4546, 0
    %4550 = vmatprep.subr.bf16.mxu0 0
    %4551 = vmatpush1.bf16.msra.mxu0 %v2612
    %4552 = vmatprep.subr.bf16.mxu0 0
    %4553 = vmatpush1.bf16.msra.mxu0 %v2613
    %4554 = vmatprep.subr.bf16.mxu0 0
    %4555 = vmatpush1.bf16.msra.mxu0 0
    %4556 = vmatprep.subr.bf16.mxu0 0
    %4557 = vmatpush1.bf16.msra.mxu0 0
    %4558 = vmatprep.subr.bf16.mxu0 0
    %4559 = vmatpush1.bf16.msra.mxu0 0
    %4560 = vmatprep.subr.bf16.mxu0 0
    %4561 = vmatpush1.bf16.msra.mxu0 0
    %4562 = vmatprep.subr.bf16.mxu0 0
    %4563 = vmatpush1.bf16.msra.mxu0 0
    %4564 = vmatprep.subr.bf16.mxu0 0
    %4565 = vmatpush1.bf16.msra.mxu0 0
    %4566 = vmatprep.subr.bf16.mxu0 0
    %4567 = vmatpush1.bf16.msra.mxu0 0
    %4568 = vmatprep.subr.bf16.mxu0 0
    %4569 = vmatpush1.bf16.msra.mxu0 0
    %4570 = vmatprep.subr.bf16.mxu0 0
    %4571 = vmatpush1.bf16.msra.mxu0 0
    %4572 = vmatprep.subr.bf16.mxu0 0
    %4573 = vmatpush1.bf16.msra.mxu0 0
    %4574 = vmatprep.subr.bf16.mxu0 0
    %4575 = vmatpush1.bf16.msra.mxu0 0
    %4576 = vmatprep.subr.bf16.mxu0 0
    %4577 = vmatpush1.bf16.msra.mxu0 0
    %4578 = vmatprep.subr.bf16.mxu0 0
    %4579 = vmatpush1.bf16.msra.mxu0 0
    %4580 = vmatprep.subr.bf16.mxu0 0
    %4581 = vmatpush1.bf16.msra.mxu0 0
    %4582 = vmatprep.mubr.bf16.mxu0 0
    %4583 = vmatmul.mubr.bf16.gmra.mrb[0].mxu0 %v4548
    %v4584 = vpop.f32.mrb[0].mxu0
    %v4585 = vadd.f32 0.0, %v4584
    %v4586 = vpop.f32.mrb[0].mxu0
    %v4587 = vpop.f32.mrb[0].mxu0
    %v4588 = vpop.f32.mrb[0].mxu0
    %4589 = vdwg.mxu0
    %v4590 = vadd.f32 %v4542, %v4585
    %v4591 = vsub.f32 0.0, %v4590
    %v4592 = vmul.f32 %v4591, 1.442695
    %v4593 = vpow.pop %v4592
    %v4594 = vadd.f32 %v4593, 1.0
    %v4595 = vrcp.pop %v4594
    %v4596 = vtanh.pop %v4590
    %v4597 = vmul.f32 %v4595, %v4521
    %4599 = vrot.lane.b32.xlu0 %v4596, 64
    %v4600 = vpop.permute.xlu0 %4599
    %v4602 = vmul.f32 %v4595, %v4600
    %4604 = vrot.lane.b32.xlu0 %v4602, 32
    %v4605 = vpop.permute.xlu0 %4604
    %v4607 = vadd.f32 %v4597, %v4605
    %v4608 = vtanh.pop %v4607
    %4610 = vrot.lane.b32.xlu0 %v4608, 64
    %v4611 = vpop.permute.xlu0 %4610
    %v4613 = vmul.f32 %v4595, %v4611
    %v4614 = vmul.f32 %v4613, %v3320
    %4616 = vrot.lane.b32.xlu0 %v4614, 32
    %v4617 = vpop.permute.xlu0 %4616
    %v4619 = vsel %vm1443, %v4617, 0.0
    %4620 = vadd.xlane.f32.xlu0 %v4619
    %v4621 = vpop.xlane.xlu0 %4620
    %v4622 = vadd.f32 %v4621, %v3318
    %4624 = vrot.lane.b32.xlu0 %v4622, 96
    %v4625 = vpop.permute.xlu0 %4624
    %4627 = vst.msk [vmem:[%s5 + $0x1e] sm:$0x3] %vm3336, %v4625
    // Predicated region
    $region26: #{tpu_custom_call.1} parent=1 // pred_check
      _
    $region27: #{tpu_custom_call.1} parent=1 // pred_check_branch
      %4629 = sbr.rel (0) target = $region29
    $region28: #{tpu_custom_call.1} parent=1 // pred_region
      _
    $region29: #{tpu_custom_call.1} parent=1 // pred_fallthru
      _
    // Predicated region
    $region30: #{tpu_custom_call.1} parent=1 // pred_check
      _
    $region31: #{tpu_custom_call.1} parent=1 // pred_check_branch
      %4631 = sbr.rel (0) target = $region33
    $region32: #{tpu_custom_call.1} parent=1 // pred_region
      _
    $region33: #{tpu_custom_call.1} parent=1 // pred_fallthru
      _
    %4632 = vsyncpa [#allocation5], 1

</llo_original>
